<compile_context>
chip_gen: v6e
topology: v6e:2x2x1
jax: 0.10.0
libtpu: 0.0.40
codegen_flags: <defaults>
</compile_context>

<pallas_src>
import jax
import jax.numpy as jnp
from jax.experimental import pallas as pl
from jax.experimental.pallas import tpu as pltpu

N_EMBED = 128
NUM_HEADS = 4
HEAD_SIZE = N_EMBED // NUM_HEADS
LN_EPS = 1e-5


def _layernorm(v, gamma, beta):
    # v: (T, C); gamma/beta: (1, C); all float32
    mu = jnp.mean(v, axis=-1, keepdims=True)
    var = jnp.mean((v - mu) ** 2, axis=-1, keepdims=True)
    return (v - mu) * jax.lax.rsqrt(var + LN_EPS) * gamma + beta


def block_kernel(
    x_ref,                                    # (T, C)  f32  (batch dim squeezed)
    ln1g_ref, ln1b_ref, ln2g_ref, ln2b_ref,   # (1, C)  f32
    wqkv_ref,                                 # (C, 3C) bf16  [K | Q*scale | V]
    wph_ref,                                  # (H, hs, C) bf16  (wo folded into wp)
    bp_ref,                                   # (1, C)  f32   (bo folded into bp)
    w1_ref, b1_ref,                           # (C, 4C) bf16, (1, 4C) f32
    w2_ref, b2_ref,                           # (4C, C) bf16, (1, C)  f32
    mask_ref,                                 # (T, T)  f32 additive causal bias
    o_ref,                                    # (T, C)  f32
):
    x = x_ref[...]                            # (T, C) float32
    T, C = x.shape
    H = wph_ref.shape[0]
    hs = wph_ref.shape[1]

    # ---- LayerNorm 1 (f32) ----
    h1 = _layernorm(x, ln1g_ref[...], ln1b_ref[...])

    # ---- fused QKV projection: one lane-dense (T,C)x(C,3C) MXU matmul ----
    qkv = jnp.dot(h1.astype(jnp.bfloat16), wqkv_ref[...],
                  preferred_element_type=jnp.float32)          # (T, 3C) f32

    mask = mask_ref[...]                                       # (T, T) f32

    # ---- multi-head causal self-attention (static unrolled head loop) ----
    sa = jnp.zeros((T, C), jnp.float32)
    for h in range(H):
        k = qkv[:, h * hs:(h + 1) * hs].astype(jnp.bfloat16)           # (T, hs)
        q = qkv[:, C + h * hs:C + (h + 1) * hs].astype(jnp.bfloat16)   # pre-scaled
        v = qkv[:, 2 * C + h * hs:2 * C + (h + 1) * hs].astype(jnp.bfloat16)

        # q @ k.T without explicit transpose (contract last dims).
        wei = jax.lax.dot_general(q, k, (((1,), (1,)), ((), ())),
                                  preferred_element_type=jnp.float32)  # (T, T)
        wei = wei + mask
        wei = wei - jnp.max(wei, axis=-1, keepdims=True)
        p = jnp.exp(wei)
        denom = jnp.sum(p, axis=-1, keepdims=True)                     # (T, 1)

        pv = jnp.dot(p.astype(jnp.bfloat16), v,
                     preferred_element_type=jnp.float32)               # (T, hs)
        attn = pv * pl.reciprocal(denom, approx=True)                  # normalize

        # folded (out_proj -> proj) weight: lane-dense (T,hs)x(hs,C)
        sa = sa + jnp.dot(attn.astype(jnp.bfloat16), wph_ref[h],
                          preferred_element_type=jnp.float32)          # (T, C)

    x1 = x + sa + bp_ref[...]                # first residual (+ fused bias)

    # ---- LayerNorm 2 + feed-forward ----
    h2 = _layernorm(x1, ln2g_ref[...], ln2b_ref[...])
    ff = jnp.dot(h2.astype(jnp.bfloat16), w1_ref[...],
                 preferred_element_type=jnp.float32) + b1_ref[...]
    ff = jnp.maximum(ff, 0.0)
    ff = jnp.dot(ff.astype(jnp.bfloat16), w2_ref[...],
                 preferred_element_type=jnp.float32) + b2_ref[...]

    o_ref[...] = x1 + ff                     # second residual


def block_forward(x, packed):
    B, T, C = x.shape
    H, hs = NUM_HEADS, HEAD_SIZE
    full = lambda shape: pl.BlockSpec(shape, lambda b: (0,) * len(shape))

    in_specs = [
        pl.BlockSpec((None, T, C), lambda b: (b, 0, 0)),          # x (batch squeezed)
        full((1, C)), full((1, C)), full((1, C)), full((1, C)),   # ln params
        full((C, 3 * C)),                                         # wqkv (bf16)
        full((H, hs, C)),                                         # wph  (bf16)
        full((1, C)),                                             # bp_fused
        full((C, 4 * C)), full((1, 4 * C)),                       # w1, b1
        full((4 * C, C)), full((1, C)),                           # w2, b2
        full((T, T)),                                             # causal bias
    ]

    return pl.pallas_call(
        block_kernel,
        out_shape=jax.ShapeDtypeStruct((B, T, C), jnp.float32),
        grid_spec=pltpu.PrefetchScalarGridSpec(
            num_scalar_prefetch=0,
            grid=(B,),
            in_specs=in_specs,
            out_specs=pl.BlockSpec((None, T, C), lambda b: (b, 0, 0)),
        ),
        compiler_params=pltpu.CompilerParams(
            dimension_semantics=("parallel",)),
    )(x, *packed)


def pack_params(params, seq_len):
    """One-time weight preprocessing: QKV fusion, wo/bo folding into wp/bp,
    Q pre-scaling, bf16 casting, additive causal mask."""
    (ln1g, ln1b, ln2g, ln2b, wk, wq, wv, wo, bo, wp, bp, w1, b1, w2, b2) = params
    C, H, hs = N_EMBED, NUM_HEADS, HEAD_SIZE
    scale = C ** (-0.5)     # matches PyTorch source: scales by n_embed**-0.5

    # (H, C, hs) -> (C, H*hs) with head h occupying columns [h*hs, (h+1)*hs)
    to_cat = lambda w: jnp.transpose(w, (1, 0, 2)).reshape(C, H * hs)
    wqkv = jnp.concatenate(
        [to_cat(wk), to_cat(wq) * scale, to_cat(wv)], axis=1)    # (C, 3C)

    # Fold per-head out_proj (wo, bo) into the final projection wp/bp:
    #   concat_h(attn_h @ wo[h] + bo[h]) @ wp + bp
    #     = sum_h attn_h @ (wo[h] @ wp_h[h]) + (bp + sum_h bo[h] @ wp_h[h])
    wp_h = wp.reshape(H, hs, C)
    wph = jnp.einsum('hij,hjk->hik', wo, wp_h)                   # (H, hs, C)
    bp_fused = bp + jnp.einsum('hij,hjk->k', bo, wp_h)[None, :]  # (1, C)

    # Additive causal bias (0 where allowed, -1e30 where masked).
    T = seq_len
    row = jnp.arange(T)[:, None]
    col = jnp.arange(T)[None, :]
    mask = jnp.where(row >= col, 0.0, -1e30).astype(jnp.float32)

    return (
        ln1g, ln1b, ln2g, ln2b,
        wqkv.astype(jnp.bfloat16),
        wph.astype(jnp.bfloat16),
        bp_fused.astype(jnp.float32),
        w1.astype(jnp.bfloat16), b1,
        w2.astype(jnp.bfloat16), b2,
        mask,
    )


def block_reference(x, params):
    """Pure-JAX f32 reference of the same forward pass (for correctness check)."""
    (ln1g, ln1b, ln2g, ln2b, wk, wq, wv, wo, bo, wp, bp, w1, b1, w2, b2) = params
    B, T, C = x.shape

    def ln(v, g, b):
        mu = jnp.mean(v, axis=-1, keepdims=True)
        var = jnp.mean((v - mu) ** 2, axis=-1, keepdims=True)
        return (v - mu) * jax.lax.rsqrt(var + LN_EPS) * g + b

    h1 = ln(x, ln1g, ln1b)
    mask = jnp.tril(jnp.ones((T, T), dtype=bool))
    outs = []
    for h in range(NUM_HEADS):
        k = h1 @ wk[h]
        q = h1 @ wq[h]
        v = h1 @ wv[h]
        wei = (q @ jnp.swapaxes(k, -1, -2)) * (C ** -0.5)
        wei = jnp.where(mask, wei, -jnp.inf)
        wei = jax.nn.softmax(wei, axis=-1)
        o = wei @ v
        o = o @ wo[h] + bo[h]
        outs.append(o)
    sa = jnp.concatenate(outs, axis=-1) @ wp + bp
    x1 = x + sa
    h2 = ln(x1, ln2g, ln2b)
    ff = jax.nn.relu(h2 @ w1 + b1) @ w2 + b2
    return x1 + ff


def init_params(key):
    C, H, hs = N_EMBED, NUM_HEADS, HEAD_SIZE
    ks = jax.random.split(key, 12)
    s = lambda fan_in: 1.0 / jnp.sqrt(fan_in)
    params = (
        jnp.ones((1, C), jnp.float32),                                   # ln1 gamma
        jnp.zeros((1, C), jnp.float32),                                  # ln1 beta
        jnp.ones((1, C), jnp.float32),                                   # ln2 gamma
        jnp.zeros((1, C), jnp.float32),                                  # ln2 beta
        jax.random.normal(ks[0], (H, C, hs), jnp.float32) * s(C),        # wk
        jax.random.normal(ks[1], (H, C, hs), jnp.float32) * s(C),        # wq
        jax.random.normal(ks[2], (H, C, hs), jnp.float32) * s(C),        # wv
        jax.random.normal(ks[3], (H, hs, hs), jnp.float32) * s(hs),      # wo
        jax.random.normal(ks[4], (H, 1, hs), jnp.float32) * s(hs),       # bo
        jax.random.normal(ks[5], (C, C), jnp.float32) * s(C),            # wp
        jax.random.normal(ks[6], (1, C), jnp.float32) * s(C),            # bp
        jax.random.normal(ks[7], (C, 4 * C), jnp.float32) * s(C),        # w1
        jax.random.normal(ks[8], (1, 4 * C), jnp.float32) * s(C),        # b1
        jax.random.normal(ks[9], (4 * C, C), jnp.float32) * s(4 * C),    # w2
        jax.random.normal(ks[10], (1, C), jnp.float32) * s(4 * C),       # b2
    )
    return params


if __name__ == "__main__":
    key = jax.random.PRNGKey(0)
    kx, kp = jax.random.split(key)

    B, T, C = 2, 128, N_EMBED   # T <= block_size (128)
    x = jax.random.normal(kx, (B, T, C), jnp.float32)
    params = init_params(kp)
    packed = pack_params(params, T)   # one-time weight fusion / bf16 cast

    out = jax.jit(block_forward)(x, packed)
    out = jax.block_until_ready(out)

    ref = block_reference(x, params)
    assert out.shape == (B, T, C)
    # bf16 MXU operands + approx reciprocal -> loosened tolerance vs f32 ref.
    max_err = float(jnp.max(jnp.abs(out - ref)))
    assert jnp.allclose(out, ref, atol=5e-2, rtol=5e-2), (
        f"mismatch vs JAX reference (max abs err {max_err})")

    print("KERNEL_OK")
</pallas_src>

<mosaic_0001>
module attributes {stable_mosaic.version = 11 : i64} {
  func.func @block_kernel(%arg0: i32, %arg1: memref<1x128x128xf32, #tpu.memory_space<vmem>>, %arg2: memref<1x128xf32, #tpu.memory_space<vmem>>, %arg3: memref<1x128xf32, #tpu.memory_space<vmem>>, %arg4: memref<1x128xf32, #tpu.memory_space<vmem>>, %arg5: memref<1x128xf32, #tpu.memory_space<vmem>>, %arg6: memref<128x384xbf16, #tpu.memory_space<vmem>>, %arg7: memref<4x32x128xbf16, #tpu.memory_space<vmem>>, %arg8: memref<1x128xf32, #tpu.memory_space<vmem>>, %arg9: memref<128x512xbf16, #tpu.memory_space<vmem>>, %arg10: memref<1x512xf32, #tpu.memory_space<vmem>>, %arg11: memref<512x128xbf16, #tpu.memory_space<vmem>>, %arg12: memref<1x128xf32, #tpu.memory_space<vmem>>, %arg13: memref<128x128xf32, #tpu.memory_space<vmem>>, %arg14: memref<1x128x128xf32, #tpu.memory_space<vmem>>) attributes {dimension_semantics = [#tpu.dimension_semantics<parallel>], iteration_bounds = array<i64: 2>, scalar_prefetch = 0 : i64, scratch_operands = 0 : i64, tpu.core_type = #tpu.core_type<tc>, window_params = [{transform_indices = @transform_0, window_bounds = array<i64: 1, 128, 128>}, {pipeline_mode = #tpu.pipeline_mode<synchronous>, transform_indices = @transform_1, window_bounds = array<i64: 1, 128>}, {pipeline_mode = #tpu.pipeline_mode<synchronous>, transform_indices = @transform_2, window_bounds = array<i64: 1, 128>}, {pipeline_mode = #tpu.pipeline_mode<synchronous>, transform_indices = @transform_3, window_bounds = array<i64: 1, 128>}, {pipeline_mode = #tpu.pipeline_mode<synchronous>, transform_indices = @transform_4, window_bounds = array<i64: 1, 128>}, {pipeline_mode = #tpu.pipeline_mode<synchronous>, transform_indices = @transform_5, window_bounds = array<i64: 128, 384>}, {pipeline_mode = #tpu.pipeline_mode<synchronous>, transform_indices = @transform_6, window_bounds = array<i64: 4, 32, 128>}, {pipeline_mode = #tpu.pipeline_mode<synchronous>, transform_indices = @transform_7, window_bounds = array<i64: 1, 128>}, {pipeline_mode = #tpu.pipeline_mode<synchronous>, transform_indices = @transform_8, window_bounds = array<i64: 128, 512>}, {pipeline_mode = #tpu.pipeline_mode<synchronous>, transform_indices = @transform_9, window_bounds = array<i64: 1, 512>}, {pipeline_mode = #tpu.pipeline_mode<synchronous>, transform_indices = @transform_10, window_bounds = array<i64: 512, 128>}, {pipeline_mode = #tpu.pipeline_mode<synchronous>, transform_indices = @transform_11, window_bounds = array<i64: 1, 128>}, {pipeline_mode = #tpu.pipeline_mode<synchronous>, transform_indices = @transform_12, window_bounds = array<i64: 128, 128>}, {transform_indices = @transform_13, window_bounds = array<i64: 1, 128, 128>}]} {
    %c0 = arith.constant 0 : index
    %c0_0 = arith.constant 0 : index
    %c0_1 = arith.constant 0 : index
    %0 = vector.load %arg1[%c0, %c0_0, %c0_1] : memref<1x128x128xf32, #tpu.memory_space<vmem>>, vector<1x128x128xf32>
    %1 = vector.shape_cast %0 : vector<1x128x128xf32> to vector<128x128xf32>
    %c0_2 = arith.constant 0 : index
    %c0_3 = arith.constant 0 : index
    %2 = vector.load %arg2[%c0_2, %c0_3] : memref<1x128xf32, #tpu.memory_space<vmem>>, vector<1x128xf32>
    %c0_4 = arith.constant 0 : index
    %c0_5 = arith.constant 0 : index
    %3 = vector.load %arg3[%c0_4, %c0_5] : memref<1x128xf32, #tpu.memory_space<vmem>>, vector<1x128xf32>
    %cst = arith.constant dense<0.000000e+00> : vector<128xf32>
    %4 = vector.multi_reduction <add>, %1, %cst [1] : vector<128x128xf32> to vector<128xf32>
    %5 = vector.shape_cast %4 : vector<128xf32> to vector<128x1xf32>
    %cst_6 = arith.constant 1.280000e+02 : f32
    %6 = vector.broadcast %cst_6 : f32 to vector<128x1xf32>
    %7 = arith.divf %5, %6 : vector<128x1xf32>
    %8 = vector.broadcast %7 : vector<128x1xf32> to vector<128x128xf32>
    %9 = arith.subf %1, %8 : vector<128x128xf32>
    %10 = arith.mulf %9, %9 : vector<128x128xf32>
    %cst_7 = arith.constant dense<0.000000e+00> : vector<128xf32>
    %11 = vector.multi_reduction <add>, %10, %cst_7 [1] : vector<128x128xf32> to vector<128xf32>
    %12 = vector.shape_cast %11 : vector<128xf32> to vector<128x1xf32>
    %cst_8 = arith.constant 1.280000e+02 : f32
    %13 = vector.broadcast %cst_8 : f32 to vector<128x1xf32>
    %14 = arith.divf %12, %13 : vector<128x1xf32>
    %15 = vector.broadcast %7 : vector<128x1xf32> to vector<128x128xf32>
    %16 = arith.subf %1, %15 : vector<128x128xf32>
    %cst_9 = arith.constant 9.99999974E-6 : f32
    %17 = vector.broadcast %cst_9 : f32 to vector<128x1xf32>
    %18 = arith.addf %14, %17 : vector<128x1xf32>
    %19 = math.rsqrt %18 : vector<128x1xf32>
    %20 = vector.broadcast %19 : vector<128x1xf32> to vector<128x128xf32>
    %21 = arith.mulf %16, %20 : vector<128x128xf32>
    %22 = vector.broadcast %2 : vector<1x128xf32> to vector<128x128xf32>
    %23 = arith.mulf %21, %22 : vector<128x128xf32>
    %24 = vector.broadcast %3 : vector<1x128xf32> to vector<128x128xf32>
    %25 = arith.addf %23, %24 : vector<128x128xf32>
    %26 = arith.truncf %25 : vector<128x128xf32> to vector<128x128xbf16>
    %c0_10 = arith.constant 0 : index
    %c0_11 = arith.constant 0 : index
    %27 = vector.load %arg6[%c0_10, %c0_11] : memref<128x384xbf16, #tpu.memory_space<vmem>>, vector<128x384xbf16>
    %cst_12 = arith.constant dense<0.000000e+00> : vector<128x384xf32>
    %28 = tpu.matmul %26, %27, %cst_12 {dimension_numbers = #tpu.dot_dimension_numbers<[1], [0], [0], [1], [0, 0, 1, 1], [], []>} : vector<128x128xbf16>, vector<128x384xbf16>, vector<128x384xf32> -> vector<128x384xf32>
    %c0_13 = arith.constant 0 : index
    %c0_14 = arith.constant 0 : index
    %29 = vector.load %arg13[%c0_13, %c0_14] : memref<128x128xf32, #tpu.memory_space<vmem>>, vector<128x128xf32>
    %cst_15 = arith.constant 0.000000e+00 : f32
    %30 = vector.broadcast %cst_15 : f32 to vector<128x128xf32>
    %31 = vector.extract_strided_slice %28 {offsets = [0, 0], sizes = [128, 32], strides = [1, 1]} : vector<128x384xf32> to vector<128x32xf32>
    %32 = arith.truncf %31 : vector<128x32xf32> to vector<128x32xbf16>
    %33 = vector.extract_strided_slice %28 {offsets = [0, 128], sizes = [128, 32], strides = [1, 1]} : vector<128x384xf32> to vector<128x32xf32>
    %34 = arith.truncf %33 : vector<128x32xf32> to vector<128x32xbf16>
    %35 = vector.extract_strided_slice %28 {offsets = [0, 256], sizes = [128, 32], strides = [1, 1]} : vector<128x384xf32> to vector<128x32xf32>
    %36 = arith.truncf %35 : vector<128x32xf32> to vector<128x32xbf16>
    %cst_16 = arith.constant dense<0.000000e+00> : vector<128x128xf32>
    %37 = tpu.matmul %34, %32, %cst_16 {dimension_numbers = #tpu.dot_dimension_numbers<[1], [1], [0], [0], [0, 0, 1, 0], [], []>} : vector<128x32xbf16>, vector<128x32xbf16>, vector<128x128xf32> -> vector<128x128xf32>
    %38 = arith.addf %37, %29 : vector<128x128xf32>
    %cst_17 = arith.constant dense<0xFF800000> : vector<128xf32>
    %39 = vector.multi_reduction <maximumf>, %38, %cst_17 [1] : vector<128x128xf32> to vector<128xf32>
    %40 = vector.shape_cast %39 : vector<128xf32> to vector<128x1xf32>
    %41 = vector.broadcast %40 : vector<128x1xf32> to vector<128x128xf32>
    %42 = arith.subf %38, %41 : vector<128x128xf32>
    %43 = math.exp %42 : vector<128x128xf32>
    %cst_18 = arith.constant dense<0.000000e+00> : vector<128xf32>
    %44 = vector.multi_reduction <add>, %43, %cst_18 [1] : vector<128x128xf32> to vector<128xf32>
    %45 = vector.shape_cast %44 : vector<128xf32> to vector<128x1xf32>
    %46 = arith.truncf %43 : vector<128x128xf32> to vector<128x128xbf16>
    %cst_19 = arith.constant dense<0.000000e+00> : vector<128x32xf32>
    %47 = tpu.matmul %46, %36, %cst_19 {dimension_numbers = #tpu.dot_dimension_numbers<[1], [0], [0], [1], [0, 0, 1, 1], [], []>} : vector<128x128xbf16>, vector<128x32xbf16>, vector<128x32xf32> -> vector<128x32xf32>
    %48 = tpu.reciprocal %45 {approx = true} : vector<128x1xf32> -> vector<128x1xf32>
    %49 = vector.broadcast %48 : vector<128x1xf32> to vector<128x32xf32>
    %50 = arith.mulf %47, %49 : vector<128x32xf32>
    %51 = arith.truncf %50 : vector<128x32xf32> to vector<128x32xbf16>
    %c0_20 = arith.constant 0 : index
    %c0_21 = arith.constant 0 : index
    %c0_22 = arith.constant 0 : index
    %52 = vector.load %arg7[%c0_20, %c0_21, %c0_22] : memref<4x32x128xbf16, #tpu.memory_space<vmem>>, vector<1x32x128xbf16>
    %53 = vector.shape_cast %52 : vector<1x32x128xbf16> to vector<32x128xbf16>
    %cst_23 = arith.constant dense<0.000000e+00> : vector<128x128xf32>
    %54 = tpu.matmul %51, %53, %cst_23 {dimension_numbers = #tpu.dot_dimension_numbers<[1], [0], [0], [1], [0, 0, 1, 1], [], []>} : vector<128x32xbf16>, vector<32x128xbf16>, vector<128x128xf32> -> vector<128x128xf32>
    %55 = arith.addf %30, %54 : vector<128x128xf32>
    %56 = vector.extract_strided_slice %28 {offsets = [0, 32], sizes = [128, 32], strides = [1, 1]} : vector<128x384xf32> to vector<128x32xf32>
    %57 = arith.truncf %56 : vector<128x32xf32> to vector<128x32xbf16>
    %58 = vector.extract_strided_slice %28 {offsets = [0, 160], sizes = [128, 32], strides = [1, 1]} : vector<128x384xf32> to vector<128x32xf32>
    %59 = arith.truncf %58 : vector<128x32xf32> to vector<128x32xbf16>
    %60 = vector.extract_strided_slice %28 {offsets = [0, 288], sizes = [128, 32], strides = [1, 1]} : vector<128x384xf32> to vector<128x32xf32>
    %61 = arith.truncf %60 : vector<128x32xf32> to vector<128x32xbf16>
    %cst_24 = arith.constant dense<0.000000e+00> : vector<128x128xf32>
    %62 = tpu.matmul %59, %57, %cst_24 {dimension_numbers = #tpu.dot_dimension_numbers<[1], [1], [0], [0], [0, 0, 1, 0], [], []>} : vector<128x32xbf16>, vector<128x32xbf16>, vector<128x128xf32> -> vector<128x128xf32>
    %63 = arith.addf %62, %29 : vector<128x128xf32>
    %cst_25 = arith.constant dense<0xFF800000> : vector<128xf32>
    %64 = vector.multi_reduction <maximumf>, %63, %cst_25 [1] : vector<128x128xf32> to vector<128xf32>
    %65 = vector.shape_cast %64 : vector<128xf32> to vector<128x1xf32>
    %66 = vector.broadcast %65 : vector<128x1xf32> to vector<128x128xf32>
    %67 = arith.subf %63, %66 : vector<128x128xf32>
    %68 = math.exp %67 : vector<128x128xf32>
    %cst_26 = arith.constant dense<0.000000e+00> : vector<128xf32>
    %69 = vector.multi_reduction <add>, %68, %cst_26 [1] : vector<128x128xf32> to vector<128xf32>
    %70 = vector.shape_cast %69 : vector<128xf32> to vector<128x1xf32>
    %71 = arith.truncf %68 : vector<128x128xf32> to vector<128x128xbf16>
    %cst_27 = arith.constant dense<0.000000e+00> : vector<128x32xf32>
    %72 = tpu.matmul %71, %61, %cst_27 {dimension_numbers = #tpu.dot_dimension_numbers<[1], [0], [0], [1], [0, 0, 1, 1], [], []>} : vector<128x128xbf16>, vector<128x32xbf16>, vector<128x32xf32> -> vector<128x32xf32>
    %73 = tpu.reciprocal %70 {approx = true} : vector<128x1xf32> -> vector<128x1xf32>
    %74 = vector.broadcast %73 : vector<128x1xf32> to vector<128x32xf32>
    %75 = arith.mulf %72, %74 : vector<128x32xf32>
    %76 = arith.truncf %75 : vector<128x32xf32> to vector<128x32xbf16>
    %c1 = arith.constant 1 : index
    %c0_28 = arith.constant 0 : index
    %c0_29 = arith.constant 0 : index
    %77 = vector.load %arg7[%c1, %c0_28, %c0_29] : memref<4x32x128xbf16, #tpu.memory_space<vmem>>, vector<1x32x128xbf16>
    %78 = vector.shape_cast %77 : vector<1x32x128xbf16> to vector<32x128xbf16>
    %cst_30 = arith.constant dense<0.000000e+00> : vector<128x128xf32>
    %79 = tpu.matmul %76, %78, %cst_30 {dimension_numbers = #tpu.dot_dimension_numbers<[1], [0], [0], [1], [0, 0, 1, 1], [], []>} : vector<128x32xbf16>, vector<32x128xbf16>, vector<128x128xf32> -> vector<128x128xf32>
    %80 = arith.addf %55, %79 : vector<128x128xf32>
    %81 = vector.extract_strided_slice %28 {offsets = [0, 64], sizes = [128, 32], strides = [1, 1]} : vector<128x384xf32> to vector<128x32xf32>
    %82 = arith.truncf %81 : vector<128x32xf32> to vector<128x32xbf16>
    %83 = vector.extract_strided_slice %28 {offsets = [0, 192], sizes = [128, 32], strides = [1, 1]} : vector<128x384xf32> to vector<128x32xf32>
    %84 = arith.truncf %83 : vector<128x32xf32> to vector<128x32xbf16>
    %85 = vector.extract_strided_slice %28 {offsets = [0, 320], sizes = [128, 32], strides = [1, 1]} : vector<128x384xf32> to vector<128x32xf32>
    %86 = arith.truncf %85 : vector<128x32xf32> to vector<128x32xbf16>
    %cst_31 = arith.constant dense<0.000000e+00> : vector<128x128xf32>
    %87 = tpu.matmul %84, %82, %cst_31 {dimension_numbers = #tpu.dot_dimension_numbers<[1], [1], [0], [0], [0, 0, 1, 0], [], []>} : vector<128x32xbf16>, vector<128x32xbf16>, vector<128x128xf32> -> vector<128x128xf32>
    %88 = arith.addf %87, %29 : vector<128x128xf32>
    %cst_32 = arith.constant dense<0xFF800000> : vector<128xf32>
    %89 = vector.multi_reduction <maximumf>, %88, %cst_32 [1] : vector<128x128xf32> to vector<128xf32>
    %90 = vector.shape_cast %89 : vector<128xf32> to vector<128x1xf32>
    %91 = vector.broadcast %90 : vector<128x1xf32> to vector<128x128xf32>
    %92 = arith.subf %88, %91 : vector<128x128xf32>
    %93 = math.exp %92 : vector<128x128xf32>
    %cst_33 = arith.constant dense<0.000000e+00> : vector<128xf32>
    %94 = vector.multi_reduction <add>, %93, %cst_33 [1] : vector<128x128xf32> to vector<128xf32>
    %95 = vector.shape_cast %94 : vector<128xf32> to vector<128x1xf32>
    %96 = arith.truncf %93 : vector<128x128xf32> to vector<128x128xbf16>
    %cst_34 = arith.constant dense<0.000000e+00> : vector<128x32xf32>
    %97 = tpu.matmul %96, %86, %cst_34 {dimension_numbers = #tpu.dot_dimension_numbers<[1], [0], [0], [1], [0, 0, 1, 1], [], []>} : vector<128x128xbf16>, vector<128x32xbf16>, vector<128x32xf32> -> vector<128x32xf32>
    %98 = tpu.reciprocal %95 {approx = true} : vector<128x1xf32> -> vector<128x1xf32>
    %99 = vector.broadcast %98 : vector<128x1xf32> to vector<128x32xf32>
    %100 = arith.mulf %97, %99 : vector<128x32xf32>
    %101 = arith.truncf %100 : vector<128x32xf32> to vector<128x32xbf16>
    %c2 = arith.constant 2 : index
    %c0_35 = arith.constant 0 : index
    %c0_36 = arith.constant 0 : index
    %102 = vector.load %arg7[%c2, %c0_35, %c0_36] : memref<4x32x128xbf16, #tpu.memory_space<vmem>>, vector<1x32x128xbf16>
    %103 = vector.shape_cast %102 : vector<1x32x128xbf16> to vector<32x128xbf16>
    %cst_37 = arith.constant dense<0.000000e+00> : vector<128x128xf32>
    %104 = tpu.matmul %101, %103, %cst_37 {dimension_numbers = #tpu.dot_dimension_numbers<[1], [0], [0], [1], [0, 0, 1, 1], [], []>} : vector<128x32xbf16>, vector<32x128xbf16>, vector<128x128xf32> -> vector<128x128xf32>
    %105 = arith.addf %80, %104 : vector<128x128xf32>
    %106 = vector.extract_strided_slice %28 {offsets = [0, 96], sizes = [128, 32], strides = [1, 1]} : vector<128x384xf32> to vector<128x32xf32>
    %107 = arith.truncf %106 : vector<128x32xf32> to vector<128x32xbf16>
    %108 = vector.extract_strided_slice %28 {offsets = [0, 224], sizes = [128, 32], strides = [1, 1]} : vector<128x384xf32> to vector<128x32xf32>
    %109 = arith.truncf %108 : vector<128x32xf32> to vector<128x32xbf16>
    %110 = vector.extract_strided_slice %28 {offsets = [0, 352], sizes = [128, 32], strides = [1, 1]} : vector<128x384xf32> to vector<128x32xf32>
    %111 = arith.truncf %110 : vector<128x32xf32> to vector<128x32xbf16>
    %cst_38 = arith.constant dense<0.000000e+00> : vector<128x128xf32>
    %112 = tpu.matmul %109, %107, %cst_38 {dimension_numbers = #tpu.dot_dimension_numbers<[1], [1], [0], [0], [0, 0, 1, 0], [], []>} : vector<128x32xbf16>, vector<128x32xbf16>, vector<128x128xf32> -> vector<128x128xf32>
    %113 = arith.addf %112, %29 : vector<128x128xf32>
    %cst_39 = arith.constant dense<0xFF800000> : vector<128xf32>
    %114 = vector.multi_reduction <maximumf>, %113, %cst_39 [1] : vector<128x128xf32> to vector<128xf32>
    %115 = vector.shape_cast %114 : vector<128xf32> to vector<128x1xf32>
    %116 = vector.broadcast %115 : vector<128x1xf32> to vector<128x128xf32>
    %117 = arith.subf %113, %116 : vector<128x128xf32>
    %118 = math.exp %117 : vector<128x128xf32>
    %cst_40 = arith.constant dense<0.000000e+00> : vector<128xf32>
    %119 = vector.multi_reduction <add>, %118, %cst_40 [1] : vector<128x128xf32> to vector<128xf32>
    %120 = vector.shape_cast %119 : vector<128xf32> to vector<128x1xf32>
    %121 = arith.truncf %118 : vector<128x128xf32> to vector<128x128xbf16>
    %cst_41 = arith.constant dense<0.000000e+00> : vector<128x32xf32>
    %122 = tpu.matmul %121, %111, %cst_41 {dimension_numbers = #tpu.dot_dimension_numbers<[1], [0], [0], [1], [0, 0, 1, 1], [], []>} : vector<128x128xbf16>, vector<128x32xbf16>, vector<128x32xf32> -> vector<128x32xf32>
    %123 = tpu.reciprocal %120 {approx = true} : vector<128x1xf32> -> vector<128x1xf32>
    %124 = vector.broadcast %123 : vector<128x1xf32> to vector<128x32xf32>
    %125 = arith.mulf %122, %124 : vector<128x32xf32>
    %126 = arith.truncf %125 : vector<128x32xf32> to vector<128x32xbf16>
    %c3 = arith.constant 3 : index
    %c0_42 = arith.constant 0 : index
    %c0_43 = arith.constant 0 : index
    %127 = vector.load %arg7[%c3, %c0_42, %c0_43] : memref<4x32x128xbf16, #tpu.memory_space<vmem>>, vector<1x32x128xbf16>
    %128 = vector.shape_cast %127 : vector<1x32x128xbf16> to vector<32x128xbf16>
    %cst_44 = arith.constant dense<0.000000e+00> : vector<128x128xf32>
    %129 = tpu.matmul %126, %128, %cst_44 {dimension_numbers = #tpu.dot_dimension_numbers<[1], [0], [0], [1], [0, 0, 1, 1], [], []>} : vector<128x32xbf16>, vector<32x128xbf16>, vector<128x128xf32> -> vector<128x128xf32>
    %130 = arith.addf %105, %129 : vector<128x128xf32>
    %131 = arith.addf %1, %130 : vector<128x128xf32>
    %c0_45 = arith.constant 0 : index
    %c0_46 = arith.constant 0 : index
    %132 = vector.load %arg8[%c0_45, %c0_46] : memref<1x128xf32, #tpu.memory_space<vmem>>, vector<1x128xf32>
    %133 = vector.broadcast %132 : vector<1x128xf32> to vector<128x128xf32>
    %134 = arith.addf %131, %133 : vector<128x128xf32>
    %c0_47 = arith.constant 0 : index
    %c0_48 = arith.constant 0 : index
    %135 = vector.load %arg4[%c0_47, %c0_48] : memref<1x128xf32, #tpu.memory_space<vmem>>, vector<1x128xf32>
    %c0_49 = arith.constant 0 : index
    %c0_50 = arith.constant 0 : index
    %136 = vector.load %arg5[%c0_49, %c0_50] : memref<1x128xf32, #tpu.memory_space<vmem>>, vector<1x128xf32>
    %cst_51 = arith.constant dense<0.000000e+00> : vector<128xf32>
    %137 = vector.multi_reduction <add>, %134, %cst_51 [1] : vector<128x128xf32> to vector<128xf32>
    %138 = vector.shape_cast %137 : vector<128xf32> to vector<128x1xf32>
    %cst_52 = arith.constant 1.280000e+02 : f32
    %139 = vector.broadcast %cst_52 : f32 to vector<128x1xf32>
    %140 = arith.divf %138, %139 : vector<128x1xf32>
    %141 = vector.broadcast %140 : vector<128x1xf32> to vector<128x128xf32>
    %142 = arith.subf %134, %141 : vector<128x128xf32>
    %143 = arith.mulf %142, %142 : vector<128x128xf32>
    %cst_53 = arith.constant dense<0.000000e+00> : vector<128xf32>
    %144 = vector.multi_reduction <add>, %143, %cst_53 [1] : vector<128x128xf32> to vector<128xf32>
    %145 = vector.shape_cast %144 : vector<128xf32> to vector<128x1xf32>
    %cst_54 = arith.constant 1.280000e+02 : f32
    %146 = vector.broadcast %cst_54 : f32 to vector<128x1xf32>
    %147 = arith.divf %145, %146 : vector<128x1xf32>
    %148 = vector.broadcast %140 : vector<128x1xf32> to vector<128x128xf32>
    %149 = arith.subf %134, %148 : vector<128x128xf32>
    %cst_55 = arith.constant 9.99999974E-6 : f32
    %150 = vector.broadcast %cst_55 : f32 to vector<128x1xf32>
    %151 = arith.addf %147, %150 : vector<128x1xf32>
    %152 = math.rsqrt %151 : vector<128x1xf32>
    %153 = vector.broadcast %152 : vector<128x1xf32> to vector<128x128xf32>
    %154 = arith.mulf %149, %153 : vector<128x128xf32>
    %155 = vector.broadcast %135 : vector<1x128xf32> to vector<128x128xf32>
    %156 = arith.mulf %154, %155 : vector<128x128xf32>
    %157 = vector.broadcast %136 : vector<1x128xf32> to vector<128x128xf32>
    %158 = arith.addf %156, %157 : vector<128x128xf32>
    %159 = arith.truncf %158 : vector<128x128xf32> to vector<128x128xbf16>
    %c0_56 = arith.constant 0 : index
    %c0_57 = arith.constant 0 : index
    %160 = vector.load %arg9[%c0_56, %c0_57] : memref<128x512xbf16, #tpu.memory_space<vmem>>, vector<128x512xbf16>
    %cst_58 = arith.constant dense<0.000000e+00> : vector<128x512xf32>
    %161 = tpu.matmul %159, %160, %cst_58 {dimension_numbers = #tpu.dot_dimension_numbers<[1], [0], [0], [1], [0, 0, 1, 1], [], []>} : vector<128x128xbf16>, vector<128x512xbf16>, vector<128x512xf32> -> vector<128x512xf32>
    %c0_59 = arith.constant 0 : index
    %c0_60 = arith.constant 0 : index
    %162 = vector.load %arg10[%c0_59, %c0_60] : memref<1x512xf32, #tpu.memory_space<vmem>>, vector<1x512xf32>
    %163 = vector.broadcast %162 : vector<1x512xf32> to vector<128x512xf32>
    %164 = arith.addf %161, %163 : vector<128x512xf32>
    %cst_61 = arith.constant 0.000000e+00 : f32
    %165 = vector.broadcast %cst_61 : f32 to vector<128x512xf32>
    %166 = arith.maximumf %164, %165 : vector<128x512xf32>
    %167 = arith.truncf %166 : vector<128x512xf32> to vector<128x512xbf16>
    %c0_62 = arith.constant 0 : index
    %c0_63 = arith.constant 0 : index
    %168 = vector.load %arg11[%c0_62, %c0_63] : memref<512x128xbf16, #tpu.memory_space<vmem>>, vector<512x128xbf16>
    %cst_64 = arith.constant dense<0.000000e+00> : vector<128x128xf32>
    %169 = tpu.matmul %167, %168, %cst_64 {dimension_numbers = #tpu.dot_dimension_numbers<[1], [0], [0], [1], [0, 0, 1, 1], [], []>} : vector<128x512xbf16>, vector<512x128xbf16>, vector<128x128xf32> -> vector<128x128xf32>
    %c0_65 = arith.constant 0 : index
    %c0_66 = arith.constant 0 : index
    %170 = vector.load %arg12[%c0_65, %c0_66] : memref<1x128xf32, #tpu.memory_space<vmem>>, vector<1x128xf32>
    %171 = vector.broadcast %170 : vector<1x128xf32> to vector<128x128xf32>
    %172 = arith.addf %169, %171 : vector<128x128xf32>
    %173 = arith.addf %134, %172 : vector<128x128xf32>
    %c0_67 = arith.constant 0 : index
    %c0_68 = arith.constant 0 : index
    %c0_69 = arith.constant 0 : index
    %174 = vector.load %arg14[%c0_67, %c0_68, %c0_69] : memref<1x128x128xf32, #tpu.memory_space<vmem>>, vector<1x128x128xf32>
    %175 = vector.shape_cast %174 : vector<1x128x128xf32> to vector<128x128xf32>
    %176 = vector.shape_cast %173 : vector<128x128xf32> to vector<1x128x128xf32>
    tpu.vector_store %arg14[%c0_67, %c0_68, %c0_69], %176 {strides = array<i32>} : memref<1x128x128xf32, #tpu.memory_space<vmem>>, vector<1x128x128xf32>,
    return
  }
  func.func @transform_0(%arg0: i32) -> (i32, i32, i32) {
    %c0_i32 = arith.constant 0 : i32
    %c0_i32_0 = arith.constant 0 : i32
    %c0_i32_1 = arith.constant 0 : i32
    return %arg0, %c0_i32, %c0_i32_0 : i32, i32, i32
  }
  func.func @transform_1(%arg0: i32) -> (i32, i32) {
    %c0_i32 = arith.constant 0 : i32
    %c0_i32_0 = arith.constant 0 : i32
    %c0_i32_1 = arith.constant 0 : i32
    return %c0_i32, %c0_i32_0 : i32, i32
  }
  func.func @transform_2(%arg0: i32) -> (i32, i32) {
    %c0_i32 = arith.constant 0 : i32
    %c0_i32_0 = arith.constant 0 : i32
    %c0_i32_1 = arith.constant 0 : i32
    return %c0_i32, %c0_i32_0 : i32, i32
  }
  func.func @transform_3(%arg0: i32) -> (i32, i32) {
    %c0_i32 = arith.constant 0 : i32
    %c0_i32_0 = arith.constant 0 : i32
    %c0_i32_1 = arith.constant 0 : i32
    return %c0_i32, %c0_i32_0 : i32, i32
  }
  func.func @transform_4(%arg0: i32) -> (i32, i32) {
    %c0_i32 = arith.constant 0 : i32
    %c0_i32_0 = arith.constant 0 : i32
    %c0_i32_1 = arith.constant 0 : i32
    return %c0_i32, %c0_i32_0 : i32, i32
  }
  func.func @transform_5(%arg0: i32) -> (i32, i32) {
    %c0_i32 = arith.constant 0 : i32
    %c0_i32_0 = arith.constant 0 : i32
    %c0_i32_1 = arith.constant 0 : i32
    return %c0_i32, %c0_i32_0 : i32, i32
  }
  func.func @transform_6(%arg0: i32) -> (i32, i32, i32) {
    %c0_i32 = arith.constant 0 : i32
    %c0_i32_0 = arith.constant 0 : i32
    %c0_i32_1 = arith.constant 0 : i32
    %c0_i32_2 = arith.constant 0 : i32
    return %c0_i32, %c0_i32_0, %c0_i32_1 : i32, i32, i32
  }
  func.func @transform_7(%arg0: i32) -> (i32, i32) {
    %c0_i32 = arith.constant 0 : i32
    %c0_i32_0 = arith.constant 0 : i32
    %c0_i32_1 = arith.constant 0 : i32
    return %c0_i32, %c0_i32_0 : i32, i32
  }
  func.func @transform_8(%arg0: i32) -> (i32, i32) {
    %c0_i32 = arith.constant 0 : i32
    %c0_i32_0 = arith.constant 0 : i32
    %c0_i32_1 = arith.constant 0 : i32
    return %c0_i32, %c0_i32_0 : i32, i32
  }
  func.func @transform_9(%arg0: i32) -> (i32, i32) {
    %c0_i32 = arith.constant 0 : i32
    %c0_i32_0 = arith.constant 0 : i32
    %c0_i32_1 = arith.constant 0 : i32
    return %c0_i32, %c0_i32_0 : i32, i32
  }
  func.func @transform_10(%arg0: i32) -> (i32, i32) {
    %c0_i32 = arith.constant 0 : i32
    %c0_i32_0 = arith.constant 0 : i32
    %c0_i32_1 = arith.constant 0 : i32
    return %c0_i32, %c0_i32_0 : i32, i32
  }
  func.func @transform_11(%arg0: i32) -> (i32, i32) {
    %c0_i32 = arith.constant 0 : i32
    %c0_i32_0 = arith.constant 0 : i32
    %c0_i32_1 = arith.constant 0 : i32
    return %c0_i32, %c0_i32_0 : i32, i32
  }
  func.func @transform_12(%arg0: i32) -> (i32, i32) {
    %c0_i32 = arith.constant 0 : i32
    %c0_i32_0 = arith.constant 0 : i32
    %c0_i32_1 = arith.constant 0 : i32
    return %c0_i32, %c0_i32_0 : i32, i32
  }
  func.func @transform_13(%arg0: i32) -> (i32, i32, i32) {
    %c0_i32 = arith.constant 0 : i32
    %c0_i32_0 = arith.constant 0 : i32
    %c0_i32_1 = arith.constant 0 : i32
    return %arg0, %c0_i32, %c0_i32_0 : i32, i32, i32
  }
}

</mosaic_0001>

<llo_original>
// kernel: block_forward.1
$region0: #{block_forward.1}
  #allocation0 [shape = 'u32[]', space=smem, size = 0x4, offset = 0x4, fixed_abs, tag = 'smem constant byte address 0x4 - core index']
  #allocation1 [shape = 'u32[144,128]{1,0:T(1,128)}', space=vmem, size = 0x12000, scoped, tag = 'internal scratch']
  %s0 = inlined_call_operand.hbm [shape: f32[2,128,128], index: 0, kind: input, shape index: {}]
  %s1 = inlined_call_operand.vmem [shape: f32[1,128], index: 1, kind: input, shape index: {}]
  %s2 = inlined_call_operand.vmem [shape: f32[1,128], index: 2, kind: input, shape index: {}]
  %s3 = inlined_call_operand.vmem [shape: f32[1,128], index: 3, kind: input, shape index: {}]
  %s4 = inlined_call_operand.hbm [shape: f32[1,128], index: 4, kind: input, shape index: {}]
  %s5 = inlined_call_operand.hbm [shape: bf16[128,384], index: 5, kind: input, shape index: {}]
  %s6 = inlined_call_operand.hbm [shape: bf16[4,32,128], index: 6, kind: input, shape index: {}]
  %s7 = inlined_call_operand.vmem [shape: f32[1,128], index: 7, kind: input, shape index: {}]
  %s8 = inlined_call_operand.hbm [shape: bf16[128,512], index: 8, kind: input, shape index: {}]
  %s9 = inlined_call_operand.vmem [shape: f32[1,512], index: 9, kind: input, shape index: {}]
  %s10 = inlined_call_operand.hbm [shape: bf16[512,128], index: 10, kind: input, shape index: {}]
  %s11 = inlined_call_operand.vmem [shape: f32[1,128], index: 11, kind: input, shape index: {}]
  %s12 = inlined_call_operand.hbm [shape: f32[128,128], index: 12, kind: input, shape index: {}]
  %s13 = inlined_call_operand.hbm [shape: f32[2,128,128], index: 13, kind: output, shape index: {}]
  %s14 = sld [smem:[#allocation0]]
  $region113: #{block_forward.1} parent=0
    _
  %s16 = ssub.s32 1, %s14
  %s17 = scalar_select 0, %s16, %s14
  $region1: #{block_forward.1} parent=0
    #allocation2 [shape = 'u8[131072]{0}', space=vmem, size = 0x20000, scoped, tag = 'input window, operand 0']
    #allocation3 [shape = 's32[2]{0}', space=sflag, size = 0x8, scoped, tag = 'scoped memory for block_forward.1']
    #allocation4 [shape = 's32[2]{0}', space=sflag, size = 0x8, scoped, tag = 'scoped memory for block_forward.1']
    #allocation5 [shape = 'u8[512]{0}', space=vmem, size = 0x400, scoped, tag = 'input window, operand 4, single buffered']
    #allocation6 [shape = 's32[1]{0}', space=sflag, size = 0x4, scoped, tag = 'scoped memory for block_forward.1']
    #allocation7 [shape = 'u8[98304]{0}', space=vmem, size = 0x18000, scoped, tag = 'input window, operand 5, single buffered']
    #allocation8 [shape = 'u8[32768]{0}', space=vmem, size = 0x8000, scoped, tag = 'input window, operand 6, single buffered']
    #allocation9 [shape = 's32[1]{0}', space=sflag, size = 0x4, scoped, tag = 'scoped memory for block_forward.1']
    #allocation10 [shape = 'u8[131072]{0}', space=vmem, size = 0x20000, scoped, tag = 'input window, operand 8, single buffered']
    #allocation11 [shape = 'u8[131072]{0}', space=vmem, size = 0x20000, scoped, tag = 'input window, operand 10, single buffered']
    #allocation12 [shape = 's32[1]{0}', space=sflag, size = 0x4, scoped, tag = 'scoped memory for block_forward.1']
    #allocation13 [shape = 'u8[65536]{0}', space=vmem, size = 0x10000, scoped, tag = 'input window, operand 12, single buffered']
    #allocation14 [shape = 'u8[131072]{0}', space=vmem, size = 0x20000, scoped, tag = 'output window, operand 0']
    %18 = vsyncpa [#allocation3], 0
    %s19 = scalar_lea.sflag [#allocation3], 1
    %20 = vsyncpa %s19, 0
    %21 = vsyncpa [#allocation6], 0
    %22 = vsyncpa [#allocation9], 0
    %23 = vsyncpa [#allocation12], 0
    %24 = vsyncpa [#allocation4], 0
    %s25 = scalar_lea.sflag [#allocation4], 1
    %26 = vsyncpa %s25, 0
    loop: start=0, step=1, limit=4
    $region2: #{block_forward.1} parent=1 // loop_pre_header
      _
    $region3: #{block_forward.1} parent=1 // loop_header
      %s28 = sphi 0, %s32
      %p29 = scmp.ge.s32.totalorder %s28, 4
      %s38 = sphi 0, %s40
      %s41 = sphi 0, %s38
      %s42 = sphi 0, %s41
      %s58 = sphi 0, %s42
      %s62 = sphi 0, %s62
      %s64 = sphi 0, %s62
      %s65 = sphi 0, %s64
      %s79 = sphi 0, %s65
      %s83 = sphi 0, %s83
      %s85 = sphi 0, %s83
      %s86 = sphi 0, %s85
      %s100 = sphi 0, %s86
      %s104 = sphi 0, %s104
      %s106 = sphi 0, %s104
      %s107 = sphi 0, %s106
      %s121 = sphi 0, %s107
      %s125 = sphi 0, %s125
      %s127 = sphi 0, %s125
      %s128 = sphi 0, %s127
      %s142 = sphi 0, %s128
      %s146 = sphi 0, %s146
      %s148 = sphi 0, %s146
      %s149 = sphi 0, %s148
      %s163 = sphi 0, %s149
      %s167 = sphi 0, %s167
      %s169 = sphi 0, %s167
      %s170 = sphi 0, %s169
      %s184 = sphi 0, %s170
      %s188 = sphi 0, %s188
      %s190 = sphi 0, %s188
      %s191 = sphi 0, %s190
      %s205 = sphi 0, %s191
      %s209 = sphi 0, %s209
      %s211 = sphi 0, %s209
      %s212 = sphi 0, %s211
      %s226 = sphi 0, %s212
      %s230 = sphi 0, %s230
      %s232 = sphi 0, %s230
      %s233 = sphi 0, %s232
      %s247 = sphi 0, %s233
      %s251 = sphi 0, %s251
      %s253 = sphi 0, %s251
      %s254 = sphi 0, %s253
      %s268 = sphi 0, %s254
      %s272 = sphi 0, %s272
      %s274 = sphi 0, %s272
      %s275 = sphi 0, %s274
      %s289 = sphi 0, %s275
      %s293 = sphi 0, %s293
      %s295 = sphi 0, %s293
      %s296 = sphi 0, %s295
      %s310 = sphi 0, %s296
      %s316 = sphi 0, %s318
      %s319 = sphi 0, %s316
      %s320 = sphi 0, %s319
      %s336 = sphi 0, %s320
    $region4: #{block_forward.1} parent=1 // loop_header_branch
      %31 = sbr.rel (%p29) target = $region8
    $region5: #{block_forward.1} parent=1 // loop_body
      %s33 = ssub.s32 %s28, 1
      %s34 = ssub.s32 %s28, 2
      %s35 = sadd.s32 %s28, 1
      %s36 = ssub.s32 %s28, %s35
      %p37 = scmp.eq.s32.totalorder %s36, 0
      %s39 = sadd.s32 %s38, 1
      %s40 = scalar_select %p37, %s38, %s39
      %p43 = pneg %p37
      %p44 = scmp.eq.s32.totalorder %s28, 1
      %p45 = por %p43, %p44
      %p46 = scmp.ne.s32.totalorder %s38, %s41
      %p47 = scmp.eq.s32.totalorder %s28, 0
      %p48 = por %p46, %p47
      %p49 = scmp.ne.s32.totalorder %s38, %s41
      %p50 = scmp.eq.s32.totalorder %s33, 1
      %p51 = por %p49, %p50
      %p52 = scmp.ne.s32.totalorder %s41, %s42
      %p53 = scmp.eq.s32.totalorder %s33, 0
      %p54 = por %p52, %p53
      %p55 = scmp.ne.s32.totalorder %s41, %s42
      %p56 = scmp.eq.s32.totalorder %s34, 1
      %p57 = por %p55, %p56
      %p59 = scmp.ne.s32.totalorder %s42, %s58
      %p60 = scmp.eq.s32.totalorder %s34, 0
      %p61 = por %p59, %p60
      %s63 = sadd.s32 %s62, 1
      %p66 = scmp.eq.s32.totalorder %s28, 1
      %p67 = scmp.ne.s32.totalorder %s62, %s64
      %p68 = scmp.eq.s32.totalorder %s28, 0
      %p69 = por %p67, %p68
      %p70 = scmp.ne.s32.totalorder %s62, %s64
      %p71 = scmp.eq.s32.totalorder %s33, 1
      %p72 = por %p70, %p71
      %p73 = scmp.ne.s32.totalorder %s64, %s65
      %p74 = scmp.eq.s32.totalorder %s33, 0
      %p75 = por %p73, %p74
      %p76 = scmp.ne.s32.totalorder %s64, %s65
      %p77 = scmp.eq.s32.totalorder %s34, 1
      %p78 = por %p76, %p77
      %p80 = scmp.ne.s32.totalorder %s65, %s79
      %p81 = scmp.eq.s32.totalorder %s34, 0
      %p82 = por %p80, %p81
      %s84 = sadd.s32 %s83, 1
      %p87 = scmp.eq.s32.totalorder %s28, 1
      %p88 = scmp.ne.s32.totalorder %s83, %s85
      %p89 = scmp.eq.s32.totalorder %s28, 0
      %p90 = por %p88, %p89
      %p91 = scmp.ne.s32.totalorder %s83, %s85
      %p92 = scmp.eq.s32.totalorder %s33, 1
      %p93 = por %p91, %p92
      %p94 = scmp.ne.s32.totalorder %s85, %s86
      %p95 = scmp.eq.s32.totalorder %s33, 0
      %p96 = por %p94, %p95
      %p97 = scmp.ne.s32.totalorder %s85, %s86
      %p98 = scmp.eq.s32.totalorder %s34, 1
      %p99 = por %p97, %p98
      %p101 = scmp.ne.s32.totalorder %s86, %s100
      %p102 = scmp.eq.s32.totalorder %s34, 0
      %p103 = por %p101, %p102
      %s105 = sadd.s32 %s104, 1
      %p108 = scmp.eq.s32.totalorder %s28, 1
      %p109 = scmp.ne.s32.totalorder %s104, %s106
      %p110 = scmp.eq.s32.totalorder %s28, 0
      %p111 = por %p109, %p110
      %p112 = scmp.ne.s32.totalorder %s104, %s106
      %p113 = scmp.eq.s32.totalorder %s33, 1
      %p114 = por %p112, %p113
      %p115 = scmp.ne.s32.totalorder %s106, %s107
      %p116 = scmp.eq.s32.totalorder %s33, 0
      %p117 = por %p115, %p116
      %p118 = scmp.ne.s32.totalorder %s106, %s107
      %p119 = scmp.eq.s32.totalorder %s34, 1
      %p120 = por %p118, %p119
      %p122 = scmp.ne.s32.totalorder %s107, %s121
      %p123 = scmp.eq.s32.totalorder %s34, 0
      %p124 = por %p122, %p123
      %s126 = sadd.s32 %s125, 1
      %p129 = scmp.eq.s32.totalorder %s28, 1
      %p130 = scmp.ne.s32.totalorder %s125, %s127
      %p131 = scmp.eq.s32.totalorder %s28, 0
      %p132 = por %p130, %p131
      %p133 = scmp.ne.s32.totalorder %s125, %s127
      %p134 = scmp.eq.s32.totalorder %s33, 1
      %p135 = por %p133, %p134
      %p136 = scmp.ne.s32.totalorder %s127, %s128
      %p137 = scmp.eq.s32.totalorder %s33, 0
      %p138 = por %p136, %p137
      %p139 = scmp.ne.s32.totalorder %s127, %s128
      %p140 = scmp.eq.s32.totalorder %s34, 1
      %p141 = por %p139, %p140
      %p143 = scmp.ne.s32.totalorder %s128, %s142
      %p144 = scmp.eq.s32.totalorder %s34, 0
      %p145 = por %p143, %p144
      %s147 = sadd.s32 %s146, 1
      %p150 = scmp.eq.s32.totalorder %s28, 1
      %p151 = scmp.ne.s32.totalorder %s146, %s148
      %p152 = scmp.eq.s32.totalorder %s28, 0
      %p153 = por %p151, %p152
      %p154 = scmp.ne.s32.totalorder %s146, %s148
      %p155 = scmp.eq.s32.totalorder %s33, 1
      %p156 = por %p154, %p155
      %p157 = scmp.ne.s32.totalorder %s148, %s149
      %p158 = scmp.eq.s32.totalorder %s33, 0
      %p159 = por %p157, %p158
      %p160 = scmp.ne.s32.totalorder %s148, %s149
      %p161 = scmp.eq.s32.totalorder %s34, 1
      %p162 = por %p160, %p161
      %p164 = scmp.ne.s32.totalorder %s149, %s163
      %p165 = scmp.eq.s32.totalorder %s34, 0
      %p166 = por %p164, %p165
      %s168 = sadd.s32 %s167, 1
      %p171 = scmp.eq.s32.totalorder %s28, 1
      %p172 = scmp.ne.s32.totalorder %s167, %s169
      %p173 = scmp.eq.s32.totalorder %s28, 0
      %p174 = por %p172, %p173
      %p175 = scmp.ne.s32.totalorder %s167, %s169
      %p176 = scmp.eq.s32.totalorder %s33, 1
      %p177 = por %p175, %p176
      %p178 = scmp.ne.s32.totalorder %s169, %s170
      %p179 = scmp.eq.s32.totalorder %s33, 0
      %p180 = por %p178, %p179
      %p181 = scmp.ne.s32.totalorder %s169, %s170
      %p182 = scmp.eq.s32.totalorder %s34, 1
      %p183 = por %p181, %p182
      %p185 = scmp.ne.s32.totalorder %s170, %s184
      %p186 = scmp.eq.s32.totalorder %s34, 0
      %p187 = por %p185, %p186
      %s189 = sadd.s32 %s188, 1
      %p192 = scmp.eq.s32.totalorder %s28, 1
      %p193 = scmp.ne.s32.totalorder %s188, %s190
      %p194 = scmp.eq.s32.totalorder %s28, 0
      %p195 = por %p193, %p194
      %p196 = scmp.ne.s32.totalorder %s188, %s190
      %p197 = scmp.eq.s32.totalorder %s33, 1
      %p198 = por %p196, %p197
      %p199 = scmp.ne.s32.totalorder %s190, %s191
      %p200 = scmp.eq.s32.totalorder %s33, 0
      %p201 = por %p199, %p200
      %p202 = scmp.ne.s32.totalorder %s190, %s191
      %p203 = scmp.eq.s32.totalorder %s34, 1
      %p204 = por %p202, %p203
      %p206 = scmp.ne.s32.totalorder %s191, %s205
      %p207 = scmp.eq.s32.totalorder %s34, 0
      %p208 = por %p206, %p207
      %s210 = sadd.s32 %s209, 1
      %p213 = scmp.eq.s32.totalorder %s28, 1
      %p214 = scmp.ne.s32.totalorder %s209, %s211
      %p215 = scmp.eq.s32.totalorder %s28, 0
      %p216 = por %p214, %p215
      %p217 = scmp.ne.s32.totalorder %s209, %s211
      %p218 = scmp.eq.s32.totalorder %s33, 1
      %p219 = por %p217, %p218
      %p220 = scmp.ne.s32.totalorder %s211, %s212
      %p221 = scmp.eq.s32.totalorder %s33, 0
      %p222 = por %p220, %p221
      %p223 = scmp.ne.s32.totalorder %s211, %s212
      %p224 = scmp.eq.s32.totalorder %s34, 1
      %p225 = por %p223, %p224
      %p227 = scmp.ne.s32.totalorder %s212, %s226
      %p228 = scmp.eq.s32.totalorder %s34, 0
      %p229 = por %p227, %p228
      %s231 = sadd.s32 %s230, 1
      %p234 = scmp.eq.s32.totalorder %s28, 1
      %p235 = scmp.ne.s32.totalorder %s230, %s232
      %p236 = scmp.eq.s32.totalorder %s28, 0
      %p237 = por %p235, %p236
      %p238 = scmp.ne.s32.totalorder %s230, %s232
      %p239 = scmp.eq.s32.totalorder %s33, 1
      %p240 = por %p238, %p239
      %p241 = scmp.ne.s32.totalorder %s232, %s233
      %p242 = scmp.eq.s32.totalorder %s33, 0
      %p243 = por %p241, %p242
      %p244 = scmp.ne.s32.totalorder %s232, %s233
      %p245 = scmp.eq.s32.totalorder %s34, 1
      %p246 = por %p244, %p245
      %p248 = scmp.ne.s32.totalorder %s233, %s247
      %p249 = scmp.eq.s32.totalorder %s34, 0
      %p250 = por %p248, %p249
      %s252 = sadd.s32 %s251, 1
      %p255 = scmp.eq.s32.totalorder %s28, 1
      %p256 = scmp.ne.s32.totalorder %s251, %s253
      %p257 = scmp.eq.s32.totalorder %s28, 0
      %p258 = por %p256, %p257
      %p259 = scmp.ne.s32.totalorder %s251, %s253
      %p260 = scmp.eq.s32.totalorder %s33, 1
      %p261 = por %p259, %p260
      %p262 = scmp.ne.s32.totalorder %s253, %s254
      %p263 = scmp.eq.s32.totalorder %s33, 0
      %p264 = por %p262, %p263
      %p265 = scmp.ne.s32.totalorder %s253, %s254
      %p266 = scmp.eq.s32.totalorder %s34, 1
      %p267 = por %p265, %p266
      %p269 = scmp.ne.s32.totalorder %s254, %s268
      %p270 = scmp.eq.s32.totalorder %s34, 0
      %p271 = por %p269, %p270
      %s273 = sadd.s32 %s272, 1
      %p276 = scmp.eq.s32.totalorder %s28, 1
      %p277 = scmp.ne.s32.totalorder %s272, %s274
      %p278 = scmp.eq.s32.totalorder %s28, 0
      %p279 = por %p277, %p278
      %p280 = scmp.ne.s32.totalorder %s272, %s274
      %p281 = scmp.eq.s32.totalorder %s33, 1
      %p282 = por %p280, %p281
      %p283 = scmp.ne.s32.totalorder %s274, %s275
      %p284 = scmp.eq.s32.totalorder %s33, 0
      %p285 = por %p283, %p284
      %p286 = scmp.ne.s32.totalorder %s274, %s275
      %p287 = scmp.eq.s32.totalorder %s34, 1
      %p288 = por %p286, %p287
      %p290 = scmp.ne.s32.totalorder %s275, %s289
      %p291 = scmp.eq.s32.totalorder %s34, 0
      %p292 = por %p290, %p291
      %s294 = sadd.s32 %s293, 1
      %p297 = scmp.eq.s32.totalorder %s28, 1
      %p298 = scmp.ne.s32.totalorder %s293, %s295
      %p299 = scmp.eq.s32.totalorder %s28, 0
      %p300 = por %p298, %p299
      %p301 = scmp.ne.s32.totalorder %s293, %s295
      %p302 = scmp.eq.s32.totalorder %s33, 1
      %p303 = por %p301, %p302
      %p304 = scmp.ne.s32.totalorder %s295, %s296
      %p305 = scmp.eq.s32.totalorder %s33, 0
      %p306 = por %p304, %p305
      %p307 = scmp.ne.s32.totalorder %s295, %s296
      %p308 = scmp.eq.s32.totalorder %s34, 1
      %p309 = por %p307, %p308
      %p311 = scmp.ne.s32.totalorder %s296, %s310
      %p312 = scmp.eq.s32.totalorder %s34, 0
      %p313 = por %p311, %p312
      %s314 = ssub.s32 %s28, %s35
      %p315 = scmp.eq.s32.totalorder %s314, 0
      %s317 = sadd.s32 %s316, 1
      %s318 = scalar_select %p315, %s316, %s317
      %p321 = pneg %p315
      %p322 = scmp.eq.s32.totalorder %s28, 1
      %p323 = por %p321, %p322
      %p324 = scmp.ne.s32.totalorder %s316, %s319
      %p325 = scmp.eq.s32.totalorder %s28, 0
      %p326 = por %p324, %p325
      %p327 = scmp.ne.s32.totalorder %s316, %s319
      %p328 = scmp.eq.s32.totalorder %s33, 1
      %p329 = por %p327, %p328
      %p330 = scmp.ne.s32.totalorder %s319, %s320
      %p331 = scmp.eq.s32.totalorder %s33, 0
      %p332 = por %p330, %p331
      %p333 = scmp.ne.s32.totalorder %s319, %s320
      %p334 = scmp.eq.s32.totalorder %s34, 1
      %p335 = por %p333, %p334
      %p337 = scmp.ne.s32.totalorder %s320, %s336
      %p338 = scmp.eq.s32.totalorder %s34, 0
      %p339 = por %p337, %p338
      %p340 = scmp.le.s32.totalorder 1, %s28
      %p341 = scmp.lt.s32.totalorder %s28, 3
      %p342 = pnand %p340, %p341
      %p343 = pneg %p342
      // Predicated region
      $region9: #{block_forward.1} parent=5 // pred_check
        _
      $region10: #{block_forward.1} parent=5 // pred_check_branch
        %345 = sbr.rel (%p342) target = $region12
      $region11: #{block_forward.1} parent=5 // pred_region
        %s346 = ssub.s32 %s28, 1
        // Predicated region
        $region13: #{block_forward.1} parent=11 // pred_check
          %p347 = pneg %p75
        $region14: #{block_forward.1} parent=11 // pred_check_branch
          %349 = sbr.rel (%p347) target = $region16
        $region15: #{block_forward.1} parent=11 // pred_region
          _
        $region16: #{block_forward.1} parent=11 // pred_fallthru
          _
        // Predicated region
        $region17: #{block_forward.1} parent=11 // pred_check
          %p350 = pneg %p96
        $region18: #{block_forward.1} parent=11 // pred_check_branch
          %352 = sbr.rel (%p350) target = $region20
        $region19: #{block_forward.1} parent=11 // pred_region
          _
        $region20: #{block_forward.1} parent=11 // pred_fallthru
          _
        // Predicated region
        $region21: #{block_forward.1} parent=11 // pred_check
          %p353 = pneg %p117
        $region22: #{block_forward.1} parent=11 // pred_check_branch
          %355 = sbr.rel (%p353) target = $region24
        $region23: #{block_forward.1} parent=11 // pred_region
          _
        $region24: #{block_forward.1} parent=11 // pred_fallthru
          _
        // Predicated region
        $region25: #{block_forward.1} parent=11 // pred_check
          %p356 = pneg %p138
        $region26: #{block_forward.1} parent=11 // pred_check_branch
          %358 = sbr.rel (%p356) target = $region28
        $region27: #{block_forward.1} parent=11 // pred_region
          %s360 = ssub.s32 16, 16
          %361 = vsyncadd [#allocation6], %s360
          %s363 = sshll.u32 [#allocation5], 4
          %s364 = int_to_ptr.vmem [resolvable:$true] %s363
          %366 = dma.hbm_to_vmem [thread:$0]  %s4, 16, %s364, [#allocation6]
        $region28: #{block_forward.1} parent=11 // pred_fallthru
          _
        // Predicated region
        $region29: #{block_forward.1} parent=11 // pred_check
          %p367 = pneg %p159
        $region30: #{block_forward.1} parent=11 // pred_check_branch
          %369 = sbr.rel (%p367) target = $region32
        $region31: #{block_forward.1} parent=11 // pred_region
          %s371 = ssub.s32 3072, 3072
          %372 = vsyncadd [#allocation6], %s371
          %s373 = sshll.u32 [#allocation7], 4
          %s374 = int_to_ptr.vmem [resolvable:$true] %s373
          %379 = dma.hbm_to_vmem [thread:$0]  %s5, 3072, %s374, [#allocation6], 192, 192, 12
        $region32: #{block_forward.1} parent=11 // pred_fallthru
          _
        // Predicated region
        $region33: #{block_forward.1} parent=11 // pred_check
          %p380 = pneg %p180
        $region34: #{block_forward.1} parent=11 // pred_check_branch
          %382 = sbr.rel (%p380) target = $region36
        $region35: #{block_forward.1} parent=11 // pred_region
          %s384 = ssub.s32 1024, 1024
          %385 = vsyncadd [#allocation9], %s384
          %s386 = sshll.u32 [#allocation8], 4
          %s387 = int_to_ptr.vmem [resolvable:$true] %s386
          %392 = dma.hbm_to_vmem [thread:$0]  %s6, 1024, %s387, [#allocation9], 64, 64, 4
        $region36: #{block_forward.1} parent=11 // pred_fallthru
          _
        // Predicated region
        $region37: #{block_forward.1} parent=11 // pred_check
          %p393 = pneg %p201
        $region38: #{block_forward.1} parent=11 // pred_check_branch
          %395 = sbr.rel (%p393) target = $region40
        $region39: #{block_forward.1} parent=11 // pred_region
          _
        $region40: #{block_forward.1} parent=11 // pred_fallthru
          _
        // Predicated region
        $region41: #{block_forward.1} parent=11 // pred_check
          %p396 = pneg %p222
        $region42: #{block_forward.1} parent=11 // pred_check_branch
          %398 = sbr.rel (%p396) target = $region44
        $region43: #{block_forward.1} parent=11 // pred_region
          %s400 = ssub.s32 4096, 4096
          %401 = vsyncadd [#allocation9], %s400
          %s402 = sshll.u32 [#allocation10], 4
          %s403 = int_to_ptr.vmem [resolvable:$true] %s402
          %408 = dma.hbm_to_vmem [thread:$0]  %s8, 4096, %s403, [#allocation9], 256, 256, 16
        $region44: #{block_forward.1} parent=11 // pred_fallthru
          _
        // Predicated region
        $region45: #{block_forward.1} parent=11 // pred_check
          %p409 = pneg %p243
        $region46: #{block_forward.1} parent=11 // pred_check_branch
          %411 = sbr.rel (%p409) target = $region48
        $region47: #{block_forward.1} parent=11 // pred_region
          _
        $region48: #{block_forward.1} parent=11 // pred_fallthru
          _
        // Predicated region
        $region49: #{block_forward.1} parent=11 // pred_check
          %p412 = pneg %p264
        $region50: #{block_forward.1} parent=11 // pred_check_branch
          %414 = sbr.rel (%p412) target = $region52
        $region51: #{block_forward.1} parent=11 // pred_region
          %s416 = ssub.s32 4096, 4096
          %417 = vsyncadd [#allocation12], %s416
          %s418 = sshll.u32 [#allocation11], 4
          %s419 = int_to_ptr.vmem [resolvable:$true] %s418
          %424 = dma.hbm_to_vmem [thread:$0]  %s10, 4096, %s419, [#allocation12], 64, 64, 4
        $region52: #{block_forward.1} parent=11 // pred_fallthru
          _
        // Predicated region
        $region53: #{block_forward.1} parent=11 // pred_check
          %p425 = pneg %p285
        $region54: #{block_forward.1} parent=11 // pred_check_branch
          %427 = sbr.rel (%p425) target = $region56
        $region55: #{block_forward.1} parent=11 // pred_region
          _
        $region56: #{block_forward.1} parent=11 // pred_fallthru
          _
        // Predicated region
        $region57: #{block_forward.1} parent=11 // pred_check
          %p428 = pneg %p306
        $region58: #{block_forward.1} parent=11 // pred_check_branch
          %430 = sbr.rel (%p428) target = $region60
        $region59: #{block_forward.1} parent=11 // pred_region
          %s432 = ssub.s32 2048, 2048
          %433 = vsyncadd [#allocation12], %s432
          %s434 = sshll.u32 [#allocation13], 4
          %s435 = int_to_ptr.vmem [resolvable:$true] %s434
          %440 = dma.hbm_to_vmem [thread:$0]  %s12, 2048, %s435, [#allocation12], 128, 128, 8
        $region60: #{block_forward.1} parent=11 // pred_fallthru
          _
      $region12: #{block_forward.1} parent=5 // pred_fallthru
        _
      %p441 = scmp.lt.s32.totalorder %s28, 2
      // Predicated region
      $region61: #{block_forward.1} parent=5 // pred_check
        %p442 = pneg %p441
      $region62: #{block_forward.1} parent=5 // pred_check_branch
        %444 = sbr.rel (%p442) target = $region64
      $region63: #{block_forward.1} parent=5 // pred_region
        // Predicated region
        $region65: #{block_forward.1} parent=63 // pred_check
          %p445 = pneg %p48
        $region66: #{block_forward.1} parent=63 // pred_check_branch
          %447 = sbr.rel (%p445) target = $region68
        $region67: #{block_forward.1} parent=63 // pred_region
          %s448 = sand.u32 %s38, 1
          %s449 = scalar_lea.sflag [#allocation3], %s448
          %s450 = sand.u32 %s38, 1
          %s451 = smul.addr %s450, 128
          %s452 = scalar_lea.vmem [#allocation2], %s451
          %s454 = ssub.s32 2048, 2048
          %455 = vsyncadd %s449, %s454
          %s456 = smul.addr %s28, 16
          %s457 = smul.addr %s456, 128
          %s458 = scalar_lea.hbm %s0, %s457
          %s459 = sshll.u32 %s452, 4
          %s460 = int_to_ptr.vmem [resolvable:$true] %s459
          %465 = dma.hbm_to_vmem [thread:$0]  %s458, 2048, %s460, %s449, 128, 128, 8
        $region68: #{block_forward.1} parent=63 // pred_fallthru
          _
      $region64: #{block_forward.1} parent=5 // pred_fallthru
        _
      %p466 = scmp.le.s32.totalorder 1, %s28
      %p467 = scmp.lt.s32.totalorder %s28, 3
      %p468 = pnand %p466, %p467
      %p469 = pneg %p468
      // Predicated region
      $region69: #{block_forward.1} parent=5 // pred_check
        _
      $region70: #{block_forward.1} parent=5 // pred_check_branch
        %471 = sbr.rel (%p468) target = $region72
      $region71: #{block_forward.1} parent=5 // pred_region
        %s472 = ssub.s32 %s28, 1
        %s473 = sand.u32 %s41, 1
        %s474 = scalar_lea.sflag [#allocation3], %s473
        %s475 = sand.u32 %s41, 1
        %s476 = smul.addr %s475, 128
        %s477 = scalar_lea.vmem [#allocation2], %s476
        // Predicated region
        $region73: #{block_forward.1} parent=71 // pred_check
          %p478 = pneg %p54
        $region74: #{block_forward.1} parent=71 // pred_check_branch
          %480 = sbr.rel (%p478) target = $region76
        $region75: #{block_forward.1} parent=71 // pred_region
          %481 = dma.done %s474, 2048
        $region76: #{block_forward.1} parent=71 // pred_fallthru
          _
        // Predicated region
        $region77: #{block_forward.1} parent=71 // pred_check
          %p482 = pneg %p138
        $region78: #{block_forward.1} parent=71 // pred_check_branch
          %484 = sbr.rel (%p482) target = $region80
        $region79: #{block_forward.1} parent=71 // pred_region
          %485 = dma.done [#allocation6], 16
        $region80: #{block_forward.1} parent=71 // pred_fallthru
          _
        // Predicated region
        $region81: #{block_forward.1} parent=71 // pred_check
          %p486 = pneg %p159
        $region82: #{block_forward.1} parent=71 // pred_check_branch
          %488 = sbr.rel (%p486) target = $region84
        $region83: #{block_forward.1} parent=71 // pred_region
          %489 = dma.done [#allocation6], 3072
        $region84: #{block_forward.1} parent=71 // pred_fallthru
          _
        // Predicated region
        $region85: #{block_forward.1} parent=71 // pred_check
          %p490 = pneg %p180
        $region86: #{block_forward.1} parent=71 // pred_check_branch
          %492 = sbr.rel (%p490) target = $region88
        $region87: #{block_forward.1} parent=71 // pred_region
          %493 = dma.done [#allocation9], 1024
        $region88: #{block_forward.1} parent=71 // pred_fallthru
          _
        // Predicated region
        $region89: #{block_forward.1} parent=71 // pred_check
          %p494 = pneg %p222
        $region90: #{block_forward.1} parent=71 // pred_check_branch
          %496 = sbr.rel (%p494) target = $region92
        $region91: #{block_forward.1} parent=71 // pred_region
          %497 = dma.done [#allocation9], 4096
        $region92: #{block_forward.1} parent=71 // pred_fallthru
          _
        // Predicated region
        $region93: #{block_forward.1} parent=71 // pred_check
          %p498 = pneg %p264
        $region94: #{block_forward.1} parent=71 // pred_check_branch
          %500 = sbr.rel (%p498) target = $region96
        $region95: #{block_forward.1} parent=71 // pred_region
          %501 = dma.done [#allocation12], 4096
        $region96: #{block_forward.1} parent=71 // pred_fallthru
          _
        // Predicated region
        $region97: #{block_forward.1} parent=71 // pred_check
          %p502 = pneg %p306
        $region98: #{block_forward.1} parent=71 // pred_check_branch
          %504 = sbr.rel (%p502) target = $region100
        $region99: #{block_forward.1} parent=71 // pred_region
          %505 = dma.done [#allocation12], 2048
        $region100: #{block_forward.1} parent=71 // pred_fallthru
          _
        %s506 = sand.u32 %s41, 1
        %s507 = scalar_lea.sflag [#allocation3], %s506
        %s508 = sand.u32 %s41, 1
        %s509 = smul.addr %s508, 128
        %s510 = scalar_lea.vmem [#allocation2], %s509
        %p511 = pneg %p54
        %p512 = pneg %p51
        %p513 = pneg %p75
        %p514 = pneg %p72
        %p515 = pneg %p96
        %p516 = pneg %p93
        %p517 = pneg %p117
        %p518 = pneg %p114
        %p519 = pneg %p138
        %p520 = pneg %p135
        %p521 = pneg %p159
        %p522 = pneg %p156
        %p523 = pneg %p180
        %p524 = pneg %p177
        %p525 = pneg %p201
        %p526 = pneg %p198
        %p527 = pneg %p222
        %p528 = pneg %p219
        %p529 = pneg %p243
        %p530 = pneg %p240
        %p531 = pneg %p264
        %p532 = pneg %p261
        %p533 = pneg %p285
        %p534 = pneg %p282
        %p535 = pneg %p306
        %p536 = pneg %p303
        %p537 = pneg %p332
        %p538 = pneg %p329
        %s539 = sand.u32 %s319, 1
        %s540 = scalar_lea.sflag [#allocation4], %s539
        %s541 = sand.u32 %s319, 1
        %s542 = smul.addr %s541, 128
        %s543 = scalar_lea.vmem [#allocation14], %s542
        %v545 = vld [vmem:[%s477] sm:$0xff]
        %v546 = vld [vmem:[%s477 + $0x8] sm:$0xff]
        %v547 = vld [vmem:[%s477 + $0x10] sm:$0xff]
        %v548 = vld [vmem:[%s477 + $0x18] sm:$0xff]
        %v549 = vld [vmem:[%s477 + $0x20] sm:$0xff]
        %v550 = vld [vmem:[%s477 + $0x28] sm:$0xff]
        %v551 = vld [vmem:[%s477 + $0x30] sm:$0xff]
        %v552 = vld [vmem:[%s477 + $0x38] sm:$0xff]
        %v553 = vld [vmem:[%s477 + $0x40] sm:$0xff]
        %v554 = vld [vmem:[%s477 + $0x48] sm:$0xff]
        %v555 = vld [vmem:[%s477 + $0x50] sm:$0xff]
        %v556 = vld [vmem:[%s477 + $0x58] sm:$0xff]
        %v557 = vld [vmem:[%s477 + $0x60] sm:$0xff]
        %v558 = vld [vmem:[%s477 + $0x68] sm:$0xff]
        %v559 = vld [vmem:[%s477 + $0x70] sm:$0xff]
        %v560 = vld [vmem:[%s477 + $0x78] sm:$0xff]
        %v561 = vld [vmem:[%s1] sm:$0x1]
        %v562 = vld [vmem:[%s2] sm:$0x1]
        %563 = vadd.xlane.f32.xlu0 %v545
        %v564 = vpop.xlane.xlu0 %563
        %565 = vadd.xlane.f32.xlu0 %v546
        %v566 = vpop.xlane.xlu0 %565
        %567 = vadd.xlane.f32.xlu0 %v547
        %v568 = vpop.xlane.xlu0 %567
        %569 = vadd.xlane.f32.xlu0 %v548
        %v570 = vpop.xlane.xlu0 %569
        %571 = vadd.xlane.f32.xlu0 %v549
        %v572 = vpop.xlane.xlu0 %571
        %573 = vadd.xlane.f32.xlu0 %v550
        %v574 = vpop.xlane.xlu0 %573
        %575 = vadd.xlane.f32.xlu0 %v551
        %v576 = vpop.xlane.xlu0 %575
        %577 = vadd.xlane.f32.xlu0 %v552
        %v578 = vpop.xlane.xlu0 %577
        %579 = vadd.xlane.f32.xlu0 %v553
        %v580 = vpop.xlane.xlu0 %579
        %581 = vadd.xlane.f32.xlu0 %v554
        %v582 = vpop.xlane.xlu0 %581
        %583 = vadd.xlane.f32.xlu0 %v555
        %v584 = vpop.xlane.xlu0 %583
        %585 = vadd.xlane.f32.xlu0 %v556
        %v586 = vpop.xlane.xlu0 %585
        %587 = vadd.xlane.f32.xlu0 %v557
        %v588 = vpop.xlane.xlu0 %587
        %589 = vadd.xlane.f32.xlu0 %v558
        %v590 = vpop.xlane.xlu0 %589
        %591 = vadd.xlane.f32.xlu0 %v559
        %v592 = vpop.xlane.xlu0 %591
        %593 = vadd.xlane.f32.xlu0 %v560
        %v594 = vpop.xlane.xlu0 %593
        %v595 = vrcp.pop 128.0
        %v596 = vmul.f32 %v564, %v595
        %v597 = vmul.f32 %v566, %v595
        %v598 = vmul.f32 %v568, %v595
        %v599 = vmul.f32 %v570, %v595
        %v600 = vmul.f32 %v572, %v595
        %v601 = vmul.f32 %v574, %v595
        %v602 = vmul.f32 %v576, %v595
        %v603 = vmul.f32 %v578, %v595
        %v604 = vmul.f32 %v580, %v595
        %v605 = vmul.f32 %v582, %v595
        %v606 = vmul.f32 %v584, %v595
        %v607 = vmul.f32 %v586, %v595
        %v608 = vmul.f32 %v588, %v595
        %v609 = vmul.f32 %v590, %v595
        %v610 = vmul.f32 %v592, %v595
        %v611 = vmul.f32 %v594, %v595
        %v612 = vsub.f32 %v545, %v596
        %v613 = vsub.f32 %v546, %v597
        %v614 = vsub.f32 %v547, %v598
        %v615 = vsub.f32 %v548, %v599
        %v616 = vsub.f32 %v549, %v600
        %v617 = vsub.f32 %v550, %v601
        %v618 = vsub.f32 %v551, %v602
        %v619 = vsub.f32 %v552, %v603
        %v620 = vsub.f32 %v553, %v604
        %v621 = vsub.f32 %v554, %v605
        %v622 = vsub.f32 %v555, %v606
        %v623 = vsub.f32 %v556, %v607
        %v624 = vsub.f32 %v557, %v608
        %v625 = vsub.f32 %v558, %v609
        %v626 = vsub.f32 %v559, %v610
        %v627 = vsub.f32 %v560, %v611
        %v628 = vmul.f32 %v612, %v612
        %v629 = vmul.f32 %v613, %v613
        %v630 = vmul.f32 %v614, %v614
        %v631 = vmul.f32 %v615, %v615
        %v632 = vmul.f32 %v616, %v616
        %v633 = vmul.f32 %v617, %v617
        %v634 = vmul.f32 %v618, %v618
        %v635 = vmul.f32 %v619, %v619
        %v636 = vmul.f32 %v620, %v620
        %v637 = vmul.f32 %v621, %v621
        %v638 = vmul.f32 %v622, %v622
        %v639 = vmul.f32 %v623, %v623
        %v640 = vmul.f32 %v624, %v624
        %v641 = vmul.f32 %v625, %v625
        %v642 = vmul.f32 %v626, %v626
        %v643 = vmul.f32 %v627, %v627
        %644 = vadd.xlane.f32.xlu0 %v628
        %v645 = vpop.xlane.xlu0 %644
        %646 = vadd.xlane.f32.xlu0 %v629
        %v647 = vpop.xlane.xlu0 %646
        %648 = vadd.xlane.f32.xlu0 %v630
        %v649 = vpop.xlane.xlu0 %648
        %650 = vadd.xlane.f32.xlu0 %v631
        %v651 = vpop.xlane.xlu0 %650
        %652 = vadd.xlane.f32.xlu0 %v632
        %v653 = vpop.xlane.xlu0 %652
        %654 = vadd.xlane.f32.xlu0 %v633
        %v655 = vpop.xlane.xlu0 %654
        %656 = vadd.xlane.f32.xlu0 %v634
        %v657 = vpop.xlane.xlu0 %656
        %658 = vadd.xlane.f32.xlu0 %v635
        %v659 = vpop.xlane.xlu0 %658
        %660 = vadd.xlane.f32.xlu0 %v636
        %v661 = vpop.xlane.xlu0 %660
        %662 = vadd.xlane.f32.xlu0 %v637
        %v663 = vpop.xlane.xlu0 %662
        %664 = vadd.xlane.f32.xlu0 %v638
        %v665 = vpop.xlane.xlu0 %664
        %666 = vadd.xlane.f32.xlu0 %v639
        %v667 = vpop.xlane.xlu0 %666
        %668 = vadd.xlane.f32.xlu0 %v640
        %v669 = vpop.xlane.xlu0 %668
        %670 = vadd.xlane.f32.xlu0 %v641
        %v671 = vpop.xlane.xlu0 %670
        %672 = vadd.xlane.f32.xlu0 %v642
        %v673 = vpop.xlane.xlu0 %672
        %674 = vadd.xlane.f32.xlu0 %v643
        %v675 = vpop.xlane.xlu0 %674
        %v676 = vmul.f32 %v645, %v595
        %v677 = vmul.f32 %v647, %v595
        %v678 = vmul.f32 %v649, %v595
        %v679 = vmul.f32 %v651, %v595
        %v680 = vmul.f32 %v653, %v595
        %v681 = vmul.f32 %v655, %v595
        %v682 = vmul.f32 %v657, %v595
        %v683 = vmul.f32 %v659, %v595
        %v684 = vmul.f32 %v661, %v595
        %v685 = vmul.f32 %v663, %v595
        %v686 = vmul.f32 %v665, %v595
        %v687 = vmul.f32 %v667, %v595
        %v688 = vmul.f32 %v669, %v595
        %v689 = vmul.f32 %v671, %v595
        %v690 = vmul.f32 %v673, %v595
        %v691 = vmul.f32 %v675, %v595
        %v692 = vadd.f32 %v676, 1e-05
        %v693 = vadd.f32 %v677, 1e-05
        %v694 = vadd.f32 %v678, 1e-05
        %v695 = vadd.f32 %v679, 1e-05
        %v696 = vadd.f32 %v680, 1e-05
        %v697 = vadd.f32 %v681, 1e-05
        %v698 = vadd.f32 %v682, 1e-05
        %v699 = vadd.f32 %v683, 1e-05
        %v700 = vadd.f32 %v684, 1e-05
        %v701 = vadd.f32 %v685, 1e-05
        %v702 = vadd.f32 %v686, 1e-05
        %v703 = vadd.f32 %v687, 1e-05
        %v704 = vadd.f32 %v688, 1e-05
        %v705 = vadd.f32 %v689, 1e-05
        %v706 = vadd.f32 %v690, 1e-05
        %v707 = vadd.f32 %v691, 1e-05
        %v708 = vrsqrt.pop %v692
        %v709 = vrsqrt.pop %v693
        %v710 = vrsqrt.pop %v694
        %v711 = vrsqrt.pop %v695
        %v712 = vrsqrt.pop %v696
        %v713 = vrsqrt.pop %v697
        %v714 = vrsqrt.pop %v698
        %v715 = vrsqrt.pop %v699
        %v716 = vrsqrt.pop %v700
        %v717 = vrsqrt.pop %v701
        %v718 = vrsqrt.pop %v702
        %v719 = vrsqrt.pop %v703
        %v720 = vrsqrt.pop %v704
        %v721 = vrsqrt.pop %v705
        %v722 = vrsqrt.pop %v706
        %v723 = vrsqrt.pop %v707
        %v724 = vmul.f32 %v612, %v708
        %v725 = vmul.f32 %v613, %v709
        %v726 = vmul.f32 %v614, %v710
        %v727 = vmul.f32 %v615, %v711
        %v728 = vmul.f32 %v616, %v712
        %v729 = vmul.f32 %v617, %v713
        %v730 = vmul.f32 %v618, %v714
        %v731 = vmul.f32 %v619, %v715
        %v732 = vmul.f32 %v620, %v716
        %v733 = vmul.f32 %v621, %v717
        %v734 = vmul.f32 %v622, %v718
        %v735 = vmul.f32 %v623, %v719
        %v736 = vmul.f32 %v624, %v720
        %v737 = vmul.f32 %v625, %v721
        %v738 = vmul.f32 %v626, %v722
        %v739 = vmul.f32 %v627, %v723
        %v741 = vlaneseq
        %v742 = vshrl.u32 %v741, 7
        %v743 = vsub.s32 0, %v742
        %v744 = vrot.slane %v561, %v743
        %v746 = vmul.f32 %v724, %v744
        %v747 = vmul.f32 %v725, %v744
        %v748 = vmul.f32 %v726, %v744
        %v749 = vmul.f32 %v727, %v744
        %v750 = vmul.f32 %v728, %v744
        %v751 = vmul.f32 %v729, %v744
        %v752 = vmul.f32 %v730, %v744
        %v753 = vmul.f32 %v731, %v744
        %v754 = vmul.f32 %v732, %v744
        %v755 = vmul.f32 %v733, %v744
        %v756 = vmul.f32 %v734, %v744
        %v757 = vmul.f32 %v735, %v744
        %v758 = vmul.f32 %v736, %v744
        %v759 = vmul.f32 %v737, %v744
        %v760 = vmul.f32 %v738, %v744
        %v761 = vmul.f32 %v739, %v744
        %v763 = vlaneseq
        %v764 = vshrl.u32 %v763, 7
        %v765 = vsub.s32 0, %v764
        %v766 = vrot.slane %v562, %v765
        %v768 = vadd.f32 %v746, %v766
        %v769 = vadd.f32 %v747, %v766
        %v770 = vadd.f32 %v748, %v766
        %v771 = vadd.f32 %v749, %v766
        %v772 = vadd.f32 %v750, %v766
        %v773 = vadd.f32 %v751, %v766
        %v774 = vadd.f32 %v752, %v766
        %v775 = vadd.f32 %v753, %v766
        %v776 = vadd.f32 %v754, %v766
        %v777 = vadd.f32 %v755, %v766
        %v778 = vadd.f32 %v756, %v766
        %v779 = vadd.f32 %v757, %v766
        %v780 = vadd.f32 %v758, %v766
        %v781 = vadd.f32 %v759, %v766
        %v782 = vadd.f32 %v760, %v766
        %v783 = vadd.f32 %v761, %v766
        %v784 = vpack.c.bf16 %v769, %v768
        %v785 = vpack.c.bf16 %v771, %v770
        %v786 = vpack.c.bf16 %v773, %v772
        %v787 = vpack.c.bf16 %v775, %v774
        %v788 = vpack.c.bf16 %v777, %v776
        %v789 = vpack.c.bf16 %v779, %v778
        %v790 = vpack.c.bf16 %v781, %v780
        %v791 = vpack.c.bf16 %v783, %v782
        %v792 = vld [vmem:[#allocation7] sm:$0xff]
        %v793 = vld [vmem:[#allocation7 + $0x8] sm:$0xf]
        %v794 = vld [vmem:[#allocation7 + $0xc] sm:$0xff]
        %v795 = vld [vmem:[#allocation7 + $0x14] sm:$0xf]
        %v796 = vld [vmem:[#allocation7 + $0x18] sm:$0xff]
        %v797 = vld [vmem:[#allocation7 + $0x20] sm:$0xf]
        %v798 = vld [vmem:[#allocation7 + $0x24] sm:$0xff]
        %v799 = vld [vmem:[#allocation7 + $0x2c] sm:$0xf]
        %v800 = vld [vmem:[#allocation7 + $0x30] sm:$0xff]
        %v801 = vld [vmem:[#allocation7 + $0x38] sm:$0xf]
        %v802 = vld [vmem:[#allocation7 + $0x3c] sm:$0xff]
        %v803 = vld [vmem:[#allocation7 + $0x44] sm:$0xf]
        %v804 = vld [vmem:[#allocation7 + $0x48] sm:$0xff]
        %v805 = vld [vmem:[#allocation7 + $0x50] sm:$0xf]
        %v806 = vld [vmem:[#allocation7 + $0x54] sm:$0xff]
        %v807 = vld [vmem:[#allocation7 + $0x5c] sm:$0xf]
        %v808 = vld [vmem:[#allocation7 + $0x60] sm:$0xff]
        %v809 = vld [vmem:[#allocation7 + $0x68] sm:$0xf]
        %v810 = vld [vmem:[#allocation7 + $0x6c] sm:$0xff]
        %v811 = vld [vmem:[#allocation7 + $0x74] sm:$0xf]
        %v812 = vld [vmem:[#allocation7 + $0x78] sm:$0xff]
        %v813 = vld [vmem:[#allocation7 + $0x80] sm:$0xf]
        %v814 = vld [vmem:[#allocation7 + $0x84] sm:$0xff]
        %v815 = vld [vmem:[#allocation7 + $0x8c] sm:$0xf]
        %v816 = vld [vmem:[#allocation7 + $0x90] sm:$0xff]
        %v817 = vld [vmem:[#allocation7 + $0x98] sm:$0xf]
        %v818 = vld [vmem:[#allocation7 + $0x9c] sm:$0xff]
        %v819 = vld [vmem:[#allocation7 + $0xa4] sm:$0xf]
        %v820 = vld [vmem:[#allocation7 + $0xa8] sm:$0xff]
        %v821 = vld [vmem:[#allocation7 + $0xb0] sm:$0xf]
        %v822 = vld [vmem:[#allocation7 + $0xb4] sm:$0xff]
        %v823 = vld [vmem:[#allocation7 + $0xbc] sm:$0xf]
        %v856 = vunpack.c.l.b16 %v792
        %v857 = vunpack.c.h.b16 %v792
        %v858 = vunpack.c.l.b16 %v793
        %v859 = vunpack.c.l.b16 %v794
        %v860 = vunpack.c.h.b16 %v794
        %v861 = vunpack.c.l.b16 %v795
        %v862 = vunpack.c.l.b16 %v796
        %v863 = vunpack.c.h.b16 %v796
        %v864 = vunpack.c.l.b16 %v797
        %v865 = vunpack.c.l.b16 %v798
        %v866 = vunpack.c.h.b16 %v798
        %v867 = vunpack.c.l.b16 %v799
        %v868 = vunpack.c.l.b16 %v800
        %v869 = vunpack.c.h.b16 %v800
        %v870 = vunpack.c.l.b16 %v801
        %v871 = vunpack.c.l.b16 %v802
        %v872 = vunpack.c.h.b16 %v802
        %v873 = vunpack.c.l.b16 %v803
        %v874 = vunpack.c.l.b16 %v804
        %v875 = vunpack.c.h.b16 %v804
        %v876 = vunpack.c.l.b16 %v805
        %v877 = vunpack.c.l.b16 %v806
        %v878 = vunpack.c.h.b16 %v806
        %v879 = vunpack.c.l.b16 %v807
        %v880 = vunpack.c.l.b16 %v808
        %v881 = vunpack.c.h.b16 %v808
        %v882 = vunpack.c.l.b16 %v809
        %v883 = vunpack.c.l.b16 %v810
        %v884 = vunpack.c.h.b16 %v810
        %v885 = vunpack.c.l.b16 %v811
        %v886 = vunpack.c.l.b16 %v812
        %v887 = vunpack.c.h.b16 %v812
        %v888 = vunpack.c.l.b16 %v813
        %v889 = vunpack.c.l.b16 %v814
        %v890 = vunpack.c.h.b16 %v814
        %v891 = vunpack.c.l.b16 %v815
        %v892 = vunpack.c.l.b16 %v816
        %v893 = vunpack.c.h.b16 %v816
        %v894 = vunpack.c.l.b16 %v817
        %v895 = vunpack.c.l.b16 %v818
        %v896 = vunpack.c.h.b16 %v818
        %v897 = vunpack.c.l.b16 %v819
        %v898 = vunpack.c.l.b16 %v820
        %v899 = vunpack.c.h.b16 %v820
        %v900 = vunpack.c.l.b16 %v821
        %v901 = vunpack.c.l.b16 %v822
        %v902 = vunpack.c.h.b16 %v822
        %v903 = vunpack.c.l.b16 %v823
        %v904 = vpack.c.b16 %v859, %v856
        %v905 = vpack.c.b16 %v860, %v857
        %v906 = vpack.c.b16 %v861, %v858
        %v907 = vpack.c.b16 %v865, %v862
        %v908 = vpack.c.b16 %v866, %v863
        %v909 = vpack.c.b16 %v867, %v864
        %v910 = vpack.c.b16 %v871, %v868
        %v911 = vpack.c.b16 %v872, %v869
        %v912 = vpack.c.b16 %v873, %v870
        %v913 = vpack.c.b16 %v877, %v874
        %v914 = vpack.c.b16 %v878, %v875
        %v915 = vpack.c.b16 %v879, %v876
        %v916 = vpack.c.b16 %v883, %v880
        %v917 = vpack.c.b16 %v884, %v881
        %v918 = vpack.c.b16 %v885, %v882
        %v919 = vpack.c.b16 %v889, %v886
        %v920 = vpack.c.b16 %v890, %v887
        %v921 = vpack.c.b16 %v891, %v888
        %v922 = vpack.c.b16 %v895, %v892
        %v923 = vpack.c.b16 %v896, %v893
        %v924 = vpack.c.b16 %v897, %v894
        %v925 = vpack.c.b16 %v901, %v898
        %v926 = vpack.c.b16 %v902, %v899
        %v927 = vpack.c.b16 %v903, %v900
        %952 = vmatprep.subr.bf16.mxu0 %v926
        %953 = vmatpush1.bf16.msra.mxu0 %v925
        %954 = vmatprep.subr.bf16.mxu0 %v923
        %955 = vmatpush1.bf16.msra.mxu0 %v922
        %956 = vmatprep.subr.bf16.mxu0 %v920
        %957 = vmatpush1.bf16.msra.mxu0 %v919
        %958 = vmatprep.subr.bf16.mxu0 %v917
        %959 = vmatpush1.bf16.msra.mxu0 %v916
        %960 = vmatprep.subr.bf16.mxu0 %v914
        %961 = vmatpush1.bf16.msra.mxu0 %v913
        %962 = vmatprep.subr.bf16.mxu0 %v911
        %963 = vmatpush1.bf16.msra.mxu0 %v910
        %964 = vmatprep.subr.bf16.mxu0 %v908
        %965 = vmatpush1.bf16.msra.mxu0 %v907
        %966 = vmatprep.subr.bf16.mxu0 %v905
        %967 = vmatpush1.bf16.msra.mxu0 %v904
        %968 = vmatprep.subr.bf16.mxu0 0
        %969 = vmatpush2.bf16.msra.mxu0 0
        %970 = vmatprep.subr.bf16.mxu0 0
        %971 = vmatpush2.bf16.msra.mxu0 0
        %972 = vmatprep.subr.bf16.mxu0 0
        %973 = vmatpush2.bf16.msra.mxu0 0
        %974 = vmatprep.subr.bf16.mxu0 0
        %975 = vmatpush2.bf16.msra.mxu0 0
        %976 = vmatprep.subr.bf16.mxu0 0
        %977 = vmatpush2.bf16.msra.mxu0 0
        %978 = vmatprep.subr.bf16.mxu0 0
        %979 = vmatpush2.bf16.msra.mxu0 0
        %980 = vmatprep.subr.bf16.mxu0 0
        %981 = vmatpush2.bf16.msra.mxu0 0
        %982 = vmatprep.subr.bf16.mxu0 0
        %983 = vmatpush2.bf16.msra.mxu0 0
        %984 = vmatprep.mubr.bf16.mxu0 0
        %985 = vmatmul.mubr.bf16.gmra.mxu0 %v784
        %v986 = vpop.f32.mrf.mxu0
        %v987 = vadd.f32 0.0, %v986
        %v988 = vpop.f32.mrf.mxu0
        %v989 = vadd.f32 0.0, %v988
        %v990 = vpop.f32.mrf.mxu0
        %v991 = vadd.f32 0.0, %v990
        %v992 = vpop.f32.mrf.mxu0
        %v993 = vadd.f32 0.0, %v992
        %994 = vmatprep.mubr.bf16.mxu0 0
        %995 = vmatmul.mubr.bf16.gmra.mxu0 %v785
        %v996 = vpop.f32.mrf.mxu0
        %v997 = vadd.f32 0.0, %v996
        %v998 = vpop.f32.mrf.mxu0
        %v999 = vadd.f32 0.0, %v998
        %v1000 = vpop.f32.mrf.mxu0
        %v1001 = vadd.f32 0.0, %v1000
        %v1002 = vpop.f32.mrf.mxu0
        %v1003 = vadd.f32 0.0, %v1002
        %1004 = vmatprep.mubr.bf16.mxu0 0
        %1005 = vmatmul.mubr.bf16.gmra.mxu0 %v786
        %v1006 = vpop.f32.mrf.mxu0
        %v1007 = vadd.f32 0.0, %v1006
        %v1008 = vpop.f32.mrf.mxu0
        %v1009 = vadd.f32 0.0, %v1008
        %v1010 = vpop.f32.mrf.mxu0
        %v1011 = vadd.f32 0.0, %v1010
        %v1012 = vpop.f32.mrf.mxu0
        %v1013 = vadd.f32 0.0, %v1012
        %1014 = vmatprep.mubr.bf16.mxu0 0
        %1015 = vmatmul.mubr.bf16.gmra.mxu0 %v787
        %v1016 = vpop.f32.mrf.mxu0
        %v1017 = vadd.f32 0.0, %v1016
        %v1018 = vpop.f32.mrf.mxu0
        %v1019 = vadd.f32 0.0, %v1018
        %v1020 = vpop.f32.mrf.mxu0
        %v1021 = vadd.f32 0.0, %v1020
        %v1022 = vpop.f32.mrf.mxu0
        %v1023 = vadd.f32 0.0, %v1022
        %1024 = vmatprep.mubr.bf16.mxu0 0
        %1025 = vmatmul.mubr.bf16.gmra.mxu0 %v788
        %v1026 = vpop.f32.mrf.mxu0
        %v1027 = vadd.f32 0.0, %v1026
        %v1028 = vpop.f32.mrf.mxu0
        %v1029 = vadd.f32 0.0, %v1028
        %v1030 = vpop.f32.mrf.mxu0
        %v1031 = vadd.f32 0.0, %v1030
        %v1032 = vpop.f32.mrf.mxu0
        %v1033 = vadd.f32 0.0, %v1032
        %1034 = vmatprep.mubr.bf16.mxu0 0
        %1035 = vmatmul.mubr.bf16.gmra.mxu0 %v789
        %v1036 = vpop.f32.mrf.mxu0
        %v1037 = vadd.f32 0.0, %v1036
        %v1038 = vpop.f32.mrf.mxu0
        %v1039 = vadd.f32 0.0, %v1038
        %v1040 = vpop.f32.mrf.mxu0
        %v1041 = vadd.f32 0.0, %v1040
        %v1042 = vpop.f32.mrf.mxu0
        %v1043 = vadd.f32 0.0, %v1042
        %1044 = vmatprep.mubr.bf16.mxu0 0
        %1045 = vmatmul.mubr.bf16.gmra.mxu0 %v790
        %v1046 = vpop.f32.mrf.mxu0
        %v1047 = vadd.f32 0.0, %v1046
        %v1048 = vpop.f32.mrf.mxu0
        %v1049 = vadd.f32 0.0, %v1048
        %v1050 = vpop.f32.mrf.mxu0
        %v1051 = vadd.f32 0.0, %v1050
        %v1052 = vpop.f32.mrf.mxu0
        %v1053 = vadd.f32 0.0, %v1052
        %1054 = vmatprep.mubr.bf16.mxu0 0
        %1055 = vmatmul.mubr.bf16.gmra.mxu0 %v791
        %v1056 = vpop.f32.mrf.mxu0
        %v1057 = vadd.f32 0.0, %v1056
        %v1058 = vpop.f32.mrf.mxu0
        %v1059 = vadd.f32 0.0, %v1058
        %v1060 = vpop.f32.mrf.mxu0
        %v1061 = vadd.f32 0.0, %v1060
        %v1062 = vpop.f32.mrf.mxu0
        %v1063 = vadd.f32 0.0, %v1062
        %1064 = vdwg.mxu0
        %1065 = vmatprep.subr.bf16.mxu0 0
        %1066 = vmatpush1.bf16.msra.mxu0 %v927
        %1067 = vmatprep.subr.bf16.mxu0 0
        %1068 = vmatpush1.bf16.msra.mxu0 %v924
        %1069 = vmatprep.subr.bf16.mxu0 0
        %1070 = vmatpush1.bf16.msra.mxu0 %v921
        %1071 = vmatprep.subr.bf16.mxu0 0
        %1072 = vmatpush1.bf16.msra.mxu0 %v918
        %1073 = vmatprep.subr.bf16.mxu0 0
        %1074 = vmatpush1.bf16.msra.mxu0 %v915
        %1075 = vmatprep.subr.bf16.mxu0 0
        %1076 = vmatpush1.bf16.msra.mxu0 %v912
        %1077 = vmatprep.subr.bf16.mxu0 0
        %1078 = vmatpush1.bf16.msra.mxu0 %v909
        %1079 = vmatprep.subr.bf16.mxu0 0
        %1080 = vmatpush1.bf16.msra.mxu0 %v906
        %1081 = vmatprep.subr.bf16.mxu0 0
        %1082 = vmatpush2.bf16.msra.mxu0 0
        %1083 = vmatprep.subr.bf16.mxu0 0
        %1084 = vmatpush2.bf16.msra.mxu0 0
        %1085 = vmatprep.subr.bf16.mxu0 0
        %1086 = vmatpush2.bf16.msra.mxu0 0
        %1087 = vmatprep.subr.bf16.mxu0 0
        %1088 = vmatpush2.bf16.msra.mxu0 0
        %1089 = vmatprep.subr.bf16.mxu0 0
        %1090 = vmatpush2.bf16.msra.mxu0 0
        %1091 = vmatprep.subr.bf16.mxu0 0
        %1092 = vmatpush2.bf16.msra.mxu0 0
        %1093 = vmatprep.subr.bf16.mxu0 0
        %1094 = vmatpush2.bf16.msra.mxu0 0
        %1095 = vmatprep.subr.bf16.mxu0 0
        %1096 = vmatpush2.bf16.msra.mxu0 0
        %1097 = vmatprep.mubr.bf16.mxu0 0
        %1098 = vmatmul.mubr.bf16.gmra.mxu0 %v784
        %v1099 = vpop.f32.mrf.mxu0
        %v1100 = vadd.f32 0.0, %v1099
        %v1101 = vpop.f32.mrf.mxu0
        %v1102 = vpop.f32.mrf.mxu0
        %v1103 = vadd.f32 0.0, %v1102
        %v1104 = vpop.f32.mrf.mxu0
        %1105 = vmatprep.mubr.bf16.mxu0 0
        %1106 = vmatmul.mubr.bf16.gmra.mxu0 %v785
        %v1107 = vpop.f32.mrf.mxu0
        %v1108 = vadd.f32 0.0, %v1107
        %v1109 = vpop.f32.mrf.mxu0
        %v1110 = vpop.f32.mrf.mxu0
        %v1111 = vadd.f32 0.0, %v1110
        %v1112 = vpop.f32.mrf.mxu0
        %1113 = vmatprep.mubr.bf16.mxu0 0
        %1114 = vmatmul.mubr.bf16.gmra.mxu0 %v786
        %v1115 = vpop.f32.mrf.mxu0
        %v1116 = vadd.f32 0.0, %v1115
        %v1117 = vpop.f32.mrf.mxu0
        %v1118 = vpop.f32.mrf.mxu0
        %v1119 = vadd.f32 0.0, %v1118
        %v1120 = vpop.f32.mrf.mxu0
        %1121 = vmatprep.mubr.bf16.mxu0 0
        %1122 = vmatmul.mubr.bf16.gmra.mxu0 %v787
        %v1123 = vpop.f32.mrf.mxu0
        %v1124 = vadd.f32 0.0, %v1123
        %v1125 = vpop.f32.mrf.mxu0
        %v1126 = vpop.f32.mrf.mxu0
        %v1127 = vadd.f32 0.0, %v1126
        %v1128 = vpop.f32.mrf.mxu0
        %1129 = vmatprep.mubr.bf16.mxu0 0
        %1130 = vmatmul.mubr.bf16.gmra.mxu0 %v788
        %v1131 = vpop.f32.mrf.mxu0
        %v1132 = vadd.f32 0.0, %v1131
        %v1133 = vpop.f32.mrf.mxu0
        %v1134 = vpop.f32.mrf.mxu0
        %v1135 = vadd.f32 0.0, %v1134
        %v1136 = vpop.f32.mrf.mxu0
        %1137 = vmatprep.mubr.bf16.mxu0 0
        %1138 = vmatmul.mubr.bf16.gmra.mxu0 %v789
        %v1139 = vpop.f32.mrf.mxu0
        %v1140 = vadd.f32 0.0, %v1139
        %v1141 = vpop.f32.mrf.mxu0
        %v1142 = vpop.f32.mrf.mxu0
        %v1143 = vadd.f32 0.0, %v1142
        %v1144 = vpop.f32.mrf.mxu0
        %1145 = vmatprep.mubr.bf16.mxu0 0
        %1146 = vmatmul.mubr.bf16.gmra.mxu0 %v790
        %v1147 = vpop.f32.mrf.mxu0
        %v1148 = vadd.f32 0.0, %v1147
        %v1149 = vpop.f32.mrf.mxu0
        %v1150 = vpop.f32.mrf.mxu0
        %v1151 = vadd.f32 0.0, %v1150
        %v1152 = vpop.f32.mrf.mxu0
        %1153 = vmatprep.mubr.bf16.mxu0 0
        %1154 = vmatmul.mubr.bf16.gmra.mxu0 %v791
        %v1155 = vpop.f32.mrf.mxu0
        %v1156 = vadd.f32 0.0, %v1155
        %v1157 = vpop.f32.mrf.mxu0
        %v1158 = vpop.f32.mrf.mxu0
        %v1159 = vadd.f32 0.0, %v1158
        %v1160 = vpop.f32.mrf.mxu0
        %1161 = vdwg.mxu0
        %v1162 = vld [vmem:[#allocation13] sm:$0xff]
        %v1163 = vld [vmem:[#allocation13 + $0x8] sm:$0xff]
        %v1164 = vld [vmem:[#allocation13 + $0x10] sm:$0xff]
        %v1165 = vld [vmem:[#allocation13 + $0x18] sm:$0xff]
        %v1166 = vld [vmem:[#allocation13 + $0x20] sm:$0xff]
        %v1167 = vld [vmem:[#allocation13 + $0x28] sm:$0xff]
        %v1168 = vld [vmem:[#allocation13 + $0x30] sm:$0xff]
        %v1169 = vld [vmem:[#allocation13 + $0x38] sm:$0xff]
        %v1170 = vld [vmem:[#allocation13 + $0x40] sm:$0xff]
        %v1171 = vld [vmem:[#allocation13 + $0x48] sm:$0xff]
        %v1172 = vld [vmem:[#allocation13 + $0x50] sm:$0xff]
        %v1173 = vld [vmem:[#allocation13 + $0x58] sm:$0xff]
        %v1174 = vld [vmem:[#allocation13 + $0x60] sm:$0xff]
        %v1175 = vld [vmem:[#allocation13 + $0x68] sm:$0xff]
        %v1176 = vld [vmem:[#allocation13 + $0x70] sm:$0xff]
        %v1177 = vld [vmem:[#allocation13 + $0x78] sm:$0xff]
        %v1178 = vpack.c.bf16 %v991, %v987
        %v1179 = vpack.c.bf16 %v1001, %v997
        %v1180 = vpack.c.bf16 %v1011, %v1007
        %v1181 = vpack.c.bf16 %v1021, %v1017
        %v1182 = vpack.c.bf16 %v1031, %v1027
        %v1183 = vpack.c.bf16 %v1041, %v1037
        %v1184 = vpack.c.bf16 %v1051, %v1047
        %v1185 = vpack.c.bf16 %v1061, %v1057
        %v1186 = vpack.c.bf16 %v993, %v989
        %v1187 = vpack.c.bf16 %v1003, %v999
        %v1188 = vpack.c.bf16 %v1013, %v1009
        %v1189 = vpack.c.bf16 %v1023, %v1019
        %v1190 = vpack.c.bf16 %v1033, %v1029
        %v1191 = vpack.c.bf16 %v1043, %v1039
        %v1192 = vpack.c.bf16 %v1053, %v1049
        %v1193 = vpack.c.bf16 %v1063, %v1059
        %v1194 = vpack.c.bf16 %v1103, %v1100
        %v1195 = vpack.c.bf16 %v1111, %v1108
        %v1196 = vpack.c.bf16 %v1119, %v1116
        %v1197 = vpack.c.bf16 %v1127, %v1124
        %v1198 = vpack.c.bf16 %v1135, %v1132
        %v1199 = vpack.c.bf16 %v1143, %v1140
        %v1200 = vpack.c.bf16 %v1151, %v1148
        %v1201 = vpack.c.bf16 %v1159, %v1156
        %vm1202 = vcmask 261120
        %v1204 = vsel %vm1202, %v1186, 0
        %v1207 = vsel %vm1202, %v1187, 0
        %v1210 = vsel %vm1202, %v1188, 0
        %v1213 = vsel %vm1202, %v1189, 0
        %v1216 = vsel %vm1202, %v1190, 0
        %v1219 = vsel %vm1202, %v1191, 0
        %v1222 = vsel %vm1202, %v1192, 0
        %v1225 = vsel %vm1202, %v1193, 0
        %v1228 = vsel %vm1202, %v1178, 0
        %v1231 = vsel %vm1202, %v1179, 0
        %v1234 = vsel %vm1202, %v1180, 0
        %v1237 = vsel %vm1202, %v1181, 0
        %v1240 = vsel %vm1202, %v1182, 0
        %v1243 = vsel %vm1202, %v1183, 0
        %v1246 = vsel %vm1202, %v1184, 0
        %v1249 = vsel %vm1202, %v1185, 0
        %1251 = vmatprep.subr.bf16.mxu0 0
        %1252 = vmatpush1.bf16.xpose.msra.mxu0 %v1249
        %1253 = vmatprep.subr.bf16.mxu0 0
        %1254 = vmatpush1.bf16.xpose.msra.mxu0 %v1246
        %1255 = vmatprep.subr.bf16.mxu0 0
        %1256 = vmatpush1.bf16.xpose.msra.mxu0 %v1243
        %1257 = vmatprep.subr.bf16.mxu0 0
        %1258 = vmatpush1.bf16.xpose.msra.mxu0 %v1240
        %1259 = vmatprep.subr.bf16.mxu0 0
        %1260 = vmatpush1.bf16.xpose.msra.mxu0 %v1237
        %1261 = vmatprep.subr.bf16.mxu0 0
        %1262 = vmatpush1.bf16.xpose.msra.mxu0 %v1234
        %1263 = vmatprep.subr.bf16.mxu0 0
        %1264 = vmatpush1.bf16.xpose.msra.mxu0 %v1231
        %1265 = vmatprep.subr.bf16.mxu0 0
        %1266 = vmatpush1.bf16.xpose.msra.mxu0 %v1228
        %1267 = vmatprep.subr.bf16.mxu0 0
        %1268 = vmatpush2.bf16.xpose.msra.mxu0 0
        %1269 = vmatprep.subr.bf16.mxu0 0
        %1270 = vmatpush2.bf16.xpose.msra.mxu0 0
        %1271 = vmatprep.subr.bf16.mxu0 0
        %1272 = vmatpush2.bf16.xpose.msra.mxu0 0
        %1273 = vmatprep.subr.bf16.mxu0 0
        %1274 = vmatpush2.bf16.xpose.msra.mxu0 0
        %1275 = vmatprep.subr.bf16.mxu0 0
        %1276 = vmatpush2.bf16.xpose.msra.mxu0 0
        %1277 = vmatprep.subr.bf16.mxu0 0
        %1278 = vmatpush2.bf16.xpose.msra.mxu0 0
        %1279 = vmatprep.subr.bf16.mxu0 0
        %1280 = vmatpush2.bf16.xpose.msra.mxu0 0
        %1281 = vmatprep.subr.bf16.mxu0 0
        %1282 = vmatpush2.bf16.xpose.msra.mxu0 0
        %1283 = vmatprep.mubr.bf16.mxu0 0
        %1284 = vmatmul.mubr.bf16.gmra.mxu0 %v1204
        %v1285 = vpop.f32.mrf.mxu0
        %v1286 = vadd.f32 %v1162, %v1285
        %v1287 = vpop.f32.mrf.mxu0
        %v1288 = vpop.f32.mrf.mxu0
        %v1289 = vadd.f32 %v1163, %v1288
        %v1290 = vpop.f32.mrf.mxu0
        %1291 = vmatprep.mubr.bf16.mxu0 0
        %1292 = vmatmul.mubr.bf16.gmra.mxu0 %v1207
        %v1293 = vpop.f32.mrf.mxu0
        %v1294 = vadd.f32 %v1164, %v1293
        %v1295 = vpop.f32.mrf.mxu0
        %v1296 = vpop.f32.mrf.mxu0
        %v1297 = vadd.f32 %v1165, %v1296
        %v1298 = vpop.f32.mrf.mxu0
        %1299 = vmatprep.mubr.bf16.mxu0 0
        %1300 = vmatmul.mubr.bf16.gmra.mxu0 %v1210
        %v1301 = vpop.f32.mrf.mxu0
        %v1302 = vadd.f32 %v1166, %v1301
        %v1303 = vpop.f32.mrf.mxu0
        %v1304 = vpop.f32.mrf.mxu0
        %v1305 = vadd.f32 %v1167, %v1304
        %v1306 = vpop.f32.mrf.mxu0
        %1307 = vmatprep.mubr.bf16.mxu0 0
        %1308 = vmatmul.mubr.bf16.gmra.mxu0 %v1213
        %v1309 = vpop.f32.mrf.mxu0
        %v1310 = vadd.f32 %v1168, %v1309
        %v1311 = vpop.f32.mrf.mxu0
        %v1312 = vpop.f32.mrf.mxu0
        %v1313 = vadd.f32 %v1169, %v1312
        %v1314 = vpop.f32.mrf.mxu0
        %1315 = vmatprep.mubr.bf16.mxu0 0
        %1316 = vmatmul.mubr.bf16.gmra.mxu0 %v1216
        %v1317 = vpop.f32.mrf.mxu0
        %v1318 = vadd.f32 %v1170, %v1317
        %v1319 = vpop.f32.mrf.mxu0
        %v1320 = vpop.f32.mrf.mxu0
        %v1321 = vadd.f32 %v1171, %v1320
        %v1322 = vpop.f32.mrf.mxu0
        %1323 = vmatprep.mubr.bf16.mxu0 0
        %1324 = vmatmul.mubr.bf16.gmra.mxu0 %v1219
        %v1325 = vpop.f32.mrf.mxu0
        %v1326 = vadd.f32 %v1172, %v1325
        %v1327 = vpop.f32.mrf.mxu0
        %v1328 = vpop.f32.mrf.mxu0
        %v1329 = vadd.f32 %v1173, %v1328
        %v1330 = vpop.f32.mrf.mxu0
        %1331 = vmatprep.mubr.bf16.mxu0 0
        %1332 = vmatmul.mubr.bf16.gmra.mxu0 %v1222
        %v1333 = vpop.f32.mrf.mxu0
        %v1334 = vadd.f32 %v1174, %v1333
        %v1335 = vpop.f32.mrf.mxu0
        %v1336 = vpop.f32.mrf.mxu0
        %v1337 = vadd.f32 %v1175, %v1336
        %v1338 = vpop.f32.mrf.mxu0
        %1339 = vmatprep.mubr.bf16.mxu0 0
        %1340 = vmatmul.mubr.bf16.gmra.mxu0 %v1225
        %v1341 = vpop.f32.mrf.mxu0
        %v1342 = vadd.f32 %v1176, %v1341
        %v1343 = vpop.f32.mrf.mxu0
        %v1344 = vpop.f32.mrf.mxu0
        %v1345 = vadd.f32 %v1177, %v1344
        %v1346 = vpop.f32.mrf.mxu0
        %1347 = vdwg.mxu0
        %1348 = vmax.xlane.f32.xlu0 %v1286
        %v1349 = vpop.xlane.xlu0 %1348
        %1350 = vmax.xlane.f32.xlu0 %v1289
        %v1351 = vpop.xlane.xlu0 %1350
        %1352 = vmax.xlane.f32.xlu0 %v1294
        %v1353 = vpop.xlane.xlu0 %1352
        %1354 = vmax.xlane.f32.xlu0 %v1297
        %v1355 = vpop.xlane.xlu0 %1354
        %1356 = vmax.xlane.f32.xlu0 %v1302
        %v1357 = vpop.xlane.xlu0 %1356
        %1358 = vmax.xlane.f32.xlu0 %v1305
        %v1359 = vpop.xlane.xlu0 %1358
        %1360 = vmax.xlane.f32.xlu0 %v1310
        %v1361 = vpop.xlane.xlu0 %1360
        %1362 = vmax.xlane.f32.xlu0 %v1313
        %v1363 = vpop.xlane.xlu0 %1362
        %1364 = vmax.xlane.f32.xlu0 %v1318
        %v1365 = vpop.xlane.xlu0 %1364
        %1366 = vmax.xlane.f32.xlu0 %v1321
        %v1367 = vpop.xlane.xlu0 %1366
        %1368 = vmax.xlane.f32.xlu0 %v1326
        %v1369 = vpop.xlane.xlu0 %1368
        %1370 = vmax.xlane.f32.xlu0 %v1329
        %v1371 = vpop.xlane.xlu0 %1370
        %1372 = vmax.xlane.f32.xlu0 %v1334
        %v1373 = vpop.xlane.xlu0 %1372
        %1374 = vmax.xlane.f32.xlu0 %v1337
        %v1375 = vpop.xlane.xlu0 %1374
        %1376 = vmax.xlane.f32.xlu0 %v1342
        %v1377 = vpop.xlane.xlu0 %1376
        %1378 = vmax.xlane.f32.xlu0 %v1345
        %v1379 = vpop.xlane.xlu0 %1378
        %v1380 = vsub.f32 %v1286, %v1349
        %v1381 = vsub.f32 %v1289, %v1351
        %v1382 = vsub.f32 %v1294, %v1353
        %v1383 = vsub.f32 %v1297, %v1355
        %v1384 = vsub.f32 %v1302, %v1357
        %v1385 = vsub.f32 %v1305, %v1359
        %v1386 = vsub.f32 %v1310, %v1361
        %v1387 = vsub.f32 %v1313, %v1363
        %v1388 = vsub.f32 %v1318, %v1365
        %v1389 = vsub.f32 %v1321, %v1367
        %v1390 = vsub.f32 %v1326, %v1369
        %v1391 = vsub.f32 %v1329, %v1371
        %v1392 = vsub.f32 %v1334, %v1373
        %v1393 = vsub.f32 %v1337, %v1375
        %v1394 = vsub.f32 %v1342, %v1377
        %v1395 = vsub.f32 %v1345, %v1379
        %v1396 = vmul.f32 %v1380, 1.442695
        %v1397 = vpow.pop %v1396
        %v1398 = vmul.f32 %v1381, 1.442695
        %v1399 = vpow.pop %v1398
        %v1400 = vmul.f32 %v1382, 1.442695
        %v1401 = vpow.pop %v1400
        %v1402 = vmul.f32 %v1383, 1.442695
        %v1403 = vpow.pop %v1402
        %v1404 = vmul.f32 %v1384, 1.442695
        %v1405 = vpow.pop %v1404
        %v1406 = vmul.f32 %v1385, 1.442695
        %v1407 = vpow.pop %v1406
        %v1408 = vmul.f32 %v1386, 1.442695
        %v1409 = vpow.pop %v1408
        %v1410 = vmul.f32 %v1387, 1.442695
        %v1411 = vpow.pop %v1410
        %v1412 = vmul.f32 %v1388, 1.442695
        %v1413 = vpow.pop %v1412
        %v1414 = vmul.f32 %v1389, 1.442695
        %v1415 = vpow.pop %v1414
        %v1416 = vmul.f32 %v1390, 1.442695
        %v1417 = vpow.pop %v1416
        %v1418 = vmul.f32 %v1391, 1.442695
        %v1419 = vpow.pop %v1418
        %v1420 = vmul.f32 %v1392, 1.442695
        %v1421 = vpow.pop %v1420
        %v1422 = vmul.f32 %v1393, 1.442695
        %v1423 = vpow.pop %v1422
        %v1424 = vmul.f32 %v1394, 1.442695
        %v1425 = vpow.pop %v1424
        %v1426 = vmul.f32 %v1395, 1.442695
        %v1427 = vpow.pop %v1426
        %1428 = vadd.xlane.f32.xlu0 %v1397
        %v1429 = vpop.xlane.xlu0 %1428
        %1430 = vadd.xlane.f32.xlu0 %v1399
        %v1431 = vpop.xlane.xlu0 %1430
        %1432 = vadd.xlane.f32.xlu0 %v1401
        %v1433 = vpop.xlane.xlu0 %1432
        %1434 = vadd.xlane.f32.xlu0 %v1403
        %v1435 = vpop.xlane.xlu0 %1434
        %1436 = vadd.xlane.f32.xlu0 %v1405
        %v1437 = vpop.xlane.xlu0 %1436
        %1438 = vadd.xlane.f32.xlu0 %v1407
        %v1439 = vpop.xlane.xlu0 %1438
        %1440 = vadd.xlane.f32.xlu0 %v1409
        %v1441 = vpop.xlane.xlu0 %1440
        %1442 = vadd.xlane.f32.xlu0 %v1411
        %v1443 = vpop.xlane.xlu0 %1442
        %1444 = vadd.xlane.f32.xlu0 %v1413
        %v1445 = vpop.xlane.xlu0 %1444
        %1446 = vadd.xlane.f32.xlu0 %v1415
        %v1447 = vpop.xlane.xlu0 %1446
        %1448 = vadd.xlane.f32.xlu0 %v1417
        %v1449 = vpop.xlane.xlu0 %1448
        %1450 = vadd.xlane.f32.xlu0 %v1419
        %v1451 = vpop.xlane.xlu0 %1450
        %1452 = vadd.xlane.f32.xlu0 %v1421
        %v1453 = vpop.xlane.xlu0 %1452
        %1454 = vadd.xlane.f32.xlu0 %v1423
        %v1455 = vpop.xlane.xlu0 %1454
        %1456 = vadd.xlane.f32.xlu0 %v1425
        %v1457 = vpop.xlane.xlu0 %1456
        %1458 = vadd.xlane.f32.xlu0 %v1427
        %v1459 = vpop.xlane.xlu0 %1458
        %v1460 = vpack.c.bf16 %v1399, %v1397
        %v1461 = vpack.c.bf16 %v1403, %v1401
        %v1462 = vpack.c.bf16 %v1407, %v1405
        %v1463 = vpack.c.bf16 %v1411, %v1409
        %v1464 = vpack.c.bf16 %v1415, %v1413
        %v1465 = vpack.c.bf16 %v1419, %v1417
        %v1466 = vpack.c.bf16 %v1423, %v1421
        %v1467 = vpack.c.bf16 %v1427, %v1425
        %1468 = vmatprep.subr.bf16.mxu0 0
        %1469 = vmatpush1.bf16.msra.mxu0 %v1201
        %1470 = vmatprep.subr.bf16.mxu0 0
        %1471 = vmatpush1.bf16.msra.mxu0 %v1200
        %1472 = vmatprep.subr.bf16.mxu0 0
        %1473 = vmatpush1.bf16.msra.mxu0 %v1199
        %1474 = vmatprep.subr.bf16.mxu0 0
        %1475 = vmatpush1.bf16.msra.mxu0 %v1198
        %1476 = vmatprep.subr.bf16.mxu0 0
        %1477 = vmatpush1.bf16.msra.mxu0 %v1197
        %1478 = vmatprep.subr.bf16.mxu0 0
        %1479 = vmatpush1.bf16.msra.mxu0 %v1196
        %1480 = vmatprep.subr.bf16.mxu0 0
        %1481 = vmatpush1.bf16.msra.mxu0 %v1195
        %1482 = vmatprep.subr.bf16.mxu0 0
        %1483 = vmatpush1.bf16.msra.mxu0 %v1194
        %1484 = vmatprep.subr.bf16.mxu0 0
        %1485 = vmatpush2.bf16.msra.mxu0 0
        %1486 = vmatprep.subr.bf16.mxu0 0
        %1487 = vmatpush2.bf16.msra.mxu0 0
        %1488 = vmatprep.subr.bf16.mxu0 0
        %1489 = vmatpush2.bf16.msra.mxu0 0
        %1490 = vmatprep.subr.bf16.mxu0 0
        %1491 = vmatpush2.bf16.msra.mxu0 0
        %1492 = vmatprep.subr.bf16.mxu0 0
        %1493 = vmatpush2.bf16.msra.mxu0 0
        %1494 = vmatprep.subr.bf16.mxu0 0
        %1495 = vmatpush2.bf16.msra.mxu0 0
        %1496 = vmatprep.subr.bf16.mxu0 0
        %1497 = vmatpush2.bf16.msra.mxu0 0
        %1498 = vmatprep.subr.bf16.mxu0 0
        %1499 = vmatpush2.bf16.msra.mxu0 0
        %1500 = vmatprep.mubr.bf16.mxu0 0
        %1501 = vmatmul.mubr.bf16.gmra.mxu0 %v1460
        %v1502 = vpop.f32.mrf.mxu0
        %v1503 = vadd.f32 0.0, %v1502
        %v1504 = vpop.f32.mrf.mxu0
        %v1505 = vpop.f32.mrf.mxu0
        %v1506 = vadd.f32 0.0, %v1505
        %v1507 = vpop.f32.mrf.mxu0
        %1508 = vmatprep.mubr.bf16.mxu0 0
        %1509 = vmatmul.mubr.bf16.gmra.mxu0 %v1461
        %v1510 = vpop.f32.mrf.mxu0
        %v1511 = vadd.f32 0.0, %v1510
        %v1512 = vpop.f32.mrf.mxu0
        %v1513 = vpop.f32.mrf.mxu0
        %v1514 = vadd.f32 0.0, %v1513
        %v1515 = vpop.f32.mrf.mxu0
        %1516 = vmatprep.mubr.bf16.mxu0 0
        %1517 = vmatmul.mubr.bf16.gmra.mxu0 %v1462
        %v1518 = vpop.f32.mrf.mxu0
        %v1519 = vadd.f32 0.0, %v1518
        %v1520 = vpop.f32.mrf.mxu0
        %v1521 = vpop.f32.mrf.mxu0
        %v1522 = vadd.f32 0.0, %v1521
        %v1523 = vpop.f32.mrf.mxu0
        %1524 = vmatprep.mubr.bf16.mxu0 0
        %1525 = vmatmul.mubr.bf16.gmra.mxu0 %v1463
        %v1526 = vpop.f32.mrf.mxu0
        %v1527 = vadd.f32 0.0, %v1526
        %v1528 = vpop.f32.mrf.mxu0
        %v1529 = vpop.f32.mrf.mxu0
        %v1530 = vadd.f32 0.0, %v1529
        %v1531 = vpop.f32.mrf.mxu0
        %1532 = vmatprep.mubr.bf16.mxu0 0
        %1533 = vmatmul.mubr.bf16.gmra.mxu0 %v1464
        %v1534 = vpop.f32.mrf.mxu0
        %v1535 = vadd.f32 0.0, %v1534
        %v1536 = vpop.f32.mrf.mxu0
        %v1537 = vpop.f32.mrf.mxu0
        %v1538 = vadd.f32 0.0, %v1537
        %v1539 = vpop.f32.mrf.mxu0
        %1540 = vmatprep.mubr.bf16.mxu0 0
        %1541 = vmatmul.mubr.bf16.gmra.mxu0 %v1465
        %v1542 = vpop.f32.mrf.mxu0
        %v1543 = vadd.f32 0.0, %v1542
        %v1544 = vpop.f32.mrf.mxu0
        %v1545 = vpop.f32.mrf.mxu0
        %v1546 = vadd.f32 0.0, %v1545
        %v1547 = vpop.f32.mrf.mxu0
        %1548 = vmatprep.mubr.bf16.mxu0 0
        %1549 = vmatmul.mubr.bf16.gmra.mxu0 %v1466
        %v1550 = vpop.f32.mrf.mxu0
        %v1551 = vadd.f32 0.0, %v1550
        %v1552 = vpop.f32.mrf.mxu0
        %v1553 = vpop.f32.mrf.mxu0
        %v1554 = vadd.f32 0.0, %v1553
        %v1555 = vpop.f32.mrf.mxu0
        %1556 = vmatprep.mubr.bf16.mxu0 0
        %1557 = vmatmul.mubr.bf16.gmra.mxu0 %v1467
        %v1558 = vpop.f32.mrf.mxu0
        %v1559 = vadd.f32 0.0, %v1558
        %v1560 = vpop.f32.mrf.mxu0
        %v1561 = vpop.f32.mrf.mxu0
        %v1562 = vadd.f32 0.0, %v1561
        %v1563 = vpop.f32.mrf.mxu0
        %1564 = vdwg.mxu0
        %v1565 = vrcp.pop %v1429
        %v1566 = vrcp.pop %v1431
        %v1567 = vrcp.pop %v1433
        %v1568 = vrcp.pop %v1435
        %v1569 = vrcp.pop %v1437
        %v1570 = vrcp.pop %v1439
        %v1571 = vrcp.pop %v1441
        %v1572 = vrcp.pop %v1443
        %v1573 = vrcp.pop %v1445
        %v1574 = vrcp.pop %v1447
        %v1575 = vrcp.pop %v1449
        %v1576 = vrcp.pop %v1451
        %v1577 = vrcp.pop %v1453
        %v1578 = vrcp.pop %v1455
        %v1579 = vrcp.pop %v1457
        %v1580 = vrcp.pop %v1459
        %v1581 = vmul.f32 %v1503, %v1565
        %v1582 = vmul.f32 %v1506, %v1566
        %v1583 = vmul.f32 %v1511, %v1567
        %v1584 = vmul.f32 %v1514, %v1568
        %v1585 = vmul.f32 %v1519, %v1569
        %v1586 = vmul.f32 %v1522, %v1570
        %v1587 = vmul.f32 %v1527, %v1571
        %v1588 = vmul.f32 %v1530, %v1572
        %v1589 = vmul.f32 %v1535, %v1573
        %v1590 = vmul.f32 %v1538, %v1574
        %v1591 = vmul.f32 %v1543, %v1575
        %v1592 = vmul.f32 %v1546, %v1576
        %v1593 = vmul.f32 %v1551, %v1577
        %v1594 = vmul.f32 %v1554, %v1578
        %v1595 = vmul.f32 %v1559, %v1579
        %v1596 = vmul.f32 %v1562, %v1580
        %v1597 = vpack.c.bf16 %v1582, %v1581
        %v1598 = vpack.c.bf16 %v1584, %v1583
        %v1599 = vpack.c.bf16 %v1586, %v1585
        %v1600 = vpack.c.bf16 %v1588, %v1587
        %v1601 = vpack.c.bf16 %v1590, %v1589
        %v1602 = vpack.c.bf16 %v1592, %v1591
        %v1603 = vpack.c.bf16 %v1594, %v1593
        %v1604 = vpack.c.bf16 %v1596, %v1595
        %v1605 = vld [vmem:[#allocation8] sm:$0xf]
        %v1606 = vld [vmem:[#allocation8 + $0x4] sm:$0xf]
        %v1607 = vld [vmem:[#allocation8 + $0x8] sm:$0xf]
        %v1608 = vld [vmem:[#allocation8 + $0xc] sm:$0xf]
        %1617 = vrot.lane.b32.xlu0 %v1186, 96
        %v1618 = vpop.permute.xlu0 %1617
        %1619 = vrot.lane.b32.xlu0 %v1187, 96
        %v1620 = vpop.permute.xlu0 %1619
        %1621 = vrot.lane.b32.xlu0 %v1188, 96
        %v1622 = vpop.permute.xlu0 %1621
        %1623 = vrot.lane.b32.xlu0 %v1189, 96
        %v1624 = vpop.permute.xlu0 %1623
        %1625 = vrot.lane.b32.xlu0 %v1190, 96
        %v1626 = vpop.permute.xlu0 %1625
        %1627 = vrot.lane.b32.xlu0 %v1191, 96
        %v1628 = vpop.permute.xlu0 %1627
        %1629 = vrot.lane.b32.xlu0 %v1192, 96
        %v1630 = vpop.permute.xlu0 %1629
        %1631 = vrot.lane.b32.xlu0 %v1193, 96
        %v1632 = vpop.permute.xlu0 %1631
        %1641 = vrot.lane.b32.xlu0 %v1178, 96
        %v1642 = vpop.permute.xlu0 %1641
        %1643 = vrot.lane.b32.xlu0 %v1179, 96
        %v1644 = vpop.permute.xlu0 %1643
        %1645 = vrot.lane.b32.xlu0 %v1180, 96
        %v1646 = vpop.permute.xlu0 %1645
        %1647 = vrot.lane.b32.xlu0 %v1181, 96
        %v1648 = vpop.permute.xlu0 %1647
        %1649 = vrot.lane.b32.xlu0 %v1182, 96
        %v1650 = vpop.permute.xlu0 %1649
        %1651 = vrot.lane.b32.xlu0 %v1183, 96
        %v1652 = vpop.permute.xlu0 %1651
        %1653 = vrot.lane.b32.xlu0 %v1184, 96
        %v1654 = vpop.permute.xlu0 %1653
        %1655 = vrot.lane.b32.xlu0 %v1185, 96
        %v1656 = vpop.permute.xlu0 %1655
        %v1658 = vsel %vm1202, %v1618, 0
        %v1661 = vsel %vm1202, %v1620, 0
        %v1664 = vsel %vm1202, %v1622, 0
        %v1667 = vsel %vm1202, %v1624, 0
        %v1670 = vsel %vm1202, %v1626, 0
        %v1673 = vsel %vm1202, %v1628, 0
        %v1676 = vsel %vm1202, %v1630, 0
        %v1679 = vsel %vm1202, %v1632, 0
        %v1682 = vsel %vm1202, %v1642, 0
        %v1685 = vsel %vm1202, %v1644, 0
        %v1688 = vsel %vm1202, %v1646, 0
        %v1691 = vsel %vm1202, %v1648, 0
        %v1694 = vsel %vm1202, %v1650, 0
        %v1697 = vsel %vm1202, %v1652, 0
        %v1700 = vsel %vm1202, %v1654, 0
        %v1703 = vsel %vm1202, %v1656, 0
        %1705 = vmatprep.subr.bf16.mxu0 0
        %1706 = vmatpush1.bf16.xpose.msra.mxu0 %v1703
        %1707 = vmatprep.subr.bf16.mxu0 0
        %1708 = vmatpush1.bf16.xpose.msra.mxu0 %v1700
        %1709 = vmatprep.subr.bf16.mxu0 0
        %1710 = vmatpush1.bf16.xpose.msra.mxu0 %v1697
        %1711 = vmatprep.subr.bf16.mxu0 0
        %1712 = vmatpush1.bf16.xpose.msra.mxu0 %v1694
        %1713 = vmatprep.subr.bf16.mxu0 0
        %1714 = vmatpush1.bf16.xpose.msra.mxu0 %v1691
        %1715 = vmatprep.subr.bf16.mxu0 0
        %1716 = vmatpush1.bf16.xpose.msra.mxu0 %v1688
        %1717 = vmatprep.subr.bf16.mxu0 0
        %1718 = vmatpush1.bf16.xpose.msra.mxu0 %v1685
        %1719 = vmatprep.subr.bf16.mxu0 0
        %1720 = vmatpush1.bf16.xpose.msra.mxu0 %v1682
        %1721 = vmatprep.subr.bf16.mxu0 0
        %1722 = vmatpush2.bf16.xpose.msra.mxu0 0
        %1723 = vmatprep.subr.bf16.mxu0 0
        %1724 = vmatpush2.bf16.xpose.msra.mxu0 0
        %1725 = vmatprep.subr.bf16.mxu0 0
        %1726 = vmatpush2.bf16.xpose.msra.mxu0 0
        %1727 = vmatprep.subr.bf16.mxu0 0
        %1728 = vmatpush2.bf16.xpose.msra.mxu0 0
        %1729 = vmatprep.subr.bf16.mxu0 0
        %1730 = vmatpush2.bf16.xpose.msra.mxu0 0
        %1731 = vmatprep.subr.bf16.mxu0 0
        %1732 = vmatpush2.bf16.xpose.msra.mxu0 0
        %1733 = vmatprep.subr.bf16.mxu0 0
        %1734 = vmatpush2.bf16.xpose.msra.mxu0 0
        %1735 = vmatprep.subr.bf16.mxu0 0
        %1736 = vmatpush2.bf16.xpose.msra.mxu0 0
        %1737 = vmatprep.mubr.bf16.mxu0 0
        %1738 = vmatmul.mubr.bf16.gmra.mxu0 %v1658
        %v1739 = vpop.f32.mrf.mxu0
        %v1740 = vadd.f32 %v1162, %v1739
        %v1741 = vpop.f32.mrf.mxu0
        %v1742 = vpop.f32.mrf.mxu0
        %v1743 = vadd.f32 %v1163, %v1742
        %v1744 = vpop.f32.mrf.mxu0
        %1745 = vmatprep.mubr.bf16.mxu0 0
        %1746 = vmatmul.mubr.bf16.gmra.mxu0 %v1661
        %v1747 = vpop.f32.mrf.mxu0
        %v1748 = vadd.f32 %v1164, %v1747
        %v1749 = vpop.f32.mrf.mxu0
        %v1750 = vpop.f32.mrf.mxu0
        %v1751 = vadd.f32 %v1165, %v1750
        %v1752 = vpop.f32.mrf.mxu0
        %1753 = vmatprep.mubr.bf16.mxu0 0
        %1754 = vmatmul.mubr.bf16.gmra.mxu0 %v1664
        %v1755 = vpop.f32.mrf.mxu0
        %v1756 = vadd.f32 %v1166, %v1755
        %v1757 = vpop.f32.mrf.mxu0
        %v1758 = vpop.f32.mrf.mxu0
        %v1759 = vadd.f32 %v1167, %v1758
        %v1760 = vpop.f32.mrf.mxu0
        %1761 = vmatprep.mubr.bf16.mxu0 0
        %1762 = vmatmul.mubr.bf16.gmra.mxu0 %v1667
        %v1763 = vpop.f32.mrf.mxu0
        %v1764 = vadd.f32 %v1168, %v1763
        %v1765 = vpop.f32.mrf.mxu0
        %v1766 = vpop.f32.mrf.mxu0
        %v1767 = vadd.f32 %v1169, %v1766
        %v1768 = vpop.f32.mrf.mxu0
        %1769 = vmatprep.mubr.bf16.mxu0 0
        %1770 = vmatmul.mubr.bf16.gmra.mxu0 %v1670
        %v1771 = vpop.f32.mrf.mxu0
        %v1772 = vadd.f32 %v1170, %v1771
        %v1773 = vpop.f32.mrf.mxu0
        %v1774 = vpop.f32.mrf.mxu0
        %v1775 = vadd.f32 %v1171, %v1774
        %v1776 = vpop.f32.mrf.mxu0
        %1777 = vmatprep.mubr.bf16.mxu0 0
        %1778 = vmatmul.mubr.bf16.gmra.mxu0 %v1673
        %v1779 = vpop.f32.mrf.mxu0
        %v1780 = vadd.f32 %v1172, %v1779
        %v1781 = vpop.f32.mrf.mxu0
        %v1782 = vpop.f32.mrf.mxu0
        %v1783 = vadd.f32 %v1173, %v1782
        %v1784 = vpop.f32.mrf.mxu0
        %1785 = vmatprep.mubr.bf16.mxu0 0
        %1786 = vmatmul.mubr.bf16.gmra.mxu0 %v1676
        %v1787 = vpop.f32.mrf.mxu0
        %v1788 = vadd.f32 %v1174, %v1787
        %v1789 = vpop.f32.mrf.mxu0
        %v1790 = vpop.f32.mrf.mxu0
        %v1791 = vadd.f32 %v1175, %v1790
        %v1792 = vpop.f32.mrf.mxu0
        %1793 = vmatprep.mubr.bf16.mxu0 0
        %1794 = vmatmul.mubr.bf16.gmra.mxu0 %v1679
        %v1795 = vpop.f32.mrf.mxu0
        %v1796 = vadd.f32 %v1176, %v1795
        %v1797 = vpop.f32.mrf.mxu0
        %v1798 = vpop.f32.mrf.mxu0
        %v1799 = vadd.f32 %v1177, %v1798
        %v1800 = vpop.f32.mrf.mxu0
        %1801 = vdwg.mxu0
        %1802 = vmax.xlane.f32.xlu0 %v1740
        %v1803 = vpop.xlane.xlu0 %1802
        %1804 = vmax.xlane.f32.xlu0 %v1743
        %v1805 = vpop.xlane.xlu0 %1804
        %1806 = vmax.xlane.f32.xlu0 %v1748
        %v1807 = vpop.xlane.xlu0 %1806
        %1808 = vmax.xlane.f32.xlu0 %v1751
        %v1809 = vpop.xlane.xlu0 %1808
        %1810 = vmax.xlane.f32.xlu0 %v1756
        %v1811 = vpop.xlane.xlu0 %1810
        %1812 = vmax.xlane.f32.xlu0 %v1759
        %v1813 = vpop.xlane.xlu0 %1812
        %1814 = vmax.xlane.f32.xlu0 %v1764
        %v1815 = vpop.xlane.xlu0 %1814
        %1816 = vmax.xlane.f32.xlu0 %v1767
        %v1817 = vpop.xlane.xlu0 %1816
        %1818 = vmax.xlane.f32.xlu0 %v1772
        %v1819 = vpop.xlane.xlu0 %1818
        %1820 = vmax.xlane.f32.xlu0 %v1775
        %v1821 = vpop.xlane.xlu0 %1820
        %1822 = vmax.xlane.f32.xlu0 %v1780
        %v1823 = vpop.xlane.xlu0 %1822
        %1824 = vmax.xlane.f32.xlu0 %v1783
        %v1825 = vpop.xlane.xlu0 %1824
        %1826 = vmax.xlane.f32.xlu0 %v1788
        %v1827 = vpop.xlane.xlu0 %1826
        %1828 = vmax.xlane.f32.xlu0 %v1791
        %v1829 = vpop.xlane.xlu0 %1828
        %1830 = vmax.xlane.f32.xlu0 %v1796
        %v1831 = vpop.xlane.xlu0 %1830
        %1832 = vmax.xlane.f32.xlu0 %v1799
        %v1833 = vpop.xlane.xlu0 %1832
        %v1834 = vsub.f32 %v1740, %v1803
        %v1835 = vsub.f32 %v1743, %v1805
        %v1836 = vsub.f32 %v1748, %v1807
        %v1837 = vsub.f32 %v1751, %v1809
        %v1838 = vsub.f32 %v1756, %v1811
        %v1839 = vsub.f32 %v1759, %v1813
        %v1840 = vsub.f32 %v1764, %v1815
        %v1841 = vsub.f32 %v1767, %v1817
        %v1842 = vsub.f32 %v1772, %v1819
        %v1843 = vsub.f32 %v1775, %v1821
        %v1844 = vsub.f32 %v1780, %v1823
        %v1845 = vsub.f32 %v1783, %v1825
        %v1846 = vsub.f32 %v1788, %v1827
        %v1847 = vsub.f32 %v1791, %v1829
        %v1848 = vsub.f32 %v1796, %v1831
        %v1849 = vsub.f32 %v1799, %v1833
        %v1850 = vmul.f32 %v1834, 1.442695
        %v1851 = vpow.pop %v1850
        %v1852 = vmul.f32 %v1835, 1.442695
        %v1853 = vpow.pop %v1852
        %v1854 = vmul.f32 %v1836, 1.442695
        %v1855 = vpow.pop %v1854
        %v1856 = vmul.f32 %v1837, 1.442695
        %v1857 = vpow.pop %v1856
        %v1858 = vmul.f32 %v1838, 1.442695
        %v1859 = vpow.pop %v1858
        %v1860 = vmul.f32 %v1839, 1.442695
        %v1861 = vpow.pop %v1860
        %v1862 = vmul.f32 %v1840, 1.442695
        %v1863 = vpow.pop %v1862
        %v1864 = vmul.f32 %v1841, 1.442695
        %v1865 = vpow.pop %v1864
        %v1866 = vmul.f32 %v1842, 1.442695
        %v1867 = vpow.pop %v1866
        %v1868 = vmul.f32 %v1843, 1.442695
        %v1869 = vpow.pop %v1868
        %v1870 = vmul.f32 %v1844, 1.442695
        %v1871 = vpow.pop %v1870
        %v1872 = vmul.f32 %v1845, 1.442695
        %v1873 = vpow.pop %v1872
        %v1874 = vmul.f32 %v1846, 1.442695
        %v1875 = vpow.pop %v1874
        %v1876 = vmul.f32 %v1847, 1.442695
        %v1877 = vpow.pop %v1876
        %v1878 = vmul.f32 %v1848, 1.442695
        %v1879 = vpow.pop %v1878
        %v1880 = vmul.f32 %v1849, 1.442695
        %v1881 = vpow.pop %v1880
        %1882 = vadd.xlane.f32.xlu0 %v1851
        %v1883 = vpop.xlane.xlu0 %1882
        %1884 = vadd.xlane.f32.xlu0 %v1853
        %v1885 = vpop.xlane.xlu0 %1884
        %1886 = vadd.xlane.f32.xlu0 %v1855
        %v1887 = vpop.xlane.xlu0 %1886
        %1888 = vadd.xlane.f32.xlu0 %v1857
        %v1889 = vpop.xlane.xlu0 %1888
        %1890 = vadd.xlane.f32.xlu0 %v1859
        %v1891 = vpop.xlane.xlu0 %1890
        %1892 = vadd.xlane.f32.xlu0 %v1861
        %v1893 = vpop.xlane.xlu0 %1892
        %1894 = vadd.xlane.f32.xlu0 %v1863
        %v1895 = vpop.xlane.xlu0 %1894
        %1896 = vadd.xlane.f32.xlu0 %v1865
        %v1897 = vpop.xlane.xlu0 %1896
        %1898 = vadd.xlane.f32.xlu0 %v1867
        %v1899 = vpop.xlane.xlu0 %1898
        %1900 = vadd.xlane.f32.xlu0 %v1869
        %v1901 = vpop.xlane.xlu0 %1900
        %1902 = vadd.xlane.f32.xlu0 %v1871
        %v1903 = vpop.xlane.xlu0 %1902
        %1904 = vadd.xlane.f32.xlu0 %v1873
        %v1905 = vpop.xlane.xlu0 %1904
        %1906 = vadd.xlane.f32.xlu0 %v1875
        %v1907 = vpop.xlane.xlu0 %1906
        %1908 = vadd.xlane.f32.xlu0 %v1877
        %v1909 = vpop.xlane.xlu0 %1908
        %1910 = vadd.xlane.f32.xlu0 %v1879
        %v1911 = vpop.xlane.xlu0 %1910
        %1912 = vadd.xlane.f32.xlu0 %v1881
        %v1913 = vpop.xlane.xlu0 %1912
        %v1914 = vpack.c.bf16 %v1853, %v1851
        %v1915 = vpack.c.bf16 %v1857, %v1855
        %v1916 = vpack.c.bf16 %v1861, %v1859
        %v1917 = vpack.c.bf16 %v1865, %v1863
        %v1918 = vpack.c.bf16 %v1869, %v1867
        %v1919 = vpack.c.bf16 %v1873, %v1871
        %v1920 = vpack.c.bf16 %v1877, %v1875
        %v1921 = vpack.c.bf16 %v1881, %v1879
        %1930 = vrot.lane.b32.xlu0 %v1194, 96
        %v1931 = vpop.permute.xlu0 %1930
        %1932 = vrot.lane.b32.xlu0 %v1195, 96
        %v1933 = vpop.permute.xlu0 %1932
        %1934 = vrot.lane.b32.xlu0 %v1196, 96
        %v1935 = vpop.permute.xlu0 %1934
        %1936 = vrot.lane.b32.xlu0 %v1197, 96
        %v1937 = vpop.permute.xlu0 %1936
        %1938 = vrot.lane.b32.xlu0 %v1198, 96
        %v1939 = vpop.permute.xlu0 %1938
        %1940 = vrot.lane.b32.xlu0 %v1199, 96
        %v1941 = vpop.permute.xlu0 %1940
        %1942 = vrot.lane.b32.xlu0 %v1200, 96
        %v1943 = vpop.permute.xlu0 %1942
        %1944 = vrot.lane.b32.xlu0 %v1201, 96
        %v1945 = vpop.permute.xlu0 %1944
        %1954 = vmatprep.subr.bf16.mxu0 0
        %1955 = vmatpush1.bf16.msra.mxu0 %v1945
        %1956 = vmatprep.subr.bf16.mxu0 0
        %1957 = vmatpush1.bf16.msra.mxu0 %v1943
        %1958 = vmatprep.subr.bf16.mxu0 0
        %1959 = vmatpush1.bf16.msra.mxu0 %v1941
        %1960 = vmatprep.subr.bf16.mxu0 0
        %1961 = vmatpush1.bf16.msra.mxu0 %v1939
        %1962 = vmatprep.subr.bf16.mxu0 0
        %1963 = vmatpush1.bf16.msra.mxu0 %v1937
        %1964 = vmatprep.subr.bf16.mxu0 0
        %1965 = vmatpush1.bf16.msra.mxu0 %v1935
        %1966 = vmatprep.subr.bf16.mxu0 0
        %1967 = vmatpush1.bf16.msra.mxu0 %v1933
        %1968 = vmatprep.subr.bf16.mxu0 0
        %1969 = vmatpush1.bf16.msra.mxu0 %v1931
        %1970 = vmatprep.subr.bf16.mxu0 0
        %1971 = vmatpush2.bf16.msra.mxu0 0
        %1972 = vmatprep.subr.bf16.mxu0 0
        %1973 = vmatpush2.bf16.msra.mxu0 0
        %1974 = vmatprep.subr.bf16.mxu0 0
        %1975 = vmatpush2.bf16.msra.mxu0 0
        %1976 = vmatprep.subr.bf16.mxu0 0
        %1977 = vmatpush2.bf16.msra.mxu0 0
        %1978 = vmatprep.subr.bf16.mxu0 0
        %1979 = vmatpush2.bf16.msra.mxu0 0
        %1980 = vmatprep.subr.bf16.mxu0 0
        %1981 = vmatpush2.bf16.msra.mxu0 0
        %1982 = vmatprep.subr.bf16.mxu0 0
        %1983 = vmatpush2.bf16.msra.mxu0 0
        %1984 = vmatprep.subr.bf16.mxu0 0
        %1985 = vmatpush2.bf16.msra.mxu0 0
        %1986 = vmatprep.mubr.bf16.mxu0 0
        %1987 = vmatmul.mubr.bf16.gmra.mxu0 %v1914
        %v1988 = vpop.f32.mrf.mxu0
        %v1989 = vadd.f32 0.0, %v1988
        %v1990 = vpop.f32.mrf.mxu0
        %v1991 = vpop.f32.mrf.mxu0
        %v1992 = vadd.f32 0.0, %v1991
        %v1993 = vpop.f32.mrf.mxu0
        %1994 = vmatprep.mubr.bf16.mxu0 0
        %1995 = vmatmul.mubr.bf16.gmra.mxu0 %v1915
        %v1996 = vpop.f32.mrf.mxu0
        %v1997 = vadd.f32 0.0, %v1996
        %v1998 = vpop.f32.mrf.mxu0
        %v1999 = vpop.f32.mrf.mxu0
        %v2000 = vadd.f32 0.0, %v1999
        %v2001 = vpop.f32.mrf.mxu0
        %2002 = vmatprep.mubr.bf16.mxu0 0
        %2003 = vmatmul.mubr.bf16.gmra.mxu0 %v1916
        %v2004 = vpop.f32.mrf.mxu0
        %v2005 = vadd.f32 0.0, %v2004
        %v2006 = vpop.f32.mrf.mxu0
        %v2007 = vpop.f32.mrf.mxu0
        %v2008 = vadd.f32 0.0, %v2007
        %v2009 = vpop.f32.mrf.mxu0
        %2010 = vmatprep.mubr.bf16.mxu0 0
        %2011 = vmatmul.mubr.bf16.gmra.mxu0 %v1917
        %v2012 = vpop.f32.mrf.mxu0
        %v2013 = vadd.f32 0.0, %v2012
        %v2014 = vpop.f32.mrf.mxu0
        %v2015 = vpop.f32.mrf.mxu0
        %v2016 = vadd.f32 0.0, %v2015
        %v2017 = vpop.f32.mrf.mxu0
        %2018 = vmatprep.mubr.bf16.mxu0 0
        %2019 = vmatmul.mubr.bf16.gmra.mxu0 %v1918
        %v2020 = vpop.f32.mrf.mxu0
        %v2021 = vadd.f32 0.0, %v2020
        %v2022 = vpop.f32.mrf.mxu0
        %v2023 = vpop.f32.mrf.mxu0
        %v2024 = vadd.f32 0.0, %v2023
        %v2025 = vpop.f32.mrf.mxu0
        %2026 = vmatprep.mubr.bf16.mxu0 0
        %2027 = vmatmul.mubr.bf16.gmra.mxu0 %v1919
        %v2028 = vpop.f32.mrf.mxu0
        %v2029 = vadd.f32 0.0, %v2028
        %v2030 = vpop.f32.mrf.mxu0
        %v2031 = vpop.f32.mrf.mxu0
        %v2032 = vadd.f32 0.0, %v2031
        %v2033 = vpop.f32.mrf.mxu0
        %2034 = vmatprep.mubr.bf16.mxu0 0
        %2035 = vmatmul.mubr.bf16.gmra.mxu0 %v1920
        %v2036 = vpop.f32.mrf.mxu0
        %v2037 = vadd.f32 0.0, %v2036
        %v2038 = vpop.f32.mrf.mxu0
        %v2039 = vpop.f32.mrf.mxu0
        %v2040 = vadd.f32 0.0, %v2039
        %v2041 = vpop.f32.mrf.mxu0
        %2042 = vmatprep.mubr.bf16.mxu0 0
        %2043 = vmatmul.mubr.bf16.gmra.mxu0 %v1921
        %v2044 = vpop.f32.mrf.mxu0
        %v2045 = vadd.f32 0.0, %v2044
        %v2046 = vpop.f32.mrf.mxu0
        %v2047 = vpop.f32.mrf.mxu0
        %v2048 = vadd.f32 0.0, %v2047
        %v2049 = vpop.f32.mrf.mxu0
        %2050 = vdwg.mxu0
        %v2051 = vrcp.pop %v1883
        %v2052 = vrcp.pop %v1885
        %v2053 = vrcp.pop %v1887
        %v2054 = vrcp.pop %v1889
        %v2055 = vrcp.pop %v1891
        %v2056 = vrcp.pop %v1893
        %v2057 = vrcp.pop %v1895
        %v2058 = vrcp.pop %v1897
        %v2059 = vrcp.pop %v1899
        %v2060 = vrcp.pop %v1901
        %v2061 = vrcp.pop %v1903
        %v2062 = vrcp.pop %v1905
        %v2063 = vrcp.pop %v1907
        %v2064 = vrcp.pop %v1909
        %v2065 = vrcp.pop %v1911
        %v2066 = vrcp.pop %v1913
        %v2067 = vmul.f32 %v1989, %v2051
        %v2068 = vmul.f32 %v1992, %v2052
        %v2069 = vmul.f32 %v1997, %v2053
        %v2070 = vmul.f32 %v2000, %v2054
        %v2071 = vmul.f32 %v2005, %v2055
        %v2072 = vmul.f32 %v2008, %v2056
        %v2073 = vmul.f32 %v2013, %v2057
        %v2074 = vmul.f32 %v2016, %v2058
        %v2075 = vmul.f32 %v2021, %v2059
        %v2076 = vmul.f32 %v2024, %v2060
        %v2077 = vmul.f32 %v2029, %v2061
        %v2078 = vmul.f32 %v2032, %v2062
        %v2079 = vmul.f32 %v2037, %v2063
        %v2080 = vmul.f32 %v2040, %v2064
        %v2081 = vmul.f32 %v2045, %v2065
        %v2082 = vmul.f32 %v2048, %v2066
        %v2083 = vpack.c.bf16 %v2068, %v2067
        %v2084 = vpack.c.bf16 %v2070, %v2069
        %v2085 = vpack.c.bf16 %v2072, %v2071
        %v2086 = vpack.c.bf16 %v2074, %v2073
        %v2087 = vpack.c.bf16 %v2076, %v2075
        %v2088 = vpack.c.bf16 %v2078, %v2077
        %v2089 = vpack.c.bf16 %v2080, %v2079
        %v2090 = vpack.c.bf16 %v2082, %v2081
        %s2091 = scalar_lea.vmem [#allocation8], 16
        %v2092 = vld [vmem:[%s2091] sm:$0xf]
        %v2093 = vld [vmem:[%s2091 + $0x4] sm:$0xf]
        %v2094 = vld [vmem:[%s2091 + $0x8] sm:$0xf]
        %v2095 = vld [vmem:[%s2091 + $0xc] sm:$0xf]
        %v2100 = vunpack.c.l.b16 %v2092
        %v2101 = vunpack.c.l.b16 %v2093
        %v2102 = vunpack.c.l.b16 %v2094
        %v2103 = vunpack.c.l.b16 %v2095
        %v2104 = vpack.c.b16 %v2101, %v2100
        %v2105 = vpack.c.b16 %v2103, %v2102
        %v2109 = vsel %vm1202, %v2083, 0
        %v2112 = vsel %vm1202, %v2084, 0
        %v2115 = vsel %vm1202, %v2085, 0
        %v2118 = vsel %vm1202, %v2086, 0
        %v2121 = vsel %vm1202, %v2087, 0
        %v2124 = vsel %vm1202, %v2088, 0
        %v2127 = vsel %vm1202, %v2089, 0
        %v2130 = vsel %vm1202, %v2090, 0
        %2132 = vmatprep.subr.bf16.mxu0 0
        %2133 = vmatpush1.bf16.msra.mxu0 0
        %2134 = vmatprep.subr.bf16.mxu0 0
        %2135 = vmatpush1.bf16.msra.mxu0 0
        %2136 = vmatprep.subr.bf16.mxu0 0
        %2137 = vmatpush1.bf16.msra.mxu0 0
        %2138 = vmatprep.subr.bf16.mxu0 0
        %2139 = vmatpush1.bf16.msra.mxu0 0
        %2140 = vmatprep.subr.bf16.mxu0 0
        %2141 = vmatpush1.bf16.msra.mxu0 0
        %2142 = vmatprep.subr.bf16.mxu0 0
        %2143 = vmatpush1.bf16.msra.mxu0 0
        %2144 = vmatprep.subr.bf16.mxu0 0
        %2145 = vmatpush1.bf16.msra.mxu0 %v2105
        %2146 = vmatprep.subr.bf16.mxu0 0
        %2147 = vmatpush1.bf16.msra.mxu0 %v2104
        %2148 = vmatprep.subr.bf16.mxu0 0
        %2149 = vmatpush2.bf16.msra.mxu0 0
        %2150 = vmatprep.subr.bf16.mxu0 0
        %2151 = vmatpush2.bf16.msra.mxu0 0
        %2152 = vmatprep.subr.bf16.mxu0 0
        %2153 = vmatpush2.bf16.msra.mxu0 0
        %2154 = vmatprep.subr.bf16.mxu0 0
        %2155 = vmatpush2.bf16.msra.mxu0 0
        %2156 = vmatprep.subr.bf16.mxu0 0
        %2157 = vmatpush2.bf16.msra.mxu0 0
        %2158 = vmatprep.subr.bf16.mxu0 0
        %2159 = vmatpush2.bf16.msra.mxu0 0
        %2160 = vmatprep.subr.bf16.mxu0 0
        %2161 = vmatpush2.bf16.msra.mxu0 0
        %2162 = vmatprep.subr.bf16.mxu0 0
        %2163 = vmatpush2.bf16.msra.mxu0 0
        %2164 = vmatprep.mubr.bf16.mxu0 0
        %2165 = vmatmul.mubr.bf16.gmra.mxu0 %v2109
        %v2166 = vpop.f32.mrf.mxu0
        %v2167 = vadd.f32 0.0, %v2166
        %v2168 = vpop.f32.mrf.mxu0
        %v2169 = vpop.f32.mrf.mxu0
        %v2170 = vadd.f32 0.0, %v2169
        %v2171 = vpop.f32.mrf.mxu0
        %2172 = vmatprep.mubr.bf16.mxu0 0
        %2173 = vmatmul.mubr.bf16.gmra.mxu0 %v2112
        %v2174 = vpop.f32.mrf.mxu0
        %v2175 = vadd.f32 0.0, %v2174
        %v2176 = vpop.f32.mrf.mxu0
        %v2177 = vpop.f32.mrf.mxu0
        %v2178 = vadd.f32 0.0, %v2177
        %v2179 = vpop.f32.mrf.mxu0
        %2180 = vmatprep.mubr.bf16.mxu0 0
        %2181 = vmatmul.mubr.bf16.gmra.mxu0 %v2115
        %v2182 = vpop.f32.mrf.mxu0
        %v2183 = vadd.f32 0.0, %v2182
        %v2184 = vpop.f32.mrf.mxu0
        %v2185 = vpop.f32.mrf.mxu0
        %v2186 = vadd.f32 0.0, %v2185
        %v2187 = vpop.f32.mrf.mxu0
        %2188 = vmatprep.mubr.bf16.mxu0 0
        %2189 = vmatmul.mubr.bf16.gmra.mxu0 %v2118
        %v2190 = vpop.f32.mrf.mxu0
        %v2191 = vadd.f32 0.0, %v2190
        %v2192 = vpop.f32.mrf.mxu0
        %v2193 = vpop.f32.mrf.mxu0
        %v2194 = vadd.f32 0.0, %v2193
        %v2195 = vpop.f32.mrf.mxu0
        %2196 = vmatprep.mubr.bf16.mxu0 0
        %2197 = vmatmul.mubr.bf16.gmra.mxu0 %v2121
        %v2198 = vpop.f32.mrf.mxu0
        %v2199 = vadd.f32 0.0, %v2198
        %v2200 = vpop.f32.mrf.mxu0
        %v2201 = vpop.f32.mrf.mxu0
        %v2202 = vadd.f32 0.0, %v2201
        %v2203 = vpop.f32.mrf.mxu0
        %2204 = vmatprep.mubr.bf16.mxu0 0
        %2205 = vmatmul.mubr.bf16.gmra.mxu0 %v2124
        %v2206 = vpop.f32.mrf.mxu0
        %v2207 = vadd.f32 0.0, %v2206
        %v2208 = vpop.f32.mrf.mxu0
        %v2209 = vpop.f32.mrf.mxu0
        %v2210 = vadd.f32 0.0, %v2209
        %v2211 = vpop.f32.mrf.mxu0
        %2212 = vmatprep.mubr.bf16.mxu0 0
        %2213 = vmatmul.mubr.bf16.gmra.mxu0 %v2127
        %v2214 = vpop.f32.mrf.mxu0
        %v2215 = vadd.f32 0.0, %v2214
        %v2216 = vpop.f32.mrf.mxu0
        %v2217 = vpop.f32.mrf.mxu0
        %v2218 = vadd.f32 0.0, %v2217
        %v2219 = vpop.f32.mrf.mxu0
        %2220 = vmatprep.mubr.bf16.mxu0 0
        %2221 = vmatmul.mubr.bf16.gmra.mxu0 %v2130
        %v2222 = vpop.f32.mrf.mxu0
        %v2223 = vadd.f32 0.0, %v2222
        %v2224 = vpop.f32.mrf.mxu0
        %v2225 = vpop.f32.mrf.mxu0
        %v2226 = vadd.f32 0.0, %v2225
        %v2227 = vpop.f32.mrf.mxu0
        %2228 = vdwg.mxu0
        %v2233 = vunpack.c.l.b16 %v1605
        %v2234 = vunpack.c.l.b16 %v1606
        %v2235 = vunpack.c.l.b16 %v1607
        %v2236 = vunpack.c.l.b16 %v1608
        %v2237 = vpack.c.b16 %v2234, %v2233
        %v2238 = vpack.c.b16 %v2236, %v2235
        %v2242 = vsel %vm1202, %v1597, 0
        %v2245 = vsel %vm1202, %v1598, 0
        %v2248 = vsel %vm1202, %v1599, 0
        %v2251 = vsel %vm1202, %v1600, 0
        %v2254 = vsel %vm1202, %v1601, 0
        %v2257 = vsel %vm1202, %v1602, 0
        %v2260 = vsel %vm1202, %v1603, 0
        %v2263 = vsel %vm1202, %v1604, 0
        %2265 = vmatprep.subr.bf16.mxu0 0
        %2266 = vmatpush1.bf16.msra.mxu0 0
        %2267 = vmatprep.subr.bf16.mxu0 0
        %2268 = vmatpush1.bf16.msra.mxu0 0
        %2269 = vmatprep.subr.bf16.mxu0 0
        %2270 = vmatpush1.bf16.msra.mxu0 0
        %2271 = vmatprep.subr.bf16.mxu0 0
        %2272 = vmatpush1.bf16.msra.mxu0 0
        %2273 = vmatprep.subr.bf16.mxu0 0
        %2274 = vmatpush1.bf16.msra.mxu0 0
        %2275 = vmatprep.subr.bf16.mxu0 0
        %2276 = vmatpush1.bf16.msra.mxu0 0
        %2277 = vmatprep.subr.bf16.mxu0 0
        %2278 = vmatpush1.bf16.msra.mxu0 %v2238
        %2279 = vmatprep.subr.bf16.mxu0 0
        %2280 = vmatpush1.bf16.msra.mxu0 %v2237
        %2281 = vmatprep.subr.bf16.mxu0 0
        %2282 = vmatpush2.bf16.msra.mxu0 0
        %2283 = vmatprep.subr.bf16.mxu0 0
        %2284 = vmatpush2.bf16.msra.mxu0 0
        %2285 = vmatprep.subr.bf16.mxu0 0
        %2286 = vmatpush2.bf16.msra.mxu0 0
        %2287 = vmatprep.subr.bf16.mxu0 0
        %2288 = vmatpush2.bf16.msra.mxu0 0
        %2289 = vmatprep.subr.bf16.mxu0 0
        %2290 = vmatpush2.bf16.msra.mxu0 0
        %2291 = vmatprep.subr.bf16.mxu0 0
        %2292 = vmatpush2.bf16.msra.mxu0 0
        %2293 = vmatprep.subr.bf16.mxu0 0
        %2294 = vmatpush2.bf16.msra.mxu0 0
        %2295 = vmatprep.subr.bf16.mxu0 0
        %2296 = vmatpush2.bf16.msra.mxu0 0
        %2297 = vmatprep.mubr.bf16.mxu0 0
        %2298 = vmatmul.mubr.bf16.gmra.mxu0 %v2242
        %v2299 = vpop.f32.mrf.mxu0
        %v2300 = vadd.f32 %v2167, %v2299
        %v2301 = vpop.f32.mrf.mxu0
        %v2302 = vpop.f32.mrf.mxu0
        %v2303 = vadd.f32 %v2170, %v2302
        %v2304 = vpop.f32.mrf.mxu0
        %2305 = vmatprep.mubr.bf16.mxu0 0
        %2306 = vmatmul.mubr.bf16.gmra.mxu0 %v2245
        %v2307 = vpop.f32.mrf.mxu0
        %v2308 = vadd.f32 %v2175, %v2307
        %v2309 = vpop.f32.mrf.mxu0
        %v2310 = vpop.f32.mrf.mxu0
        %v2311 = vadd.f32 %v2178, %v2310
        %v2312 = vpop.f32.mrf.mxu0
        %2313 = vmatprep.mubr.bf16.mxu0 0
        %2314 = vmatmul.mubr.bf16.gmra.mxu0 %v2248
        %v2315 = vpop.f32.mrf.mxu0
        %v2316 = vadd.f32 %v2183, %v2315
        %v2317 = vpop.f32.mrf.mxu0
        %v2318 = vpop.f32.mrf.mxu0
        %v2319 = vadd.f32 %v2186, %v2318
        %v2320 = vpop.f32.mrf.mxu0
        %2321 = vmatprep.mubr.bf16.mxu0 0
        %2322 = vmatmul.mubr.bf16.gmra.mxu0 %v2251
        %v2323 = vpop.f32.mrf.mxu0
        %v2324 = vadd.f32 %v2191, %v2323
        %v2325 = vpop.f32.mrf.mxu0
        %v2326 = vpop.f32.mrf.mxu0
        %v2327 = vadd.f32 %v2194, %v2326
        %v2328 = vpop.f32.mrf.mxu0
        %2329 = vmatprep.mubr.bf16.mxu0 0
        %2330 = vmatmul.mubr.bf16.gmra.mxu0 %v2254
        %v2331 = vpop.f32.mrf.mxu0
        %v2332 = vadd.f32 %v2199, %v2331
        %v2333 = vpop.f32.mrf.mxu0
        %v2334 = vpop.f32.mrf.mxu0
        %v2335 = vadd.f32 %v2202, %v2334
        %v2336 = vpop.f32.mrf.mxu0
        %2337 = vmatprep.mubr.bf16.mxu0 0
        %2338 = vmatmul.mubr.bf16.gmra.mxu0 %v2257
        %v2339 = vpop.f32.mrf.mxu0
        %v2340 = vadd.f32 %v2207, %v2339
        %v2341 = vpop.f32.mrf.mxu0
        %v2342 = vpop.f32.mrf.mxu0
        %v2343 = vadd.f32 %v2210, %v2342
        %v2344 = vpop.f32.mrf.mxu0
        %2345 = vmatprep.mubr.bf16.mxu0 0
        %2346 = vmatmul.mubr.bf16.gmra.mxu0 %v2260
        %v2347 = vpop.f32.mrf.mxu0
        %v2348 = vadd.f32 %v2215, %v2347
        %v2349 = vpop.f32.mrf.mxu0
        %v2350 = vpop.f32.mrf.mxu0
        %v2351 = vadd.f32 %v2218, %v2350
        %v2352 = vpop.f32.mrf.mxu0
        %2353 = vmatprep.mubr.bf16.mxu0 0
        %2354 = vmatmul.mubr.bf16.gmra.mxu0 %v2263
        %v2355 = vpop.f32.mrf.mxu0
        %v2356 = vadd.f32 %v2223, %v2355
        %v2357 = vpop.f32.mrf.mxu0
        %v2358 = vpop.f32.mrf.mxu0
        %v2359 = vadd.f32 %v2226, %v2358
        %v2360 = vpop.f32.mrf.mxu0
        %2361 = vdwg.mxu0
        %2362 = vrot.lane.b32.xlu0 %v1186, 64
        %v2363 = vpop.permute.xlu0 %2362
        %2364 = vrot.lane.b32.xlu0 %v1187, 64
        %v2365 = vpop.permute.xlu0 %2364
        %2366 = vrot.lane.b32.xlu0 %v1188, 64
        %v2367 = vpop.permute.xlu0 %2366
        %2368 = vrot.lane.b32.xlu0 %v1189, 64
        %v2369 = vpop.permute.xlu0 %2368
        %2370 = vrot.lane.b32.xlu0 %v1190, 64
        %v2371 = vpop.permute.xlu0 %2370
        %2372 = vrot.lane.b32.xlu0 %v1191, 64
        %v2373 = vpop.permute.xlu0 %2372
        %2374 = vrot.lane.b32.xlu0 %v1192, 64
        %v2375 = vpop.permute.xlu0 %2374
        %2376 = vrot.lane.b32.xlu0 %v1193, 64
        %v2377 = vpop.permute.xlu0 %2376
        %2378 = vrot.lane.b32.xlu0 %v1178, 64
        %v2379 = vpop.permute.xlu0 %2378
        %2380 = vrot.lane.b32.xlu0 %v1179, 64
        %v2381 = vpop.permute.xlu0 %2380
        %2382 = vrot.lane.b32.xlu0 %v1180, 64
        %v2383 = vpop.permute.xlu0 %2382
        %2384 = vrot.lane.b32.xlu0 %v1181, 64
        %v2385 = vpop.permute.xlu0 %2384
        %2386 = vrot.lane.b32.xlu0 %v1182, 64
        %v2387 = vpop.permute.xlu0 %2386
        %2388 = vrot.lane.b32.xlu0 %v1183, 64
        %v2389 = vpop.permute.xlu0 %2388
        %2390 = vrot.lane.b32.xlu0 %v1184, 64
        %v2391 = vpop.permute.xlu0 %2390
        %2392 = vrot.lane.b32.xlu0 %v1185, 64
        %v2393 = vpop.permute.xlu0 %2392
        %v2395 = vsel %vm1202, %v2363, 0
        %v2398 = vsel %vm1202, %v2365, 0
        %v2401 = vsel %vm1202, %v2367, 0
        %v2404 = vsel %vm1202, %v2369, 0
        %v2407 = vsel %vm1202, %v2371, 0
        %v2410 = vsel %vm1202, %v2373, 0
        %v2413 = vsel %vm1202, %v2375, 0
        %v2416 = vsel %vm1202, %v2377, 0
        %v2419 = vsel %vm1202, %v2379, 0
        %v2422 = vsel %vm1202, %v2381, 0
        %v2425 = vsel %vm1202, %v2383, 0
        %v2428 = vsel %vm1202, %v2385, 0
        %v2431 = vsel %vm1202, %v2387, 0
        %v2434 = vsel %vm1202, %v2389, 0
        %v2437 = vsel %vm1202, %v2391, 0
        %v2440 = vsel %vm1202, %v2393, 0
        %2442 = vmatprep.subr.bf16.mxu0 0
        %2443 = vmatpush1.bf16.xpose.msra.mxu0 %v2440
        %2444 = vmatprep.subr.bf16.mxu0 0
        %2445 = vmatpush1.bf16.xpose.msra.mxu0 %v2437
        %2446 = vmatprep.subr.bf16.mxu0 0
        %2447 = vmatpush1.bf16.xpose.msra.mxu0 %v2434
        %2448 = vmatprep.subr.bf16.mxu0 0
        %2449 = vmatpush1.bf16.xpose.msra.mxu0 %v2431
        %2450 = vmatprep.subr.bf16.mxu0 0
        %2451 = vmatpush1.bf16.xpose.msra.mxu0 %v2428
        %2452 = vmatprep.subr.bf16.mxu0 0
        %2453 = vmatpush1.bf16.xpose.msra.mxu0 %v2425
        %2454 = vmatprep.subr.bf16.mxu0 0
        %2455 = vmatpush1.bf16.xpose.msra.mxu0 %v2422
        %2456 = vmatprep.subr.bf16.mxu0 0
        %2457 = vmatpush1.bf16.xpose.msra.mxu0 %v2419
        %2458 = vmatprep.subr.bf16.mxu0 0
        %2459 = vmatpush2.bf16.xpose.msra.mxu0 0
        %2460 = vmatprep.subr.bf16.mxu0 0
        %2461 = vmatpush2.bf16.xpose.msra.mxu0 0
        %2462 = vmatprep.subr.bf16.mxu0 0
        %2463 = vmatpush2.bf16.xpose.msra.mxu0 0
        %2464 = vmatprep.subr.bf16.mxu0 0
        %2465 = vmatpush2.bf16.xpose.msra.mxu0 0
        %2466 = vmatprep.subr.bf16.mxu0 0
        %2467 = vmatpush2.bf16.xpose.msra.mxu0 0
        %2468 = vmatprep.subr.bf16.mxu0 0
        %2469 = vmatpush2.bf16.xpose.msra.mxu0 0
        %2470 = vmatprep.subr.bf16.mxu0 0
        %2471 = vmatpush2.bf16.xpose.msra.mxu0 0
        %2472 = vmatprep.subr.bf16.mxu0 0
        %2473 = vmatpush2.bf16.xpose.msra.mxu0 0
        %2474 = vmatprep.mubr.bf16.mxu0 0
        %2475 = vmatmul.mubr.bf16.gmra.mxu0 %v2395
        %v2476 = vpop.f32.mrf.mxu0
        %v2477 = vadd.f32 %v1162, %v2476
        %v2478 = vpop.f32.mrf.mxu0
        %v2479 = vpop.f32.mrf.mxu0
        %v2480 = vadd.f32 %v1163, %v2479
        %v2481 = vpop.f32.mrf.mxu0
        %2482 = vmatprep.mubr.bf16.mxu0 0
        %2483 = vmatmul.mubr.bf16.gmra.mxu0 %v2398
        %v2484 = vpop.f32.mrf.mxu0
        %v2485 = vadd.f32 %v1164, %v2484
        %v2486 = vpop.f32.mrf.mxu0
        %v2487 = vpop.f32.mrf.mxu0
        %v2488 = vadd.f32 %v1165, %v2487
        %v2489 = vpop.f32.mrf.mxu0
        %2490 = vmatprep.mubr.bf16.mxu0 0
        %2491 = vmatmul.mubr.bf16.gmra.mxu0 %v2401
        %v2492 = vpop.f32.mrf.mxu0
        %v2493 = vadd.f32 %v1166, %v2492
        %v2494 = vpop.f32.mrf.mxu0
        %v2495 = vpop.f32.mrf.mxu0
        %v2496 = vadd.f32 %v1167, %v2495
        %v2497 = vpop.f32.mrf.mxu0
        %2498 = vmatprep.mubr.bf16.mxu0 0
        %2499 = vmatmul.mubr.bf16.gmra.mxu0 %v2404
        %v2500 = vpop.f32.mrf.mxu0
        %v2501 = vadd.f32 %v1168, %v2500
        %v2502 = vpop.f32.mrf.mxu0
        %v2503 = vpop.f32.mrf.mxu0
        %v2504 = vadd.f32 %v1169, %v2503
        %v2505 = vpop.f32.mrf.mxu0
        %2506 = vmatprep.mubr.bf16.mxu0 0
        %2507 = vmatmul.mubr.bf16.gmra.mxu0 %v2407
        %v2508 = vpop.f32.mrf.mxu0
        %v2509 = vadd.f32 %v1170, %v2508
        %v2510 = vpop.f32.mrf.mxu0
        %v2511 = vpop.f32.mrf.mxu0
        %v2512 = vadd.f32 %v1171, %v2511
        %v2513 = vpop.f32.mrf.mxu0
        %2514 = vmatprep.mubr.bf16.mxu0 0
        %2515 = vmatmul.mubr.bf16.gmra.mxu0 %v2410
        %v2516 = vpop.f32.mrf.mxu0
        %v2517 = vadd.f32 %v1172, %v2516
        %v2518 = vpop.f32.mrf.mxu0
        %v2519 = vpop.f32.mrf.mxu0
        %v2520 = vadd.f32 %v1173, %v2519
        %v2521 = vpop.f32.mrf.mxu0
        %2522 = vmatprep.mubr.bf16.mxu0 0
        %2523 = vmatmul.mubr.bf16.gmra.mxu0 %v2413
        %v2524 = vpop.f32.mrf.mxu0
        %v2525 = vadd.f32 %v1174, %v2524
        %v2526 = vpop.f32.mrf.mxu0
        %v2527 = vpop.f32.mrf.mxu0
        %v2528 = vadd.f32 %v1175, %v2527
        %v2529 = vpop.f32.mrf.mxu0
        %2530 = vmatprep.mubr.bf16.mxu0 0
        %2531 = vmatmul.mubr.bf16.gmra.mxu0 %v2416
        %v2532 = vpop.f32.mrf.mxu0
        %v2533 = vadd.f32 %v1176, %v2532
        %v2534 = vpop.f32.mrf.mxu0
        %v2535 = vpop.f32.mrf.mxu0
        %v2536 = vadd.f32 %v1177, %v2535
        %v2537 = vpop.f32.mrf.mxu0
        %2538 = vdwg.mxu0
        %2539 = vmax.xlane.f32.xlu0 %v2477
        %v2540 = vpop.xlane.xlu0 %2539
        %2541 = vmax.xlane.f32.xlu0 %v2480
        %v2542 = vpop.xlane.xlu0 %2541
        %2543 = vmax.xlane.f32.xlu0 %v2485
        %v2544 = vpop.xlane.xlu0 %2543
        %2545 = vmax.xlane.f32.xlu0 %v2488
        %v2546 = vpop.xlane.xlu0 %2545
        %2547 = vmax.xlane.f32.xlu0 %v2493
        %v2548 = vpop.xlane.xlu0 %2547
        %2549 = vmax.xlane.f32.xlu0 %v2496
        %v2550 = vpop.xlane.xlu0 %2549
        %2551 = vmax.xlane.f32.xlu0 %v2501
        %v2552 = vpop.xlane.xlu0 %2551
        %2553 = vmax.xlane.f32.xlu0 %v2504
        %v2554 = vpop.xlane.xlu0 %2553
        %2555 = vmax.xlane.f32.xlu0 %v2509
        %v2556 = vpop.xlane.xlu0 %2555
        %2557 = vmax.xlane.f32.xlu0 %v2512
        %v2558 = vpop.xlane.xlu0 %2557
        %2559 = vmax.xlane.f32.xlu0 %v2517
        %v2560 = vpop.xlane.xlu0 %2559
        %2561 = vmax.xlane.f32.xlu0 %v2520
        %v2562 = vpop.xlane.xlu0 %2561
        %2563 = vmax.xlane.f32.xlu0 %v2525
        %v2564 = vpop.xlane.xlu0 %2563
        %2565 = vmax.xlane.f32.xlu0 %v2528
        %v2566 = vpop.xlane.xlu0 %2565
        %2567 = vmax.xlane.f32.xlu0 %v2533
        %v2568 = vpop.xlane.xlu0 %2567
        %2569 = vmax.xlane.f32.xlu0 %v2536
        %v2570 = vpop.xlane.xlu0 %2569
        %v2571 = vsub.f32 %v2477, %v2540
        %v2572 = vsub.f32 %v2480, %v2542
        %v2573 = vsub.f32 %v2485, %v2544
        %v2574 = vsub.f32 %v2488, %v2546
        %v2575 = vsub.f32 %v2493, %v2548
        %v2576 = vsub.f32 %v2496, %v2550
        %v2577 = vsub.f32 %v2501, %v2552
        %v2578 = vsub.f32 %v2504, %v2554
        %v2579 = vsub.f32 %v2509, %v2556
        %v2580 = vsub.f32 %v2512, %v2558
        %v2581 = vsub.f32 %v2517, %v2560
        %v2582 = vsub.f32 %v2520, %v2562
        %v2583 = vsub.f32 %v2525, %v2564
        %v2584 = vsub.f32 %v2528, %v2566
        %v2585 = vsub.f32 %v2533, %v2568
        %v2586 = vsub.f32 %v2536, %v2570
        %v2587 = vmul.f32 %v2571, 1.442695
        %v2588 = vpow.pop %v2587
        %v2589 = vmul.f32 %v2572, 1.442695
        %v2590 = vpow.pop %v2589
        %v2591 = vmul.f32 %v2573, 1.442695
        %v2592 = vpow.pop %v2591
        %v2593 = vmul.f32 %v2574, 1.442695
        %v2594 = vpow.pop %v2593
        %v2595 = vmul.f32 %v2575, 1.442695
        %v2596 = vpow.pop %v2595
        %v2597 = vmul.f32 %v2576, 1.442695
        %v2598 = vpow.pop %v2597
        %v2599 = vmul.f32 %v2577, 1.442695
        %v2600 = vpow.pop %v2599
        %v2601 = vmul.f32 %v2578, 1.442695
        %v2602 = vpow.pop %v2601
        %v2603 = vmul.f32 %v2579, 1.442695
        %v2604 = vpow.pop %v2603
        %v2605 = vmul.f32 %v2580, 1.442695
        %v2606 = vpow.pop %v2605
        %v2607 = vmul.f32 %v2581, 1.442695
        %v2608 = vpow.pop %v2607
        %v2609 = vmul.f32 %v2582, 1.442695
        %v2610 = vpow.pop %v2609
        %v2611 = vmul.f32 %v2583, 1.442695
        %v2612 = vpow.pop %v2611
        %v2613 = vmul.f32 %v2584, 1.442695
        %v2614 = vpow.pop %v2613
        %v2615 = vmul.f32 %v2585, 1.442695
        %v2616 = vpow.pop %v2615
        %v2617 = vmul.f32 %v2586, 1.442695
        %v2618 = vpow.pop %v2617
        %2619 = vadd.xlane.f32.xlu0 %v2588
        %v2620 = vpop.xlane.xlu0 %2619
        %2621 = vadd.xlane.f32.xlu0 %v2590
        %v2622 = vpop.xlane.xlu0 %2621
        %2623 = vadd.xlane.f32.xlu0 %v2592
        %v2624 = vpop.xlane.xlu0 %2623
        %2625 = vadd.xlane.f32.xlu0 %v2594
        %v2626 = vpop.xlane.xlu0 %2625
        %2627 = vadd.xlane.f32.xlu0 %v2596
        %v2628 = vpop.xlane.xlu0 %2627
        %2629 = vadd.xlane.f32.xlu0 %v2598
        %v2630 = vpop.xlane.xlu0 %2629
        %2631 = vadd.xlane.f32.xlu0 %v2600
        %v2632 = vpop.xlane.xlu0 %2631
        %2633 = vadd.xlane.f32.xlu0 %v2602
        %v2634 = vpop.xlane.xlu0 %2633
        %2635 = vadd.xlane.f32.xlu0 %v2604
        %v2636 = vpop.xlane.xlu0 %2635
        %2637 = vadd.xlane.f32.xlu0 %v2606
        %v2638 = vpop.xlane.xlu0 %2637
        %2639 = vadd.xlane.f32.xlu0 %v2608
        %v2640 = vpop.xlane.xlu0 %2639
        %2641 = vadd.xlane.f32.xlu0 %v2610
        %v2642 = vpop.xlane.xlu0 %2641
        %2643 = vadd.xlane.f32.xlu0 %v2612
        %v2644 = vpop.xlane.xlu0 %2643
        %2645 = vadd.xlane.f32.xlu0 %v2614
        %v2646 = vpop.xlane.xlu0 %2645
        %2647 = vadd.xlane.f32.xlu0 %v2616
        %v2648 = vpop.xlane.xlu0 %2647
        %2649 = vadd.xlane.f32.xlu0 %v2618
        %v2650 = vpop.xlane.xlu0 %2649
        %v2651 = vpack.c.bf16 %v2590, %v2588
        %v2652 = vpack.c.bf16 %v2594, %v2592
        %v2653 = vpack.c.bf16 %v2598, %v2596
        %v2654 = vpack.c.bf16 %v2602, %v2600
        %v2655 = vpack.c.bf16 %v2606, %v2604
        %v2656 = vpack.c.bf16 %v2610, %v2608
        %v2657 = vpack.c.bf16 %v2614, %v2612
        %v2658 = vpack.c.bf16 %v2618, %v2616
        %2659 = vrot.lane.b32.xlu0 %v1194, 64
        %v2660 = vpop.permute.xlu0 %2659
        %2661 = vrot.lane.b32.xlu0 %v1195, 64
        %v2662 = vpop.permute.xlu0 %2661
        %2663 = vrot.lane.b32.xlu0 %v1196, 64
        %v2664 = vpop.permute.xlu0 %2663
        %2665 = vrot.lane.b32.xlu0 %v1197, 64
        %v2666 = vpop.permute.xlu0 %2665
        %2667 = vrot.lane.b32.xlu0 %v1198, 64
        %v2668 = vpop.permute.xlu0 %2667
        %2669 = vrot.lane.b32.xlu0 %v1199, 64
        %v2670 = vpop.permute.xlu0 %2669
        %2671 = vrot.lane.b32.xlu0 %v1200, 64
        %v2672 = vpop.permute.xlu0 %2671
        %2673 = vrot.lane.b32.xlu0 %v1201, 64
        %v2674 = vpop.permute.xlu0 %2673
        %2683 = vmatprep.subr.bf16.mxu0 0
        %2684 = vmatpush1.bf16.msra.mxu0 %v2674
        %2685 = vmatprep.subr.bf16.mxu0 0
        %2686 = vmatpush1.bf16.msra.mxu0 %v2672
        %2687 = vmatprep.subr.bf16.mxu0 0
        %2688 = vmatpush1.bf16.msra.mxu0 %v2670
        %2689 = vmatprep.subr.bf16.mxu0 0
        %2690 = vmatpush1.bf16.msra.mxu0 %v2668
        %2691 = vmatprep.subr.bf16.mxu0 0
        %2692 = vmatpush1.bf16.msra.mxu0 %v2666
        %2693 = vmatprep.subr.bf16.mxu0 0
        %2694 = vmatpush1.bf16.msra.mxu0 %v2664
        %2695 = vmatprep.subr.bf16.mxu0 0
        %2696 = vmatpush1.bf16.msra.mxu0 %v2662
        %2697 = vmatprep.subr.bf16.mxu0 0
        %2698 = vmatpush1.bf16.msra.mxu0 %v2660
        %2699 = vmatprep.subr.bf16.mxu0 0
        %2700 = vmatpush2.bf16.msra.mxu0 0
        %2701 = vmatprep.subr.bf16.mxu0 0
        %2702 = vmatpush2.bf16.msra.mxu0 0
        %2703 = vmatprep.subr.bf16.mxu0 0
        %2704 = vmatpush2.bf16.msra.mxu0 0
        %2705 = vmatprep.subr.bf16.mxu0 0
        %2706 = vmatpush2.bf16.msra.mxu0 0
        %2707 = vmatprep.subr.bf16.mxu0 0
        %2708 = vmatpush2.bf16.msra.mxu0 0
        %2709 = vmatprep.subr.bf16.mxu0 0
        %2710 = vmatpush2.bf16.msra.mxu0 0
        %2711 = vmatprep.subr.bf16.mxu0 0
        %2712 = vmatpush2.bf16.msra.mxu0 0
        %2713 = vmatprep.subr.bf16.mxu0 0
        %2714 = vmatpush2.bf16.msra.mxu0 0
        %2715 = vmatprep.mubr.bf16.mxu0 0
        %2716 = vmatmul.mubr.bf16.gmra.mxu0 %v2651
        %v2717 = vpop.f32.mrf.mxu0
        %v2718 = vadd.f32 0.0, %v2717
        %v2719 = vpop.f32.mrf.mxu0
        %v2720 = vpop.f32.mrf.mxu0
        %v2721 = vadd.f32 0.0, %v2720
        %v2722 = vpop.f32.mrf.mxu0
        %2723 = vmatprep.mubr.bf16.mxu0 0
        %2724 = vmatmul.mubr.bf16.gmra.mxu0 %v2652
        %v2725 = vpop.f32.mrf.mxu0
        %v2726 = vadd.f32 0.0, %v2725
        %v2727 = vpop.f32.mrf.mxu0
        %v2728 = vpop.f32.mrf.mxu0
        %v2729 = vadd.f32 0.0, %v2728
        %v2730 = vpop.f32.mrf.mxu0
        %2731 = vmatprep.mubr.bf16.mxu0 0
        %2732 = vmatmul.mubr.bf16.gmra.mxu0 %v2653
        %v2733 = vpop.f32.mrf.mxu0
        %v2734 = vadd.f32 0.0, %v2733
        %v2735 = vpop.f32.mrf.mxu0
        %v2736 = vpop.f32.mrf.mxu0
        %v2737 = vadd.f32 0.0, %v2736
        %v2738 = vpop.f32.mrf.mxu0
        %2739 = vmatprep.mubr.bf16.mxu0 0
        %2740 = vmatmul.mubr.bf16.gmra.mxu0 %v2654
        %v2741 = vpop.f32.mrf.mxu0
        %v2742 = vadd.f32 0.0, %v2741
        %v2743 = vpop.f32.mrf.mxu0
        %v2744 = vpop.f32.mrf.mxu0
        %v2745 = vadd.f32 0.0, %v2744
        %v2746 = vpop.f32.mrf.mxu0
        %2747 = vmatprep.mubr.bf16.mxu0 0
        %2748 = vmatmul.mubr.bf16.gmra.mxu0 %v2655
        %v2749 = vpop.f32.mrf.mxu0
        %v2750 = vadd.f32 0.0, %v2749
        %v2751 = vpop.f32.mrf.mxu0
        %v2752 = vpop.f32.mrf.mxu0
        %v2753 = vadd.f32 0.0, %v2752
        %v2754 = vpop.f32.mrf.mxu0
        %2755 = vmatprep.mubr.bf16.mxu0 0
        %2756 = vmatmul.mubr.bf16.gmra.mxu0 %v2656
        %v2757 = vpop.f32.mrf.mxu0
        %v2758 = vadd.f32 0.0, %v2757
        %v2759 = vpop.f32.mrf.mxu0
        %v2760 = vpop.f32.mrf.mxu0
        %v2761 = vadd.f32 0.0, %v2760
        %v2762 = vpop.f32.mrf.mxu0
        %2763 = vmatprep.mubr.bf16.mxu0 0
        %2764 = vmatmul.mubr.bf16.gmra.mxu0 %v2657
        %v2765 = vpop.f32.mrf.mxu0
        %v2766 = vadd.f32 0.0, %v2765
        %v2767 = vpop.f32.mrf.mxu0
        %v2768 = vpop.f32.mrf.mxu0
        %v2769 = vadd.f32 0.0, %v2768
        %v2770 = vpop.f32.mrf.mxu0
        %2771 = vmatprep.mubr.bf16.mxu0 0
        %2772 = vmatmul.mubr.bf16.gmra.mxu0 %v2658
        %v2773 = vpop.f32.mrf.mxu0
        %v2774 = vadd.f32 0.0, %v2773
        %v2775 = vpop.f32.mrf.mxu0
        %v2776 = vpop.f32.mrf.mxu0
        %v2777 = vadd.f32 0.0, %v2776
        %v2778 = vpop.f32.mrf.mxu0
        %2779 = vdwg.mxu0
        %v2780 = vrcp.pop %v2620
        %v2781 = vrcp.pop %v2622
        %v2782 = vrcp.pop %v2624
        %v2783 = vrcp.pop %v2626
        %v2784 = vrcp.pop %v2628
        %v2785 = vrcp.pop %v2630
        %v2786 = vrcp.pop %v2632
        %v2787 = vrcp.pop %v2634
        %v2788 = vrcp.pop %v2636
        %v2789 = vrcp.pop %v2638
        %v2790 = vrcp.pop %v2640
        %v2791 = vrcp.pop %v2642
        %v2792 = vrcp.pop %v2644
        %v2793 = vrcp.pop %v2646
        %v2794 = vrcp.pop %v2648
        %v2795 = vrcp.pop %v2650
        %v2796 = vmul.f32 %v2718, %v2780
        %v2797 = vmul.f32 %v2721, %v2781
        %v2798 = vmul.f32 %v2726, %v2782
        %v2799 = vmul.f32 %v2729, %v2783
        %v2800 = vmul.f32 %v2734, %v2784
        %v2801 = vmul.f32 %v2737, %v2785
        %v2802 = vmul.f32 %v2742, %v2786
        %v2803 = vmul.f32 %v2745, %v2787
        %v2804 = vmul.f32 %v2750, %v2788
        %v2805 = vmul.f32 %v2753, %v2789
        %v2806 = vmul.f32 %v2758, %v2790
        %v2807 = vmul.f32 %v2761, %v2791
        %v2808 = vmul.f32 %v2766, %v2792
        %v2809 = vmul.f32 %v2769, %v2793
        %v2810 = vmul.f32 %v2774, %v2794
        %v2811 = vmul.f32 %v2777, %v2795
        %v2812 = vpack.c.bf16 %v2797, %v2796
        %v2813 = vpack.c.bf16 %v2799, %v2798
        %v2814 = vpack.c.bf16 %v2801, %v2800
        %v2815 = vpack.c.bf16 %v2803, %v2802
        %v2816 = vpack.c.bf16 %v2805, %v2804
        %v2817 = vpack.c.bf16 %v2807, %v2806
        %v2818 = vpack.c.bf16 %v2809, %v2808
        %v2819 = vpack.c.bf16 %v2811, %v2810
        %s2820 = scalar_lea.vmem [#allocation8], 32
        %v2821 = vld [vmem:[%s2820] sm:$0xf]
        %v2822 = vld [vmem:[%s2820 + $0x4] sm:$0xf]
        %v2823 = vld [vmem:[%s2820 + $0x8] sm:$0xf]
        %v2824 = vld [vmem:[%s2820 + $0xc] sm:$0xf]
        %v2829 = vunpack.c.l.b16 %v2821
        %v2830 = vunpack.c.l.b16 %v2822
        %v2831 = vunpack.c.l.b16 %v2823
        %v2832 = vunpack.c.l.b16 %v2824
        %v2833 = vpack.c.b16 %v2830, %v2829
        %v2834 = vpack.c.b16 %v2832, %v2831
        %v2838 = vsel %vm1202, %v2812, 0
        %v2841 = vsel %vm1202, %v2813, 0
        %v2844 = vsel %vm1202, %v2814, 0
        %v2847 = vsel %vm1202, %v2815, 0
        %v2850 = vsel %vm1202, %v2816, 0
        %v2853 = vsel %vm1202, %v2817, 0
        %v2856 = vsel %vm1202, %v2818, 0
        %v2859 = vsel %vm1202, %v2819, 0
        %2861 = vmatprep.subr.bf16.mxu0 0
        %2862 = vmatpush1.bf16.msra.mxu0 0
        %2863 = vmatprep.subr.bf16.mxu0 0
        %2864 = vmatpush1.bf16.msra.mxu0 0
        %2865 = vmatprep.subr.bf16.mxu0 0
        %2866 = vmatpush1.bf16.msra.mxu0 0
        %2867 = vmatprep.subr.bf16.mxu0 0
        %2868 = vmatpush1.bf16.msra.mxu0 0
        %2869 = vmatprep.subr.bf16.mxu0 0
        %2870 = vmatpush1.bf16.msra.mxu0 0
        %2871 = vmatprep.subr.bf16.mxu0 0
        %2872 = vmatpush1.bf16.msra.mxu0 0
        %2873 = vmatprep.subr.bf16.mxu0 0
        %2874 = vmatpush1.bf16.msra.mxu0 %v2834
        %2875 = vmatprep.subr.bf16.mxu0 0
        %2876 = vmatpush1.bf16.msra.mxu0 %v2833
        %2877 = vmatprep.subr.bf16.mxu0 0
        %2878 = vmatpush2.bf16.msra.mxu0 0
        %2879 = vmatprep.subr.bf16.mxu0 0
        %2880 = vmatpush2.bf16.msra.mxu0 0
        %2881 = vmatprep.subr.bf16.mxu0 0
        %2882 = vmatpush2.bf16.msra.mxu0 0
        %2883 = vmatprep.subr.bf16.mxu0 0
        %2884 = vmatpush2.bf16.msra.mxu0 0
        %2885 = vmatprep.subr.bf16.mxu0 0
        %2886 = vmatpush2.bf16.msra.mxu0 0
        %2887 = vmatprep.subr.bf16.mxu0 0
        %2888 = vmatpush2.bf16.msra.mxu0 0
        %2889 = vmatprep.subr.bf16.mxu0 0
        %2890 = vmatpush2.bf16.msra.mxu0 0
        %2891 = vmatprep.subr.bf16.mxu0 0
        %2892 = vmatpush2.bf16.msra.mxu0 0
        %2893 = vmatprep.mubr.bf16.mxu0 0
        %2894 = vmatmul.mubr.bf16.gmra.mxu0 %v2838
        %v2895 = vpop.f32.mrf.mxu0
        %v2896 = vadd.f32 0.0, %v2895
        %v2897 = vpop.f32.mrf.mxu0
        %v2898 = vpop.f32.mrf.mxu0
        %v2899 = vadd.f32 0.0, %v2898
        %v2900 = vpop.f32.mrf.mxu0
        %2901 = vmatprep.mubr.bf16.mxu0 0
        %2902 = vmatmul.mubr.bf16.gmra.mxu0 %v2841
        %v2903 = vpop.f32.mrf.mxu0
        %v2904 = vadd.f32 0.0, %v2903
        %v2905 = vpop.f32.mrf.mxu0
        %v2906 = vpop.f32.mrf.mxu0
        %v2907 = vadd.f32 0.0, %v2906
        %v2908 = vpop.f32.mrf.mxu0
        %2909 = vmatprep.mubr.bf16.mxu0 0
        %2910 = vmatmul.mubr.bf16.gmra.mxu0 %v2844
        %v2911 = vpop.f32.mrf.mxu0
        %v2912 = vadd.f32 0.0, %v2911
        %v2913 = vpop.f32.mrf.mxu0
        %v2914 = vpop.f32.mrf.mxu0
        %v2915 = vadd.f32 0.0, %v2914
        %v2916 = vpop.f32.mrf.mxu0
        %2917 = vmatprep.mubr.bf16.mxu0 0
        %2918 = vmatmul.mubr.bf16.gmra.mxu0 %v2847
        %v2919 = vpop.f32.mrf.mxu0
        %v2920 = vadd.f32 0.0, %v2919
        %v2921 = vpop.f32.mrf.mxu0
        %v2922 = vpop.f32.mrf.mxu0
        %v2923 = vadd.f32 0.0, %v2922
        %v2924 = vpop.f32.mrf.mxu0
        %2925 = vmatprep.mubr.bf16.mxu0 0
        %2926 = vmatmul.mubr.bf16.gmra.mxu0 %v2850
        %v2927 = vpop.f32.mrf.mxu0
        %v2928 = vadd.f32 0.0, %v2927
        %v2929 = vpop.f32.mrf.mxu0
        %v2930 = vpop.f32.mrf.mxu0
        %v2931 = vadd.f32 0.0, %v2930
        %v2932 = vpop.f32.mrf.mxu0
        %2933 = vmatprep.mubr.bf16.mxu0 0
        %2934 = vmatmul.mubr.bf16.gmra.mxu0 %v2853
        %v2935 = vpop.f32.mrf.mxu0
        %v2936 = vadd.f32 0.0, %v2935
        %v2937 = vpop.f32.mrf.mxu0
        %v2938 = vpop.f32.mrf.mxu0
        %v2939 = vadd.f32 0.0, %v2938
        %v2940 = vpop.f32.mrf.mxu0
        %2941 = vmatprep.mubr.bf16.mxu0 0
        %2942 = vmatmul.mubr.bf16.gmra.mxu0 %v2856
        %v2943 = vpop.f32.mrf.mxu0
        %v2944 = vadd.f32 0.0, %v2943
        %v2945 = vpop.f32.mrf.mxu0
        %v2946 = vpop.f32.mrf.mxu0
        %v2947 = vadd.f32 0.0, %v2946
        %v2948 = vpop.f32.mrf.mxu0
        %2949 = vmatprep.mubr.bf16.mxu0 0
        %2950 = vmatmul.mubr.bf16.gmra.mxu0 %v2859
        %v2951 = vpop.f32.mrf.mxu0
        %v2952 = vadd.f32 0.0, %v2951
        %v2953 = vpop.f32.mrf.mxu0
        %v2954 = vpop.f32.mrf.mxu0
        %v2955 = vadd.f32 0.0, %v2954
        %v2956 = vpop.f32.mrf.mxu0
        %2957 = vdwg.mxu0
        %v2958 = vadd.f32 %v2300, %v2896
        %v2959 = vadd.f32 %v2303, %v2899
        %v2960 = vadd.f32 %v2308, %v2904
        %v2961 = vadd.f32 %v2311, %v2907
        %v2962 = vadd.f32 %v2316, %v2912
        %v2963 = vadd.f32 %v2319, %v2915
        %v2964 = vadd.f32 %v2324, %v2920
        %v2965 = vadd.f32 %v2327, %v2923
        %v2966 = vadd.f32 %v2332, %v2928
        %v2967 = vadd.f32 %v2335, %v2931
        %v2968 = vadd.f32 %v2340, %v2936
        %v2969 = vadd.f32 %v2343, %v2939
        %v2970 = vadd.f32 %v2348, %v2944
        %v2971 = vadd.f32 %v2351, %v2947
        %v2972 = vadd.f32 %v2356, %v2952
        %v2973 = vadd.f32 %v2359, %v2955
        %2974 = vrot.lane.b32.xlu0 %v1186, 32
        %v2975 = vpop.permute.xlu0 %2974
        %2976 = vrot.lane.b32.xlu0 %v1187, 32
        %v2977 = vpop.permute.xlu0 %2976
        %2978 = vrot.lane.b32.xlu0 %v1188, 32
        %v2979 = vpop.permute.xlu0 %2978
        %2980 = vrot.lane.b32.xlu0 %v1189, 32
        %v2981 = vpop.permute.xlu0 %2980
        %2982 = vrot.lane.b32.xlu0 %v1190, 32
        %v2983 = vpop.permute.xlu0 %2982
        %2984 = vrot.lane.b32.xlu0 %v1191, 32
        %v2985 = vpop.permute.xlu0 %2984
        %2986 = vrot.lane.b32.xlu0 %v1192, 32
        %v2987 = vpop.permute.xlu0 %2986
        %2988 = vrot.lane.b32.xlu0 %v1193, 32
        %v2989 = vpop.permute.xlu0 %2988
        %2990 = vrot.lane.b32.xlu0 %v1178, 32
        %v2991 = vpop.permute.xlu0 %2990
        %2992 = vrot.lane.b32.xlu0 %v1179, 32
        %v2993 = vpop.permute.xlu0 %2992
        %2994 = vrot.lane.b32.xlu0 %v1180, 32
        %v2995 = vpop.permute.xlu0 %2994
        %2996 = vrot.lane.b32.xlu0 %v1181, 32
        %v2997 = vpop.permute.xlu0 %2996
        %2998 = vrot.lane.b32.xlu0 %v1182, 32
        %v2999 = vpop.permute.xlu0 %2998
        %3000 = vrot.lane.b32.xlu0 %v1183, 32
        %v3001 = vpop.permute.xlu0 %3000
        %3002 = vrot.lane.b32.xlu0 %v1184, 32
        %v3003 = vpop.permute.xlu0 %3002
        %3004 = vrot.lane.b32.xlu0 %v1185, 32
        %v3005 = vpop.permute.xlu0 %3004
        %v3007 = vsel %vm1202, %v2975, 0
        %v3010 = vsel %vm1202, %v2977, 0
        %v3013 = vsel %vm1202, %v2979, 0
        %v3016 = vsel %vm1202, %v2981, 0
        %v3019 = vsel %vm1202, %v2983, 0
        %v3022 = vsel %vm1202, %v2985, 0
        %v3025 = vsel %vm1202, %v2987, 0
        %v3028 = vsel %vm1202, %v2989, 0
        %v3031 = vsel %vm1202, %v2991, 0
        %v3034 = vsel %vm1202, %v2993, 0
        %v3037 = vsel %vm1202, %v2995, 0
        %v3040 = vsel %vm1202, %v2997, 0
        %v3043 = vsel %vm1202, %v2999, 0
        %v3046 = vsel %vm1202, %v3001, 0
        %v3049 = vsel %vm1202, %v3003, 0
        %v3052 = vsel %vm1202, %v3005, 0
        %3054 = vmatprep.subr.bf16.mxu0 0
        %3055 = vmatpush1.bf16.xpose.msra.mxu0 %v3052
        %3056 = vmatprep.subr.bf16.mxu0 0
        %3057 = vmatpush1.bf16.xpose.msra.mxu0 %v3049
        %3058 = vmatprep.subr.bf16.mxu0 0
        %3059 = vmatpush1.bf16.xpose.msra.mxu0 %v3046
        %3060 = vmatprep.subr.bf16.mxu0 0
        %3061 = vmatpush1.bf16.xpose.msra.mxu0 %v3043
        %3062 = vmatprep.subr.bf16.mxu0 0
        %3063 = vmatpush1.bf16.xpose.msra.mxu0 %v3040
        %3064 = vmatprep.subr.bf16.mxu0 0
        %3065 = vmatpush1.bf16.xpose.msra.mxu0 %v3037
        %3066 = vmatprep.subr.bf16.mxu0 0
        %3067 = vmatpush1.bf16.xpose.msra.mxu0 %v3034
        %3068 = vmatprep.subr.bf16.mxu0 0
        %3069 = vmatpush1.bf16.xpose.msra.mxu0 %v3031
        %3070 = vmatprep.subr.bf16.mxu0 0
        %3071 = vmatpush2.bf16.xpose.msra.mxu0 0
        %3072 = vmatprep.subr.bf16.mxu0 0
        %3073 = vmatpush2.bf16.xpose.msra.mxu0 0
        %3074 = vmatprep.subr.bf16.mxu0 0
        %3075 = vmatpush2.bf16.xpose.msra.mxu0 0
        %3076 = vmatprep.subr.bf16.mxu0 0
        %3077 = vmatpush2.bf16.xpose.msra.mxu0 0
        %3078 = vmatprep.subr.bf16.mxu0 0
        %3079 = vmatpush2.bf16.xpose.msra.mxu0 0
        %3080 = vmatprep.subr.bf16.mxu0 0
        %3081 = vmatpush2.bf16.xpose.msra.mxu0 0
        %3082 = vmatprep.subr.bf16.mxu0 0
        %3083 = vmatpush2.bf16.xpose.msra.mxu0 0
        %3084 = vmatprep.subr.bf16.mxu0 0
        %3085 = vmatpush2.bf16.xpose.msra.mxu0 0
        %3086 = vmatprep.mubr.bf16.mxu0 0
        %3087 = vmatmul.mubr.bf16.gmra.mxu0 %v3007
        %v3088 = vpop.f32.mrf.mxu0
        %v3089 = vadd.f32 %v1162, %v3088
        %v3090 = vpop.f32.mrf.mxu0
        %v3091 = vpop.f32.mrf.mxu0
        %v3092 = vadd.f32 %v1163, %v3091
        %v3093 = vpop.f32.mrf.mxu0
        %3094 = vmatprep.mubr.bf16.mxu0 0
        %3095 = vmatmul.mubr.bf16.gmra.mxu0 %v3010
        %v3096 = vpop.f32.mrf.mxu0
        %v3097 = vadd.f32 %v1164, %v3096
        %v3098 = vpop.f32.mrf.mxu0
        %v3099 = vpop.f32.mrf.mxu0
        %v3100 = vadd.f32 %v1165, %v3099
        %v3101 = vpop.f32.mrf.mxu0
        %3102 = vmatprep.mubr.bf16.mxu0 0
        %3103 = vmatmul.mubr.bf16.gmra.mxu0 %v3013
        %v3104 = vpop.f32.mrf.mxu0
        %v3105 = vadd.f32 %v1166, %v3104
        %v3106 = vpop.f32.mrf.mxu0
        %v3107 = vpop.f32.mrf.mxu0
        %v3108 = vadd.f32 %v1167, %v3107
        %v3109 = vpop.f32.mrf.mxu0
        %3110 = vmatprep.mubr.bf16.mxu0 0
        %3111 = vmatmul.mubr.bf16.gmra.mxu0 %v3016
        %v3112 = vpop.f32.mrf.mxu0
        %v3113 = vadd.f32 %v1168, %v3112
        %v3114 = vpop.f32.mrf.mxu0
        %v3115 = vpop.f32.mrf.mxu0
        %v3116 = vadd.f32 %v1169, %v3115
        %v3117 = vpop.f32.mrf.mxu0
        %3118 = vmatprep.mubr.bf16.mxu0 0
        %3119 = vmatmul.mubr.bf16.gmra.mxu0 %v3019
        %v3120 = vpop.f32.mrf.mxu0
        %v3121 = vadd.f32 %v1170, %v3120
        %v3122 = vpop.f32.mrf.mxu0
        %v3123 = vpop.f32.mrf.mxu0
        %v3124 = vadd.f32 %v1171, %v3123
        %v3125 = vpop.f32.mrf.mxu0
        %3126 = vmatprep.mubr.bf16.mxu0 0
        %3127 = vmatmul.mubr.bf16.gmra.mxu0 %v3022
        %v3128 = vpop.f32.mrf.mxu0
        %v3129 = vadd.f32 %v1172, %v3128
        %v3130 = vpop.f32.mrf.mxu0
        %v3131 = vpop.f32.mrf.mxu0
        %v3132 = vadd.f32 %v1173, %v3131
        %v3133 = vpop.f32.mrf.mxu0
        %3134 = vmatprep.mubr.bf16.mxu0 0
        %3135 = vmatmul.mubr.bf16.gmra.mxu0 %v3025
        %v3136 = vpop.f32.mrf.mxu0
        %v3137 = vadd.f32 %v1174, %v3136
        %v3138 = vpop.f32.mrf.mxu0
        %v3139 = vpop.f32.mrf.mxu0
        %v3140 = vadd.f32 %v1175, %v3139
        %v3141 = vpop.f32.mrf.mxu0
        %3142 = vmatprep.mubr.bf16.mxu0 0
        %3143 = vmatmul.mubr.bf16.gmra.mxu0 %v3028
        %v3144 = vpop.f32.mrf.mxu0
        %v3145 = vadd.f32 %v1176, %v3144
        %v3146 = vpop.f32.mrf.mxu0
        %v3147 = vpop.f32.mrf.mxu0
        %v3148 = vadd.f32 %v1177, %v3147
        %v3149 = vpop.f32.mrf.mxu0
        %3150 = vdwg.mxu0
        %3151 = vmax.xlane.f32.xlu0 %v3089
        %v3152 = vpop.xlane.xlu0 %3151
        %3153 = vmax.xlane.f32.xlu0 %v3092
        %v3154 = vpop.xlane.xlu0 %3153
        %3155 = vmax.xlane.f32.xlu0 %v3097
        %v3156 = vpop.xlane.xlu0 %3155
        %3157 = vmax.xlane.f32.xlu0 %v3100
        %v3158 = vpop.xlane.xlu0 %3157
        %3159 = vmax.xlane.f32.xlu0 %v3105
        %v3160 = vpop.xlane.xlu0 %3159
        %3161 = vmax.xlane.f32.xlu0 %v3108
        %v3162 = vpop.xlane.xlu0 %3161
        %3163 = vmax.xlane.f32.xlu0 %v3113
        %v3164 = vpop.xlane.xlu0 %3163
        %3165 = vmax.xlane.f32.xlu0 %v3116
        %v3166 = vpop.xlane.xlu0 %3165
        %3167 = vmax.xlane.f32.xlu0 %v3121
        %v3168 = vpop.xlane.xlu0 %3167
        %3169 = vmax.xlane.f32.xlu0 %v3124
        %v3170 = vpop.xlane.xlu0 %3169
        %3171 = vmax.xlane.f32.xlu0 %v3129
        %v3172 = vpop.xlane.xlu0 %3171
        %3173 = vmax.xlane.f32.xlu0 %v3132
        %v3174 = vpop.xlane.xlu0 %3173
        %3175 = vmax.xlane.f32.xlu0 %v3137
        %v3176 = vpop.xlane.xlu0 %3175
        %3177 = vmax.xlane.f32.xlu0 %v3140
        %v3178 = vpop.xlane.xlu0 %3177
        %3179 = vmax.xlane.f32.xlu0 %v3145
        %v3180 = vpop.xlane.xlu0 %3179
        %3181 = vmax.xlane.f32.xlu0 %v3148
        %v3182 = vpop.xlane.xlu0 %3181
        %v3183 = vsub.f32 %v3089, %v3152
        %v3184 = vsub.f32 %v3092, %v3154
        %v3185 = vsub.f32 %v3097, %v3156
        %v3186 = vsub.f32 %v3100, %v3158
        %v3187 = vsub.f32 %v3105, %v3160
        %v3188 = vsub.f32 %v3108, %v3162
        %v3189 = vsub.f32 %v3113, %v3164
        %v3190 = vsub.f32 %v3116, %v3166
        %v3191 = vsub.f32 %v3121, %v3168
        %v3192 = vsub.f32 %v3124, %v3170
        %v3193 = vsub.f32 %v3129, %v3172
        %v3194 = vsub.f32 %v3132, %v3174
        %v3195 = vsub.f32 %v3137, %v3176
        %v3196 = vsub.f32 %v3140, %v3178
        %v3197 = vsub.f32 %v3145, %v3180
        %v3198 = vsub.f32 %v3148, %v3182
        %v3199 = vmul.f32 %v3183, 1.442695
        %v3200 = vpow.pop %v3199
        %v3201 = vmul.f32 %v3184, 1.442695
        %v3202 = vpow.pop %v3201
        %v3203 = vmul.f32 %v3185, 1.442695
        %v3204 = vpow.pop %v3203
        %v3205 = vmul.f32 %v3186, 1.442695
        %v3206 = vpow.pop %v3205
        %v3207 = vmul.f32 %v3187, 1.442695
        %v3208 = vpow.pop %v3207
        %v3209 = vmul.f32 %v3188, 1.442695
        %v3210 = vpow.pop %v3209
        %v3211 = vmul.f32 %v3189, 1.442695
        %v3212 = vpow.pop %v3211
        %v3213 = vmul.f32 %v3190, 1.442695
        %v3214 = vpow.pop %v3213
        %v3215 = vmul.f32 %v3191, 1.442695
        %v3216 = vpow.pop %v3215
        %v3217 = vmul.f32 %v3192, 1.442695
        %v3218 = vpow.pop %v3217
        %v3219 = vmul.f32 %v3193, 1.442695
        %v3220 = vpow.pop %v3219
        %v3221 = vmul.f32 %v3194, 1.442695
        %v3222 = vpow.pop %v3221
        %v3223 = vmul.f32 %v3195, 1.442695
        %v3224 = vpow.pop %v3223
        %v3225 = vmul.f32 %v3196, 1.442695
        %v3226 = vpow.pop %v3225
        %v3227 = vmul.f32 %v3197, 1.442695
        %v3228 = vpow.pop %v3227
        %v3229 = vmul.f32 %v3198, 1.442695
        %v3230 = vpow.pop %v3229
        %3231 = vadd.xlane.f32.xlu0 %v3200
        %v3232 = vpop.xlane.xlu0 %3231
        %3233 = vadd.xlane.f32.xlu0 %v3202
        %v3234 = vpop.xlane.xlu0 %3233
        %3235 = vadd.xlane.f32.xlu0 %v3204
        %v3236 = vpop.xlane.xlu0 %3235
        %3237 = vadd.xlane.f32.xlu0 %v3206
        %v3238 = vpop.xlane.xlu0 %3237
        %3239 = vadd.xlane.f32.xlu0 %v3208
        %v3240 = vpop.xlane.xlu0 %3239
        %3241 = vadd.xlane.f32.xlu0 %v3210
        %v3242 = vpop.xlane.xlu0 %3241
        %3243 = vadd.xlane.f32.xlu0 %v3212
        %v3244 = vpop.xlane.xlu0 %3243
        %3245 = vadd.xlane.f32.xlu0 %v3214
        %v3246 = vpop.xlane.xlu0 %3245
        %3247 = vadd.xlane.f32.xlu0 %v3216
        %v3248 = vpop.xlane.xlu0 %3247
        %3249 = vadd.xlane.f32.xlu0 %v3218
        %v3250 = vpop.xlane.xlu0 %3249
        %3251 = vadd.xlane.f32.xlu0 %v3220
        %v3252 = vpop.xlane.xlu0 %3251
        %3253 = vadd.xlane.f32.xlu0 %v3222
        %v3254 = vpop.xlane.xlu0 %3253
        %3255 = vadd.xlane.f32.xlu0 %v3224
        %v3256 = vpop.xlane.xlu0 %3255
        %3257 = vadd.xlane.f32.xlu0 %v3226
        %v3258 = vpop.xlane.xlu0 %3257
        %3259 = vadd.xlane.f32.xlu0 %v3228
        %v3260 = vpop.xlane.xlu0 %3259
        %3261 = vadd.xlane.f32.xlu0 %v3230
        %v3262 = vpop.xlane.xlu0 %3261
        %v3263 = vpack.c.bf16 %v3202, %v3200
        %v3264 = vpack.c.bf16 %v3206, %v3204
        %v3265 = vpack.c.bf16 %v3210, %v3208
        %v3266 = vpack.c.bf16 %v3214, %v3212
        %v3267 = vpack.c.bf16 %v3218, %v3216
        %v3268 = vpack.c.bf16 %v3222, %v3220
        %v3269 = vpack.c.bf16 %v3226, %v3224
        %v3270 = vpack.c.bf16 %v3230, %v3228
        %3271 = vrot.lane.b32.xlu0 %v1194, 32
        %v3272 = vpop.permute.xlu0 %3271
        %3273 = vrot.lane.b32.xlu0 %v1195, 32
        %v3274 = vpop.permute.xlu0 %3273
        %3275 = vrot.lane.b32.xlu0 %v1196, 32
        %v3276 = vpop.permute.xlu0 %3275
        %3277 = vrot.lane.b32.xlu0 %v1197, 32
        %v3278 = vpop.permute.xlu0 %3277
        %3279 = vrot.lane.b32.xlu0 %v1198, 32
        %v3280 = vpop.permute.xlu0 %3279
        %3281 = vrot.lane.b32.xlu0 %v1199, 32
        %v3282 = vpop.permute.xlu0 %3281
        %3283 = vrot.lane.b32.xlu0 %v1200, 32
        %v3284 = vpop.permute.xlu0 %3283
        %3285 = vrot.lane.b32.xlu0 %v1201, 32
        %v3286 = vpop.permute.xlu0 %3285
        %3295 = vmatprep.subr.bf16.mxu0 0
        %3296 = vmatpush1.bf16.msra.mxu0 %v3286
        %3297 = vmatprep.subr.bf16.mxu0 0
        %3298 = vmatpush1.bf16.msra.mxu0 %v3284
        %3299 = vmatprep.subr.bf16.mxu0 0
        %3300 = vmatpush1.bf16.msra.mxu0 %v3282
        %3301 = vmatprep.subr.bf16.mxu0 0
        %3302 = vmatpush1.bf16.msra.mxu0 %v3280
        %3303 = vmatprep.subr.bf16.mxu0 0
        %3304 = vmatpush1.bf16.msra.mxu0 %v3278
        %3305 = vmatprep.subr.bf16.mxu0 0
        %3306 = vmatpush1.bf16.msra.mxu0 %v3276
        %3307 = vmatprep.subr.bf16.mxu0 0
        %3308 = vmatpush1.bf16.msra.mxu0 %v3274
        %3309 = vmatprep.subr.bf16.mxu0 0
        %3310 = vmatpush1.bf16.msra.mxu0 %v3272
        %3311 = vmatprep.subr.bf16.mxu0 0
        %3312 = vmatpush2.bf16.msra.mxu0 0
        %3313 = vmatprep.subr.bf16.mxu0 0
        %3314 = vmatpush2.bf16.msra.mxu0 0
        %3315 = vmatprep.subr.bf16.mxu0 0
        %3316 = vmatpush2.bf16.msra.mxu0 0
        %3317 = vmatprep.subr.bf16.mxu0 0
        %3318 = vmatpush2.bf16.msra.mxu0 0
        %3319 = vmatprep.subr.bf16.mxu0 0
        %3320 = vmatpush2.bf16.msra.mxu0 0
        %3321 = vmatprep.subr.bf16.mxu0 0
        %3322 = vmatpush2.bf16.msra.mxu0 0
        %3323 = vmatprep.subr.bf16.mxu0 0
        %3324 = vmatpush2.bf16.msra.mxu0 0
        %3325 = vmatprep.subr.bf16.mxu0 0
        %3326 = vmatpush2.bf16.msra.mxu0 0
        %3327 = vmatprep.mubr.bf16.mxu0 0
        %3328 = vmatmul.mubr.bf16.gmra.mxu0 %v3263
        %v3329 = vpop.f32.mrf.mxu0
        %v3330 = vadd.f32 0.0, %v3329
        %v3331 = vpop.f32.mrf.mxu0
        %v3332 = vpop.f32.mrf.mxu0
        %v3333 = vadd.f32 0.0, %v3332
        %v3334 = vpop.f32.mrf.mxu0
        %3335 = vmatprep.mubr.bf16.mxu0 0
        %3336 = vmatmul.mubr.bf16.gmra.mxu0 %v3264
        %v3337 = vpop.f32.mrf.mxu0
        %v3338 = vadd.f32 0.0, %v3337
        %v3339 = vpop.f32.mrf.mxu0
        %v3340 = vpop.f32.mrf.mxu0
        %v3341 = vadd.f32 0.0, %v3340
        %v3342 = vpop.f32.mrf.mxu0
        %3343 = vmatprep.mubr.bf16.mxu0 0
        %3344 = vmatmul.mubr.bf16.gmra.mxu0 %v3265
        %v3345 = vpop.f32.mrf.mxu0
        %v3346 = vadd.f32 0.0, %v3345
        %v3347 = vpop.f32.mrf.mxu0
        %v3348 = vpop.f32.mrf.mxu0
        %v3349 = vadd.f32 0.0, %v3348
        %v3350 = vpop.f32.mrf.mxu0
        %3351 = vmatprep.mubr.bf16.mxu0 0
        %3352 = vmatmul.mubr.bf16.gmra.mxu0 %v3266
        %v3353 = vpop.f32.mrf.mxu0
        %v3354 = vadd.f32 0.0, %v3353
        %v3355 = vpop.f32.mrf.mxu0
        %v3356 = vpop.f32.mrf.mxu0
        %v3357 = vadd.f32 0.0, %v3356
        %v3358 = vpop.f32.mrf.mxu0
        %3359 = vmatprep.mubr.bf16.mxu0 0
        %3360 = vmatmul.mubr.bf16.gmra.mxu0 %v3267
        %v3361 = vpop.f32.mrf.mxu0
        %v3362 = vadd.f32 0.0, %v3361
        %v3363 = vpop.f32.mrf.mxu0
        %v3364 = vpop.f32.mrf.mxu0
        %v3365 = vadd.f32 0.0, %v3364
        %v3366 = vpop.f32.mrf.mxu0
        %3367 = vmatprep.mubr.bf16.mxu0 0
        %3368 = vmatmul.mubr.bf16.gmra.mxu0 %v3268
        %v3369 = vpop.f32.mrf.mxu0
        %v3370 = vadd.f32 0.0, %v3369
        %v3371 = vpop.f32.mrf.mxu0
        %v3372 = vpop.f32.mrf.mxu0
        %v3373 = vadd.f32 0.0, %v3372
        %v3374 = vpop.f32.mrf.mxu0
        %3375 = vmatprep.mubr.bf16.mxu0 0
        %3376 = vmatmul.mubr.bf16.gmra.mxu0 %v3269
        %v3377 = vpop.f32.mrf.mxu0
        %v3378 = vadd.f32 0.0, %v3377
        %v3379 = vpop.f32.mrf.mxu0
        %v3380 = vpop.f32.mrf.mxu0
        %v3381 = vadd.f32 0.0, %v3380
        %v3382 = vpop.f32.mrf.mxu0
        %3383 = vmatprep.mubr.bf16.mxu0 0
        %3384 = vmatmul.mubr.bf16.gmra.mxu0 %v3270
        %v3385 = vpop.f32.mrf.mxu0
        %v3386 = vadd.f32 0.0, %v3385
        %v3387 = vpop.f32.mrf.mxu0
        %v3388 = vpop.f32.mrf.mxu0
        %v3389 = vadd.f32 0.0, %v3388
        %v3390 = vpop.f32.mrf.mxu0
        %3391 = vdwg.mxu0
        %v3392 = vrcp.pop %v3232
        %v3393 = vrcp.pop %v3234
        %v3394 = vrcp.pop %v3236
        %v3395 = vrcp.pop %v3238
        %v3396 = vrcp.pop %v3240
        %v3397 = vrcp.pop %v3242
        %v3398 = vrcp.pop %v3244
        %v3399 = vrcp.pop %v3246
        %v3400 = vrcp.pop %v3248
        %v3401 = vrcp.pop %v3250
        %v3402 = vrcp.pop %v3252
        %v3403 = vrcp.pop %v3254
        %v3404 = vrcp.pop %v3256
        %v3405 = vrcp.pop %v3258
        %v3406 = vrcp.pop %v3260
        %v3407 = vrcp.pop %v3262
        %v3408 = vmul.f32 %v3330, %v3392
        %v3409 = vmul.f32 %v3333, %v3393
        %v3410 = vmul.f32 %v3338, %v3394
        %v3411 = vmul.f32 %v3341, %v3395
        %v3412 = vmul.f32 %v3346, %v3396
        %v3413 = vmul.f32 %v3349, %v3397
        %v3414 = vmul.f32 %v3354, %v3398
        %v3415 = vmul.f32 %v3357, %v3399
        %v3416 = vmul.f32 %v3362, %v3400
        %v3417 = vmul.f32 %v3365, %v3401
        %v3418 = vmul.f32 %v3370, %v3402
        %v3419 = vmul.f32 %v3373, %v3403
        %v3420 = vmul.f32 %v3378, %v3404
        %v3421 = vmul.f32 %v3381, %v3405
        %v3422 = vmul.f32 %v3386, %v3406
        %v3423 = vmul.f32 %v3389, %v3407
        %v3424 = vpack.c.bf16 %v3409, %v3408
        %v3425 = vpack.c.bf16 %v3411, %v3410
        %v3426 = vpack.c.bf16 %v3413, %v3412
        %v3427 = vpack.c.bf16 %v3415, %v3414
        %v3428 = vpack.c.bf16 %v3417, %v3416
        %v3429 = vpack.c.bf16 %v3419, %v3418
        %v3430 = vpack.c.bf16 %v3421, %v3420
        %v3431 = vpack.c.bf16 %v3423, %v3422
        %s3432 = scalar_lea.vmem [#allocation8], 48
        %v3433 = vld [vmem:[%s3432] sm:$0xf]
        %v3434 = vld [vmem:[%s3432 + $0x4] sm:$0xf]
        %v3435 = vld [vmem:[%s3432 + $0x8] sm:$0xf]
        %v3436 = vld [vmem:[%s3432 + $0xc] sm:$0xf]
        %v3441 = vunpack.c.l.b16 %v3433
        %v3442 = vunpack.c.l.b16 %v3434
        %v3443 = vunpack.c.l.b16 %v3435
        %v3444 = vunpack.c.l.b16 %v3436
        %v3445 = vpack.c.b16 %v3442, %v3441
        %v3446 = vpack.c.b16 %v3444, %v3443
        %v3450 = vsel %vm1202, %v3424, 0
        %v3453 = vsel %vm1202, %v3425, 0
        %v3456 = vsel %vm1202, %v3426, 0
        %v3459 = vsel %vm1202, %v3427, 0
        %v3462 = vsel %vm1202, %v3428, 0
        %v3465 = vsel %vm1202, %v3429, 0
        %v3468 = vsel %vm1202, %v3430, 0
        %v3471 = vsel %vm1202, %v3431, 0
        %3473 = vmatprep.subr.bf16.mxu0 0
        %3474 = vmatpush1.bf16.msra.mxu0 0
        %3475 = vmatprep.subr.bf16.mxu0 0
        %3476 = vmatpush1.bf16.msra.mxu0 0
        %3477 = vmatprep.subr.bf16.mxu0 0
        %3478 = vmatpush1.bf16.msra.mxu0 0
        %3479 = vmatprep.subr.bf16.mxu0 0
        %3480 = vmatpush1.bf16.msra.mxu0 0
        %3481 = vmatprep.subr.bf16.mxu0 0
        %3482 = vmatpush1.bf16.msra.mxu0 0
        %3483 = vmatprep.subr.bf16.mxu0 0
        %3484 = vmatpush1.bf16.msra.mxu0 0
        %3485 = vmatprep.subr.bf16.mxu0 0
        %3486 = vmatpush1.bf16.msra.mxu0 %v3446
        %3487 = vmatprep.subr.bf16.mxu0 0
        %3488 = vmatpush1.bf16.msra.mxu0 %v3445
        %3489 = vmatprep.subr.bf16.mxu0 0
        %3490 = vmatpush2.bf16.msra.mxu0 0
        %3491 = vmatprep.subr.bf16.mxu0 0
        %3492 = vmatpush2.bf16.msra.mxu0 0
        %3493 = vmatprep.subr.bf16.mxu0 0
        %3494 = vmatpush2.bf16.msra.mxu0 0
        %3495 = vmatprep.subr.bf16.mxu0 0
        %3496 = vmatpush2.bf16.msra.mxu0 0
        %3497 = vmatprep.subr.bf16.mxu0 0
        %3498 = vmatpush2.bf16.msra.mxu0 0
        %3499 = vmatprep.subr.bf16.mxu0 0
        %3500 = vmatpush2.bf16.msra.mxu0 0
        %3501 = vmatprep.subr.bf16.mxu0 0
        %3502 = vmatpush2.bf16.msra.mxu0 0
        %3503 = vmatprep.subr.bf16.mxu0 0
        %3504 = vmatpush2.bf16.msra.mxu0 0
        %3505 = vmatprep.mubr.bf16.mxu0 0
        %3506 = vmatmul.mubr.bf16.gmra.mxu0 %v3450
        %v3507 = vpop.f32.mrf.mxu0
        %v3508 = vadd.f32 0.0, %v3507
        %v3509 = vpop.f32.mrf.mxu0
        %v3510 = vpop.f32.mrf.mxu0
        %v3511 = vadd.f32 0.0, %v3510
        %v3512 = vpop.f32.mrf.mxu0
        %3513 = vmatprep.mubr.bf16.mxu0 0
        %3514 = vmatmul.mubr.bf16.gmra.mxu0 %v3453
        %v3515 = vpop.f32.mrf.mxu0
        %v3516 = vadd.f32 0.0, %v3515
        %v3517 = vpop.f32.mrf.mxu0
        %v3518 = vpop.f32.mrf.mxu0
        %v3519 = vadd.f32 0.0, %v3518
        %v3520 = vpop.f32.mrf.mxu0
        %3521 = vmatprep.mubr.bf16.mxu0 0
        %3522 = vmatmul.mubr.bf16.gmra.mxu0 %v3456
        %v3523 = vpop.f32.mrf.mxu0
        %v3524 = vadd.f32 0.0, %v3523
        %v3525 = vpop.f32.mrf.mxu0
        %v3526 = vpop.f32.mrf.mxu0
        %v3527 = vadd.f32 0.0, %v3526
        %v3528 = vpop.f32.mrf.mxu0
        %3529 = vmatprep.mubr.bf16.mxu0 0
        %3530 = vmatmul.mubr.bf16.gmra.mxu0 %v3459
        %v3531 = vpop.f32.mrf.mxu0
        %v3532 = vadd.f32 0.0, %v3531
        %v3533 = vpop.f32.mrf.mxu0
        %v3534 = vpop.f32.mrf.mxu0
        %v3535 = vadd.f32 0.0, %v3534
        %v3536 = vpop.f32.mrf.mxu0
        %3537 = vmatprep.mubr.bf16.mxu0 0
        %3538 = vmatmul.mubr.bf16.gmra.mxu0 %v3462
        %v3539 = vpop.f32.mrf.mxu0
        %v3540 = vadd.f32 0.0, %v3539
        %v3541 = vpop.f32.mrf.mxu0
        %v3542 = vpop.f32.mrf.mxu0
        %v3543 = vadd.f32 0.0, %v3542
        %v3544 = vpop.f32.mrf.mxu0
        %3545 = vmatprep.mubr.bf16.mxu0 0
        %3546 = vmatmul.mubr.bf16.gmra.mxu0 %v3465
        %v3547 = vpop.f32.mrf.mxu0
        %v3548 = vadd.f32 0.0, %v3547
        %v3549 = vpop.f32.mrf.mxu0
        %v3550 = vpop.f32.mrf.mxu0
        %v3551 = vadd.f32 0.0, %v3550
        %v3552 = vpop.f32.mrf.mxu0
        %3553 = vmatprep.mubr.bf16.mxu0 0
        %3554 = vmatmul.mubr.bf16.gmra.mxu0 %v3468
        %v3555 = vpop.f32.mrf.mxu0
        %v3556 = vadd.f32 0.0, %v3555
        %v3557 = vpop.f32.mrf.mxu0
        %v3558 = vpop.f32.mrf.mxu0
        %v3559 = vadd.f32 0.0, %v3558
        %v3560 = vpop.f32.mrf.mxu0
        %3561 = vmatprep.mubr.bf16.mxu0 0
        %3562 = vmatmul.mubr.bf16.gmra.mxu0 %v3471
        %v3563 = vpop.f32.mrf.mxu0
        %v3564 = vadd.f32 0.0, %v3563
        %v3565 = vpop.f32.mrf.mxu0
        %v3566 = vpop.f32.mrf.mxu0
        %v3567 = vadd.f32 0.0, %v3566
        %v3568 = vpop.f32.mrf.mxu0
        %3569 = vdwg.mxu0
        %v3570 = vadd.f32 %v2958, %v3508
        %v3571 = vadd.f32 %v2959, %v3511
        %v3572 = vadd.f32 %v2960, %v3516
        %v3573 = vadd.f32 %v2961, %v3519
        %v3574 = vadd.f32 %v2962, %v3524
        %v3575 = vadd.f32 %v2963, %v3527
        %v3576 = vadd.f32 %v2964, %v3532
        %v3577 = vadd.f32 %v2965, %v3535
        %v3578 = vadd.f32 %v2966, %v3540
        %v3579 = vadd.f32 %v2967, %v3543
        %v3580 = vadd.f32 %v2968, %v3548
        %v3581 = vadd.f32 %v2969, %v3551
        %v3582 = vadd.f32 %v2970, %v3556
        %v3583 = vadd.f32 %v2971, %v3559
        %v3584 = vadd.f32 %v2972, %v3564
        %v3585 = vadd.f32 %v2973, %v3567
        %v3586 = vadd.f32 %v545, %v3570
        %v3587 = vadd.f32 %v546, %v3571
        %v3588 = vadd.f32 %v547, %v3572
        %v3589 = vadd.f32 %v548, %v3573
        %v3590 = vadd.f32 %v549, %v3574
        %v3591 = vadd.f32 %v550, %v3575
        %v3592 = vadd.f32 %v551, %v3576
        %v3593 = vadd.f32 %v552, %v3577
        %v3594 = vadd.f32 %v553, %v3578
        %v3595 = vadd.f32 %v554, %v3579
        %v3596 = vadd.f32 %v555, %v3580
        %v3597 = vadd.f32 %v556, %v3581
        %v3598 = vadd.f32 %v557, %v3582
        %v3599 = vadd.f32 %v558, %v3583
        %v3600 = vadd.f32 %v559, %v3584
        %v3601 = vadd.f32 %v560, %v3585
        %v3602 = vld [vmem:[%s7] sm:$0x1]
        %v3604 = vlaneseq
        %v3605 = vshrl.u32 %v3604, 7
        %v3606 = vsub.s32 0, %v3605
        %v3607 = vrot.slane %v3602, %v3606
        %v3609 = vadd.f32 %v3586, %v3607
        %v3610 = vadd.f32 %v3587, %v3607
        %v3611 = vadd.f32 %v3588, %v3607
        %v3612 = vadd.f32 %v3589, %v3607
        %v3613 = vadd.f32 %v3590, %v3607
        %v3614 = vadd.f32 %v3591, %v3607
        %v3615 = vadd.f32 %v3592, %v3607
        %v3616 = vadd.f32 %v3593, %v3607
        %v3617 = vadd.f32 %v3594, %v3607
        %v3618 = vadd.f32 %v3595, %v3607
        %v3619 = vadd.f32 %v3596, %v3607
        %v3620 = vadd.f32 %v3597, %v3607
        %v3621 = vadd.f32 %v3598, %v3607
        %v3622 = vadd.f32 %v3599, %v3607
        %v3623 = vadd.f32 %v3600, %v3607
        %v3624 = vadd.f32 %v3601, %v3607
        %v3625 = vld [vmem:[%s3] sm:$0x1]
        %v3626 = vld [vmem:[#allocation5] sm:$0x1]
        %3627 = vadd.xlane.f32.xlu0 %v3609
        %v3628 = vpop.xlane.xlu0 %3627
        %3629 = vadd.xlane.f32.xlu0 %v3610
        %v3630 = vpop.xlane.xlu0 %3629
        %3631 = vadd.xlane.f32.xlu0 %v3611
        %v3632 = vpop.xlane.xlu0 %3631
        %3633 = vadd.xlane.f32.xlu0 %v3612
        %v3634 = vpop.xlane.xlu0 %3633
        %3635 = vadd.xlane.f32.xlu0 %v3613
        %v3636 = vpop.xlane.xlu0 %3635
        %3637 = vadd.xlane.f32.xlu0 %v3614
        %v3638 = vpop.xlane.xlu0 %3637
        %3639 = vadd.xlane.f32.xlu0 %v3615
        %v3640 = vpop.xlane.xlu0 %3639
        %3641 = vadd.xlane.f32.xlu0 %v3616
        %v3642 = vpop.xlane.xlu0 %3641
        %3643 = vadd.xlane.f32.xlu0 %v3617
        %v3644 = vpop.xlane.xlu0 %3643
        %3645 = vadd.xlane.f32.xlu0 %v3618
        %v3646 = vpop.xlane.xlu0 %3645
        %3647 = vadd.xlane.f32.xlu0 %v3619
        %v3648 = vpop.xlane.xlu0 %3647
        %3649 = vadd.xlane.f32.xlu0 %v3620
        %v3650 = vpop.xlane.xlu0 %3649
        %3651 = vadd.xlane.f32.xlu0 %v3621
        %v3652 = vpop.xlane.xlu0 %3651
        %3653 = vadd.xlane.f32.xlu0 %v3622
        %v3654 = vpop.xlane.xlu0 %3653
        %3655 = vadd.xlane.f32.xlu0 %v3623
        %v3656 = vpop.xlane.xlu0 %3655
        %3657 = vadd.xlane.f32.xlu0 %v3624
        %v3658 = vpop.xlane.xlu0 %3657
        %v3659 = vmul.f32 %v3628, %v595
        %v3660 = vmul.f32 %v3630, %v595
        %v3661 = vmul.f32 %v3632, %v595
        %v3662 = vmul.f32 %v3634, %v595
        %v3663 = vmul.f32 %v3636, %v595
        %v3664 = vmul.f32 %v3638, %v595
        %v3665 = vmul.f32 %v3640, %v595
        %v3666 = vmul.f32 %v3642, %v595
        %v3667 = vmul.f32 %v3644, %v595
        %v3668 = vmul.f32 %v3646, %v595
        %v3669 = vmul.f32 %v3648, %v595
        %v3670 = vmul.f32 %v3650, %v595
        %v3671 = vmul.f32 %v3652, %v595
        %v3672 = vmul.f32 %v3654, %v595
        %v3673 = vmul.f32 %v3656, %v595
        %v3674 = vmul.f32 %v3658, %v595
        %v3675 = vsub.f32 %v3609, %v3659
        %v3676 = vsub.f32 %v3610, %v3660
        %v3677 = vsub.f32 %v3611, %v3661
        %v3678 = vsub.f32 %v3612, %v3662
        %v3679 = vsub.f32 %v3613, %v3663
        %v3680 = vsub.f32 %v3614, %v3664
        %v3681 = vsub.f32 %v3615, %v3665
        %v3682 = vsub.f32 %v3616, %v3666
        %v3683 = vsub.f32 %v3617, %v3667
        %v3684 = vsub.f32 %v3618, %v3668
        %v3685 = vsub.f32 %v3619, %v3669
        %v3686 = vsub.f32 %v3620, %v3670
        %v3687 = vsub.f32 %v3621, %v3671
        %v3688 = vsub.f32 %v3622, %v3672
        %v3689 = vsub.f32 %v3623, %v3673
        %v3690 = vsub.f32 %v3624, %v3674
        %v3691 = vmul.f32 %v3675, %v3675
        %v3692 = vmul.f32 %v3676, %v3676
        %v3693 = vmul.f32 %v3677, %v3677
        %v3694 = vmul.f32 %v3678, %v3678
        %v3695 = vmul.f32 %v3679, %v3679
        %v3696 = vmul.f32 %v3680, %v3680
        %v3697 = vmul.f32 %v3681, %v3681
        %v3698 = vmul.f32 %v3682, %v3682
        %v3699 = vmul.f32 %v3683, %v3683
        %v3700 = vmul.f32 %v3684, %v3684
        %v3701 = vmul.f32 %v3685, %v3685
        %v3702 = vmul.f32 %v3686, %v3686
        %v3703 = vmul.f32 %v3687, %v3687
        %v3704 = vmul.f32 %v3688, %v3688
        %v3705 = vmul.f32 %v3689, %v3689
        %v3706 = vmul.f32 %v3690, %v3690
        %3707 = vadd.xlane.f32.xlu0 %v3691
        %v3708 = vpop.xlane.xlu0 %3707
        %3709 = vadd.xlane.f32.xlu0 %v3692
        %v3710 = vpop.xlane.xlu0 %3709
        %3711 = vadd.xlane.f32.xlu0 %v3693
        %v3712 = vpop.xlane.xlu0 %3711
        %3713 = vadd.xlane.f32.xlu0 %v3694
        %v3714 = vpop.xlane.xlu0 %3713
        %3715 = vadd.xlane.f32.xlu0 %v3695
        %v3716 = vpop.xlane.xlu0 %3715
        %3717 = vadd.xlane.f32.xlu0 %v3696
        %v3718 = vpop.xlane.xlu0 %3717
        %3719 = vadd.xlane.f32.xlu0 %v3697
        %v3720 = vpop.xlane.xlu0 %3719
        %3721 = vadd.xlane.f32.xlu0 %v3698
        %v3722 = vpop.xlane.xlu0 %3721
        %3723 = vadd.xlane.f32.xlu0 %v3699
        %v3724 = vpop.xlane.xlu0 %3723
        %3725 = vadd.xlane.f32.xlu0 %v3700
        %v3726 = vpop.xlane.xlu0 %3725
        %3727 = vadd.xlane.f32.xlu0 %v3701
        %v3728 = vpop.xlane.xlu0 %3727
        %3729 = vadd.xlane.f32.xlu0 %v3702
        %v3730 = vpop.xlane.xlu0 %3729
        %3731 = vadd.xlane.f32.xlu0 %v3703
        %v3732 = vpop.xlane.xlu0 %3731
        %3733 = vadd.xlane.f32.xlu0 %v3704
        %v3734 = vpop.xlane.xlu0 %3733
        %3735 = vadd.xlane.f32.xlu0 %v3705
        %v3736 = vpop.xlane.xlu0 %3735
        %3737 = vadd.xlane.f32.xlu0 %v3706
        %v3738 = vpop.xlane.xlu0 %3737
        %v3739 = vmul.f32 %v3708, %v595
        %v3740 = vmul.f32 %v3710, %v595
        %v3741 = vmul.f32 %v3712, %v595
        %v3742 = vmul.f32 %v3714, %v595
        %v3743 = vmul.f32 %v3716, %v595
        %v3744 = vmul.f32 %v3718, %v595
        %v3745 = vmul.f32 %v3720, %v595
        %v3746 = vmul.f32 %v3722, %v595
        %v3747 = vmul.f32 %v3724, %v595
        %v3748 = vmul.f32 %v3726, %v595
        %v3749 = vmul.f32 %v3728, %v595
        %v3750 = vmul.f32 %v3730, %v595
        %v3751 = vmul.f32 %v3732, %v595
        %v3752 = vmul.f32 %v3734, %v595
        %v3753 = vmul.f32 %v3736, %v595
        %v3754 = vmul.f32 %v3738, %v595
        %v3755 = vadd.f32 %v3739, 1e-05
        %v3756 = vadd.f32 %v3740, 1e-05
        %v3757 = vadd.f32 %v3741, 1e-05
        %v3758 = vadd.f32 %v3742, 1e-05
        %v3759 = vadd.f32 %v3743, 1e-05
        %v3760 = vadd.f32 %v3744, 1e-05
        %v3761 = vadd.f32 %v3745, 1e-05
        %v3762 = vadd.f32 %v3746, 1e-05
        %v3763 = vadd.f32 %v3747, 1e-05
        %v3764 = vadd.f32 %v3748, 1e-05
        %v3765 = vadd.f32 %v3749, 1e-05
        %v3766 = vadd.f32 %v3750, 1e-05
        %v3767 = vadd.f32 %v3751, 1e-05
        %v3768 = vadd.f32 %v3752, 1e-05
        %v3769 = vadd.f32 %v3753, 1e-05
        %v3770 = vadd.f32 %v3754, 1e-05
        %v3771 = vrsqrt.pop %v3755
        %v3772 = vrsqrt.pop %v3756
        %v3773 = vrsqrt.pop %v3757
        %v3774 = vrsqrt.pop %v3758
        %v3775 = vrsqrt.pop %v3759
        %v3776 = vrsqrt.pop %v3760
        %v3777 = vrsqrt.pop %v3761
        %v3778 = vrsqrt.pop %v3762
        %v3779 = vrsqrt.pop %v3763
        %v3780 = vrsqrt.pop %v3764
        %v3781 = vrsqrt.pop %v3765
        %v3782 = vrsqrt.pop %v3766
        %v3783 = vrsqrt.pop %v3767
        %v3784 = vrsqrt.pop %v3768
        %v3785 = vrsqrt.pop %v3769
        %v3786 = vrsqrt.pop %v3770
        %v3787 = vmul.f32 %v3675, %v3771
        %v3788 = vmul.f32 %v3676, %v3772
        %v3789 = vmul.f32 %v3677, %v3773
        %v3790 = vmul.f32 %v3678, %v3774
        %v3791 = vmul.f32 %v3679, %v3775
        %v3792 = vmul.f32 %v3680, %v3776
        %v3793 = vmul.f32 %v3681, %v3777
        %v3794 = vmul.f32 %v3682, %v3778
        %v3795 = vmul.f32 %v3683, %v3779
        %v3796 = vmul.f32 %v3684, %v3780
        %v3797 = vmul.f32 %v3685, %v3781
        %v3798 = vmul.f32 %v3686, %v3782
        %v3799 = vmul.f32 %v3687, %v3783
        %v3800 = vmul.f32 %v3688, %v3784
        %v3801 = vmul.f32 %v3689, %v3785
        %v3802 = vmul.f32 %v3690, %v3786
        %v3804 = vlaneseq
        %v3805 = vshrl.u32 %v3804, 7
        %v3806 = vsub.s32 0, %v3805
        %v3807 = vrot.slane %v3625, %v3806
        %v3809 = vmul.f32 %v3787, %v3807
        %v3810 = vmul.f32 %v3788, %v3807
        %v3811 = vmul.f32 %v3789, %v3807
        %v3812 = vmul.f32 %v3790, %v3807
        %v3813 = vmul.f32 %v3791, %v3807
        %v3814 = vmul.f32 %v3792, %v3807
        %v3815 = vmul.f32 %v3793, %v3807
        %v3816 = vmul.f32 %v3794, %v3807
        %v3817 = vmul.f32 %v3795, %v3807
        %v3818 = vmul.f32 %v3796, %v3807
        %v3819 = vmul.f32 %v3797, %v3807
        %v3820 = vmul.f32 %v3798, %v3807
        %v3821 = vmul.f32 %v3799, %v3807
        %v3822 = vmul.f32 %v3800, %v3807
        %v3823 = vmul.f32 %v3801, %v3807
        %v3824 = vmul.f32 %v3802, %v3807
        %v3826 = vlaneseq
        %v3827 = vshrl.u32 %v3826, 7
        %v3828 = vsub.s32 0, %v3827
        %v3829 = vrot.slane %v3626, %v3828
        %v3831 = vadd.f32 %v3809, %v3829
        %v3832 = vadd.f32 %v3810, %v3829
        %v3833 = vadd.f32 %v3811, %v3829
        %v3834 = vadd.f32 %v3812, %v3829
        %v3835 = vadd.f32 %v3813, %v3829
        %v3836 = vadd.f32 %v3814, %v3829
        %v3837 = vadd.f32 %v3815, %v3829
        %v3838 = vadd.f32 %v3816, %v3829
        %v3839 = vadd.f32 %v3817, %v3829
        %v3840 = vadd.f32 %v3818, %v3829
        %v3841 = vadd.f32 %v3819, %v3829
        %v3842 = vadd.f32 %v3820, %v3829
        %v3843 = vadd.f32 %v3821, %v3829
        %v3844 = vadd.f32 %v3822, %v3829
        %v3845 = vadd.f32 %v3823, %v3829
        %v3846 = vadd.f32 %v3824, %v3829
        %v3847 = vpack.c.bf16 %v3832, %v3831
        %v3848 = vpack.c.bf16 %v3834, %v3833
        %v3849 = vpack.c.bf16 %v3836, %v3835
        %v3850 = vpack.c.bf16 %v3838, %v3837
        %v3851 = vpack.c.bf16 %v3840, %v3839
        %v3852 = vpack.c.bf16 %v3842, %v3841
        %v3853 = vpack.c.bf16 %v3844, %v3843
        %v3854 = vpack.c.bf16 %v3846, %v3845
        %v3855 = vld [vmem:[#allocation10] sm:$0xff]
        %v3856 = vld [vmem:[#allocation10 + $0x8] sm:$0xff]
        %v3857 = vld [vmem:[#allocation10 + $0x10] sm:$0xff]
        %v3858 = vld [vmem:[#allocation10 + $0x18] sm:$0xff]
        %v3859 = vld [vmem:[#allocation10 + $0x20] sm:$0xff]
        %v3860 = vld [vmem:[#allocation10 + $0x28] sm:$0xff]
        %v3861 = vld [vmem:[#allocation10 + $0x30] sm:$0xff]
        %v3862 = vld [vmem:[#allocation10 + $0x38] sm:$0xff]
        %v3863 = vld [vmem:[#allocation10 + $0x40] sm:$0xff]
        %v3864 = vld [vmem:[#allocation10 + $0x48] sm:$0xff]
        %v3865 = vld [vmem:[#allocation10 + $0x50] sm:$0xff]
        %v3866 = vld [vmem:[#allocation10 + $0x58] sm:$0xff]
        %v3867 = vld [vmem:[#allocation10 + $0x60] sm:$0xff]
        %v3868 = vld [vmem:[#allocation10 + $0x68] sm:$0xff]
        %v3869 = vld [vmem:[#allocation10 + $0x70] sm:$0xff]
        %v3870 = vld [vmem:[#allocation10 + $0x78] sm:$0xff]
        %v3871 = vld [vmem:[#allocation10 + $0x80] sm:$0xff]
        %v3872 = vld [vmem:[#allocation10 + $0x88] sm:$0xff]
        %v3873 = vld [vmem:[#allocation10 + $0x90] sm:$0xff]
        %v3874 = vld [vmem:[#allocation10 + $0x98] sm:$0xff]
        %v3875 = vld [vmem:[#allocation10 + $0xa0] sm:$0xff]
        %v3876 = vld [vmem:[#allocation10 + $0xa8] sm:$0xff]
        %v3877 = vld [vmem:[#allocation10 + $0xb0] sm:$0xff]
        %v3878 = vld [vmem:[#allocation10 + $0xb8] sm:$0xff]
        %v3879 = vld [vmem:[#allocation10 + $0xc0] sm:$0xff]
        %v3880 = vld [vmem:[#allocation10 + $0xc8] sm:$0xff]
        %v3881 = vld [vmem:[#allocation10 + $0xd0] sm:$0xff]
        %v3882 = vld [vmem:[#allocation10 + $0xd8] sm:$0xff]
        %v3883 = vld [vmem:[#allocation10 + $0xe0] sm:$0xff]
        %v3884 = vld [vmem:[#allocation10 + $0xe8] sm:$0xff]
        %v3885 = vld [vmem:[#allocation10 + $0xf0] sm:$0xff]
        %v3886 = vld [vmem:[#allocation10 + $0xf8] sm:$0xff]
        %v3887 = vld [vmem:[%s9] sm:$0xf]
        %v3889 = vlaneseq
        %v3890 = vshrl.u32 %v3889, 7
        %v3891 = vsub.s32 0, %v3890
        %v3892 = vrot.slane %v3887, %v3891
        %v3893 = vlaneseq
        %v3894 = vshrl.u32 %v3893, 7
        %v3895 = vsub.s32 1, %v3894
        %v3896 = vrot.slane %v3887, %v3895
        %v3897 = vlaneseq
        %v3898 = vshrl.u32 %v3897, 7
        %v3899 = vsub.s32 2, %v3898
        %v3900 = vrot.slane %v3887, %v3899
        %v3901 = vlaneseq
        %v3902 = vshrl.u32 %v3901, 7
        %v3903 = vsub.s32 3, %v3902
        %v3904 = vrot.slane %v3887, %v3903
        %v3941 = vunpack.c.l.b16 %v3855
        %v3942 = vunpack.c.h.b16 %v3855
        %v3943 = vunpack.c.l.b16 %v3856
        %v3944 = vunpack.c.h.b16 %v3856
        %v3945 = vunpack.c.l.b16 %v3857
        %v3946 = vunpack.c.h.b16 %v3857
        %v3947 = vunpack.c.l.b16 %v3858
        %v3948 = vunpack.c.h.b16 %v3858
        %v3949 = vunpack.c.l.b16 %v3859
        %v3950 = vunpack.c.h.b16 %v3859
        %v3951 = vunpack.c.l.b16 %v3860
        %v3952 = vunpack.c.h.b16 %v3860
        %v3953 = vunpack.c.l.b16 %v3861
        %v3954 = vunpack.c.h.b16 %v3861
        %v3955 = vunpack.c.l.b16 %v3862
        %v3956 = vunpack.c.h.b16 %v3862
        %v3957 = vunpack.c.l.b16 %v3863
        %v3958 = vunpack.c.h.b16 %v3863
        %v3959 = vunpack.c.l.b16 %v3864
        %v3960 = vunpack.c.h.b16 %v3864
        %v3961 = vunpack.c.l.b16 %v3865
        %v3962 = vunpack.c.h.b16 %v3865
        %v3963 = vunpack.c.l.b16 %v3866
        %v3964 = vunpack.c.h.b16 %v3866
        %v3965 = vunpack.c.l.b16 %v3867
        %v3966 = vunpack.c.h.b16 %v3867
        %v3967 = vunpack.c.l.b16 %v3868
        %v3968 = vunpack.c.h.b16 %v3868
        %v3969 = vunpack.c.l.b16 %v3869
        %v3970 = vunpack.c.h.b16 %v3869
        %v3971 = vunpack.c.l.b16 %v3870
        %v3972 = vunpack.c.h.b16 %v3870
        %v3973 = vunpack.c.l.b16 %v3871
        %v3974 = vunpack.c.h.b16 %v3871
        %v3975 = vunpack.c.l.b16 %v3872
        %v3976 = vunpack.c.h.b16 %v3872
        %v3977 = vunpack.c.l.b16 %v3873
        %v3978 = vunpack.c.h.b16 %v3873
        %v3979 = vunpack.c.l.b16 %v3874
        %v3980 = vunpack.c.h.b16 %v3874
        %v3981 = vunpack.c.l.b16 %v3875
        %v3982 = vunpack.c.h.b16 %v3875
        %v3983 = vunpack.c.l.b16 %v3876
        %v3984 = vunpack.c.h.b16 %v3876
        %v3985 = vunpack.c.l.b16 %v3877
        %v3986 = vunpack.c.h.b16 %v3877
        %v3987 = vunpack.c.l.b16 %v3878
        %v3988 = vunpack.c.h.b16 %v3878
        %v3989 = vunpack.c.l.b16 %v3879
        %v3990 = vunpack.c.h.b16 %v3879
        %v3991 = vunpack.c.l.b16 %v3880
        %v3992 = vunpack.c.h.b16 %v3880
        %v3993 = vunpack.c.l.b16 %v3881
        %v3994 = vunpack.c.h.b16 %v3881
        %v3995 = vunpack.c.l.b16 %v3882
        %v3996 = vunpack.c.h.b16 %v3882
        %v3997 = vunpack.c.l.b16 %v3883
        %v3998 = vunpack.c.h.b16 %v3883
        %v3999 = vunpack.c.l.b16 %v3884
        %v4000 = vunpack.c.h.b16 %v3884
        %v4001 = vunpack.c.l.b16 %v3885
        %v4002 = vunpack.c.h.b16 %v3885
        %v4003 = vunpack.c.l.b16 %v3886
        %v4004 = vunpack.c.h.b16 %v3886
        %v4005 = vpack.c.b16 %v3945, %v3941
        %v4006 = vpack.c.b16 %v3946, %v3942
        %v4007 = vpack.c.b16 %v3947, %v3943
        %v4008 = vpack.c.b16 %v3948, %v3944
        %v4009 = vpack.c.b16 %v3953, %v3949
        %v4010 = vpack.c.b16 %v3954, %v3950
        %v4011 = vpack.c.b16 %v3955, %v3951
        %v4012 = vpack.c.b16 %v3956, %v3952
        %v4013 = vpack.c.b16 %v3961, %v3957
        %v4014 = vpack.c.b16 %v3962, %v3958
        %v4015 = vpack.c.b16 %v3963, %v3959
        %v4016 = vpack.c.b16 %v3964, %v3960
        %v4017 = vpack.c.b16 %v3969, %v3965
        %v4018 = vpack.c.b16 %v3970, %v3966
        %v4019 = vpack.c.b16 %v3971, %v3967
        %v4020 = vpack.c.b16 %v3972, %v3968
        %v4021 = vpack.c.b16 %v3977, %v3973
        %v4022 = vpack.c.b16 %v3978, %v3974
        %v4023 = vpack.c.b16 %v3979, %v3975
        %v4024 = vpack.c.b16 %v3980, %v3976
        %v4025 = vpack.c.b16 %v3985, %v3981
        %v4026 = vpack.c.b16 %v3986, %v3982
        %v4027 = vpack.c.b16 %v3987, %v3983
        %v4028 = vpack.c.b16 %v3988, %v3984
        %v4029 = vpack.c.b16 %v3993, %v3989
        %v4030 = vpack.c.b16 %v3994, %v3990
        %v4031 = vpack.c.b16 %v3995, %v3991
        %v4032 = vpack.c.b16 %v3996, %v3992
        %v4033 = vpack.c.b16 %v4001, %v3997
        %v4034 = vpack.c.b16 %v4002, %v3998
        %v4035 = vpack.c.b16 %v4003, %v3999
        %v4036 = vpack.c.b16 %v4004, %v4000
        %4069 = vmatprep.subr.bf16.mxu0 %v4034
        %4070 = vmatpush1.bf16.msra.mxu0 %v4033
        %4071 = vmatprep.subr.bf16.mxu0 %v4030
        %4072 = vmatpush1.bf16.msra.mxu0 %v4029
        %4073 = vmatprep.subr.bf16.mxu0 %v4026
        %4074 = vmatpush1.bf16.msra.mxu0 %v4025
        %4075 = vmatprep.subr.bf16.mxu0 %v4022
        %4076 = vmatpush1.bf16.msra.mxu0 %v4021
        %4077 = vmatprep.subr.bf16.mxu0 %v4018
        %4078 = vmatpush1.bf16.msra.mxu0 %v4017
        %4079 = vmatprep.subr.bf16.mxu0 %v4014
        %4080 = vmatpush1.bf16.msra.mxu0 %v4013
        %4081 = vmatprep.subr.bf16.mxu0 %v4010
        %4082 = vmatpush1.bf16.msra.mxu0 %v4009
        %4083 = vmatprep.subr.bf16.mxu0 %v4006
        %4084 = vmatpush1.bf16.msra.mxu0 %v4005
        %4085 = vmatprep.subr.bf16.mxu0 0
        %4086 = vmatpush2.bf16.msra.mxu0 0
        %4087 = vmatprep.subr.bf16.mxu0 0
        %4088 = vmatpush2.bf16.msra.mxu0 0
        %4089 = vmatprep.subr.bf16.mxu0 0
        %4090 = vmatpush2.bf16.msra.mxu0 0
        %4091 = vmatprep.subr.bf16.mxu0 0
        %4092 = vmatpush2.bf16.msra.mxu0 0
        %4093 = vmatprep.subr.bf16.mxu0 0
        %4094 = vmatpush2.bf16.msra.mxu0 0
        %4095 = vmatprep.subr.bf16.mxu0 0
        %4096 = vmatpush2.bf16.msra.mxu0 0
        %4097 = vmatprep.subr.bf16.mxu0 0
        %4098 = vmatpush2.bf16.msra.mxu0 0
        %4099 = vmatprep.subr.bf16.mxu0 0
        %4100 = vmatpush2.bf16.msra.mxu0 0
        %4101 = vmatprep.mubr.bf16.mxu0 0
        %4102 = vmatmul.mubr.bf16.gmra.mxu0 %v3847
        %v4103 = vpop.f32.mrf.mxu0
        %v4104 = vadd.f32 %v3892, %v4103
        %v4105 = vpop.f32.mrf.mxu0
        %v4106 = vadd.f32 %v3896, %v4105
        %v4107 = vpop.f32.mrf.mxu0
        %v4108 = vadd.f32 %v3892, %v4107
        %v4109 = vpop.f32.mrf.mxu0
        %v4110 = vadd.f32 %v3896, %v4109
        %4111 = vmatprep.mubr.bf16.mxu0 0
        %4112 = vmatmul.mubr.bf16.gmra.mxu0 %v3848
        %v4113 = vpop.f32.mrf.mxu0
        %v4114 = vadd.f32 %v3892, %v4113
        %v4115 = vpop.f32.mrf.mxu0
        %v4116 = vadd.f32 %v3896, %v4115
        %v4117 = vpop.f32.mrf.mxu0
        %v4118 = vadd.f32 %v3892, %v4117
        %v4119 = vpop.f32.mrf.mxu0
        %v4120 = vadd.f32 %v3896, %v4119
        %4121 = vmatprep.mubr.bf16.mxu0 0
        %4122 = vmatmul.mubr.bf16.gmra.mxu0 %v3849
        %v4123 = vpop.f32.mrf.mxu0
        %v4124 = vadd.f32 %v3892, %v4123
        %v4125 = vpop.f32.mrf.mxu0
        %v4126 = vadd.f32 %v3896, %v4125
        %v4127 = vpop.f32.mrf.mxu0
        %v4128 = vadd.f32 %v3892, %v4127
        %v4129 = vpop.f32.mrf.mxu0
        %v4130 = vadd.f32 %v3896, %v4129
        %4131 = vmatprep.mubr.bf16.mxu0 0
        %4132 = vmatmul.mubr.bf16.gmra.mxu0 %v3850
        %v4133 = vpop.f32.mrf.mxu0
        %v4134 = vadd.f32 %v3892, %v4133
        %v4135 = vpop.f32.mrf.mxu0
        %v4136 = vadd.f32 %v3896, %v4135
        %v4137 = vpop.f32.mrf.mxu0
        %v4138 = vadd.f32 %v3892, %v4137
        %v4139 = vpop.f32.mrf.mxu0
        %v4140 = vadd.f32 %v3896, %v4139
        %4141 = vmatprep.mubr.bf16.mxu0 0
        %4142 = vmatmul.mubr.bf16.gmra.mxu0 %v3851
        %v4143 = vpop.f32.mrf.mxu0
        %v4144 = vadd.f32 %v3892, %v4143
        %v4145 = vpop.f32.mrf.mxu0
        %v4146 = vadd.f32 %v3896, %v4145
        %v4147 = vpop.f32.mrf.mxu0
        %v4148 = vadd.f32 %v3892, %v4147
        %v4149 = vpop.f32.mrf.mxu0
        %v4150 = vadd.f32 %v3896, %v4149
        %4151 = vmatprep.mubr.bf16.mxu0 0
        %4152 = vmatmul.mubr.bf16.gmra.mxu0 %v3852
        %v4153 = vpop.f32.mrf.mxu0
        %v4154 = vadd.f32 %v3892, %v4153
        %v4155 = vpop.f32.mrf.mxu0
        %v4156 = vadd.f32 %v3896, %v4155
        %v4157 = vpop.f32.mrf.mxu0
        %v4158 = vadd.f32 %v3892, %v4157
        %v4159 = vpop.f32.mrf.mxu0
        %v4160 = vadd.f32 %v3896, %v4159
        %4161 = vmatprep.mubr.bf16.mxu0 0
        %4162 = vmatmul.mubr.bf16.gmra.mxu0 %v3853
        %v4163 = vpop.f32.mrf.mxu0
        %v4164 = vadd.f32 %v3892, %v4163
        %v4165 = vpop.f32.mrf.mxu0
        %v4166 = vadd.f32 %v3896, %v4165
        %v4167 = vpop.f32.mrf.mxu0
        %v4168 = vadd.f32 %v3892, %v4167
        %v4169 = vpop.f32.mrf.mxu0
        %v4170 = vadd.f32 %v3896, %v4169
        %4171 = vmatprep.mubr.bf16.mxu0 0
        %4172 = vmatmul.mubr.bf16.gmra.mxu0 %v3854
        %v4173 = vpop.f32.mrf.mxu0
        %v4174 = vadd.f32 %v3892, %v4173
        %v4175 = vpop.f32.mrf.mxu0
        %v4176 = vadd.f32 %v3896, %v4175
        %v4177 = vpop.f32.mrf.mxu0
        %v4178 = vadd.f32 %v3892, %v4177
        %v4179 = vpop.f32.mrf.mxu0
        %v4180 = vadd.f32 %v3896, %v4179
        %4181 = vdwg.mxu0
        %4182 = vmatprep.subr.bf16.mxu0 %v4036
        %4183 = vmatpush1.bf16.msra.mxu0 %v4035
        %4184 = vmatprep.subr.bf16.mxu0 %v4032
        %4185 = vmatpush1.bf16.msra.mxu0 %v4031
        %4186 = vmatprep.subr.bf16.mxu0 %v4028
        %4187 = vmatpush1.bf16.msra.mxu0 %v4027
        %4188 = vmatprep.subr.bf16.mxu0 %v4024
        %4189 = vmatpush1.bf16.msra.mxu0 %v4023
        %4190 = vmatprep.subr.bf16.mxu0 %v4020
        %4191 = vmatpush1.bf16.msra.mxu0 %v4019
        %4192 = vmatprep.subr.bf16.mxu0 %v4016
        %4193 = vmatpush1.bf16.msra.mxu0 %v4015
        %4194 = vmatprep.subr.bf16.mxu0 %v4012
        %4195 = vmatpush1.bf16.msra.mxu0 %v4011
        %4196 = vmatprep.subr.bf16.mxu0 %v4008
        %4197 = vmatpush1.bf16.msra.mxu0 %v4007
        %4198 = vmatprep.subr.bf16.mxu0 0
        %4199 = vmatpush2.bf16.msra.mxu0 0
        %4200 = vmatprep.subr.bf16.mxu0 0
        %4201 = vmatpush2.bf16.msra.mxu0 0
        %4202 = vmatprep.subr.bf16.mxu0 0
        %4203 = vmatpush2.bf16.msra.mxu0 0
        %4204 = vmatprep.subr.bf16.mxu0 0
        %4205 = vmatpush2.bf16.msra.mxu0 0
        %4206 = vmatprep.subr.bf16.mxu0 0
        %4207 = vmatpush2.bf16.msra.mxu0 0
        %4208 = vmatprep.subr.bf16.mxu0 0
        %4209 = vmatpush2.bf16.msra.mxu0 0
        %4210 = vmatprep.subr.bf16.mxu0 0
        %4211 = vmatpush2.bf16.msra.mxu0 0
        %4212 = vmatprep.subr.bf16.mxu0 0
        %4213 = vmatpush2.bf16.msra.mxu0 0
        %4214 = vmatprep.mubr.bf16.mxu0 0
        %4215 = vmatmul.mubr.bf16.gmra.mxu0 %v3847
        %v4216 = vpop.f32.mrf.mxu0
        %v4217 = vadd.f32 %v3900, %v4216
        %v4218 = vpop.f32.mrf.mxu0
        %v4219 = vadd.f32 %v3904, %v4218
        %v4220 = vpop.f32.mrf.mxu0
        %v4221 = vadd.f32 %v3900, %v4220
        %v4222 = vpop.f32.mrf.mxu0
        %v4223 = vadd.f32 %v3904, %v4222
        %4224 = vmatprep.mubr.bf16.mxu0 0
        %4225 = vmatmul.mubr.bf16.gmra.mxu0 %v3848
        %v4226 = vpop.f32.mrf.mxu0
        %v4227 = vadd.f32 %v3900, %v4226
        %v4228 = vpop.f32.mrf.mxu0
        %v4229 = vadd.f32 %v3904, %v4228
        %v4230 = vpop.f32.mrf.mxu0
        %v4231 = vadd.f32 %v3900, %v4230
        %v4232 = vpop.f32.mrf.mxu0
        %v4233 = vadd.f32 %v3904, %v4232
        %4234 = vmatprep.mubr.bf16.mxu0 0
        %4235 = vmatmul.mubr.bf16.gmra.mxu0 %v3849
        %v4236 = vpop.f32.mrf.mxu0
        %v4237 = vadd.f32 %v3900, %v4236
        %v4238 = vpop.f32.mrf.mxu0
        %v4239 = vadd.f32 %v3904, %v4238
        %v4240 = vpop.f32.mrf.mxu0
        %v4241 = vadd.f32 %v3900, %v4240
        %v4242 = vpop.f32.mrf.mxu0
        %v4243 = vadd.f32 %v3904, %v4242
        %4244 = vmatprep.mubr.bf16.mxu0 0
        %4245 = vmatmul.mubr.bf16.gmra.mxu0 %v3850
        %v4246 = vpop.f32.mrf.mxu0
        %v4247 = vadd.f32 %v3900, %v4246
        %v4248 = vpop.f32.mrf.mxu0
        %v4249 = vadd.f32 %v3904, %v4248
        %v4250 = vpop.f32.mrf.mxu0
        %v4251 = vadd.f32 %v3900, %v4250
        %v4252 = vpop.f32.mrf.mxu0
        %v4253 = vadd.f32 %v3904, %v4252
        %4254 = vmatprep.mubr.bf16.mxu0 0
        %4255 = vmatmul.mubr.bf16.gmra.mxu0 %v3851
        %v4256 = vpop.f32.mrf.mxu0
        %v4257 = vadd.f32 %v3900, %v4256
        %v4258 = vpop.f32.mrf.mxu0
        %v4259 = vadd.f32 %v3904, %v4258
        %v4260 = vpop.f32.mrf.mxu0
        %v4261 = vadd.f32 %v3900, %v4260
        %v4262 = vpop.f32.mrf.mxu0
        %v4263 = vadd.f32 %v3904, %v4262
        %4264 = vmatprep.mubr.bf16.mxu0 0
        %4265 = vmatmul.mubr.bf16.gmra.mxu0 %v3852
        %v4266 = vpop.f32.mrf.mxu0
        %v4267 = vadd.f32 %v3900, %v4266
        %v4268 = vpop.f32.mrf.mxu0
        %v4269 = vadd.f32 %v3904, %v4268
        %v4270 = vpop.f32.mrf.mxu0
        %v4271 = vadd.f32 %v3900, %v4270
        %v4272 = vpop.f32.mrf.mxu0
        %v4273 = vadd.f32 %v3904, %v4272
        %4274 = vmatprep.mubr.bf16.mxu0 0
        %4275 = vmatmul.mubr.bf16.gmra.mxu0 %v3853
        %v4276 = vpop.f32.mrf.mxu0
        %v4277 = vadd.f32 %v3900, %v4276
        %v4278 = vpop.f32.mrf.mxu0
        %v4279 = vadd.f32 %v3904, %v4278
        %v4280 = vpop.f32.mrf.mxu0
        %v4281 = vadd.f32 %v3900, %v4280
        %v4282 = vpop.f32.mrf.mxu0
        %v4283 = vadd.f32 %v3904, %v4282
        %4284 = vmatprep.mubr.bf16.mxu0 0
        %4285 = vmatmul.mubr.bf16.gmra.mxu0 %v3854
        %v4286 = vpop.f32.mrf.mxu0
        %v4287 = vadd.f32 %v3900, %v4286
        %v4288 = vpop.f32.mrf.mxu0
        %v4289 = vadd.f32 %v3904, %v4288
        %v4290 = vpop.f32.mrf.mxu0
        %v4291 = vadd.f32 %v3900, %v4290
        %v4292 = vpop.f32.mrf.mxu0
        %v4293 = vadd.f32 %v3904, %v4292
        %4294 = vdwg.mxu0
        %v4295 = vmax.f32 %v4104, 0.0
        %v4296 = vmax.f32 %v4106, 0.0
        %v4297 = vmax.f32 %v4217, 0.0
        %v4298 = vmax.f32 %v4219, 0.0
        %v4299 = vmax.f32 %v4108, 0.0
        %v4300 = vmax.f32 %v4110, 0.0
        %v4301 = vmax.f32 %v4221, 0.0
        %v4302 = vmax.f32 %v4223, 0.0
        %v4303 = vmax.f32 %v4114, 0.0
        %v4304 = vmax.f32 %v4116, 0.0
        %v4305 = vmax.f32 %v4227, 0.0
        %v4306 = vmax.f32 %v4229, 0.0
        %v4307 = vmax.f32 %v4118, 0.0
        %v4308 = vmax.f32 %v4120, 0.0
        %v4309 = vmax.f32 %v4231, 0.0
        %v4310 = vmax.f32 %v4233, 0.0
        %v4311 = vmax.f32 %v4124, 0.0
        %v4312 = vmax.f32 %v4126, 0.0
        %v4313 = vmax.f32 %v4237, 0.0
        %v4314 = vmax.f32 %v4239, 0.0
        %v4315 = vmax.f32 %v4128, 0.0
        %v4316 = vmax.f32 %v4130, 0.0
        %v4317 = vmax.f32 %v4241, 0.0
        %v4318 = vmax.f32 %v4243, 0.0
        %v4319 = vmax.f32 %v4134, 0.0
        %v4320 = vmax.f32 %v4136, 0.0
        %v4321 = vmax.f32 %v4247, 0.0
        %v4322 = vmax.f32 %v4249, 0.0
        %v4323 = vmax.f32 %v4138, 0.0
        %v4324 = vmax.f32 %v4140, 0.0
        %v4325 = vmax.f32 %v4251, 0.0
        %v4326 = vmax.f32 %v4253, 0.0
        %v4327 = vmax.f32 %v4144, 0.0
        %v4328 = vmax.f32 %v4146, 0.0
        %v4329 = vmax.f32 %v4257, 0.0
        %v4330 = vmax.f32 %v4259, 0.0
        %v4331 = vmax.f32 %v4148, 0.0
        %v4332 = vmax.f32 %v4150, 0.0
        %v4333 = vmax.f32 %v4261, 0.0
        %v4334 = vmax.f32 %v4263, 0.0
        %v4335 = vmax.f32 %v4154, 0.0
        %v4336 = vmax.f32 %v4156, 0.0
        %v4337 = vmax.f32 %v4267, 0.0
        %v4338 = vmax.f32 %v4269, 0.0
        %v4339 = vmax.f32 %v4158, 0.0
        %v4340 = vmax.f32 %v4160, 0.0
        %v4341 = vmax.f32 %v4271, 0.0
        %v4342 = vmax.f32 %v4273, 0.0
        %v4343 = vmax.f32 %v4164, 0.0
        %v4344 = vmax.f32 %v4166, 0.0
        %v4345 = vmax.f32 %v4277, 0.0
        %v4346 = vmax.f32 %v4279, 0.0
        %v4347 = vmax.f32 %v4168, 0.0
        %v4348 = vmax.f32 %v4170, 0.0
        %v4349 = vmax.f32 %v4281, 0.0
        %v4350 = vmax.f32 %v4283, 0.0
        %v4351 = vmax.f32 %v4174, 0.0
        %v4352 = vmax.f32 %v4176, 0.0
        %v4353 = vmax.f32 %v4287, 0.0
        %v4354 = vmax.f32 %v4289, 0.0
        %v4355 = vmax.f32 %v4178, 0.0
        %v4356 = vmax.f32 %v4180, 0.0
        %v4357 = vmax.f32 %v4291, 0.0
        %v4358 = vmax.f32 %v4293, 0.0
        %v4359 = vpack.c.bf16 %v4299, %v4295
        %v4360 = vpack.c.bf16 %v4300, %v4296
        %v4361 = vpack.c.bf16 %v4301, %v4297
        %v4362 = vpack.c.bf16 %v4302, %v4298
        %v4363 = vpack.c.bf16 %v4307, %v4303
        %v4364 = vpack.c.bf16 %v4308, %v4304
        %v4365 = vpack.c.bf16 %v4309, %v4305
        %v4366 = vpack.c.bf16 %v4310, %v4306
        %v4367 = vpack.c.bf16 %v4315, %v4311
        %v4368 = vpack.c.bf16 %v4316, %v4312
        %v4369 = vpack.c.bf16 %v4317, %v4313
        %v4370 = vpack.c.bf16 %v4318, %v4314
        %v4371 = vpack.c.bf16 %v4323, %v4319
        %v4372 = vpack.c.bf16 %v4324, %v4320
        %v4373 = vpack.c.bf16 %v4325, %v4321
        %v4374 = vpack.c.bf16 %v4326, %v4322
        %v4375 = vpack.c.bf16 %v4331, %v4327
        %v4376 = vpack.c.bf16 %v4332, %v4328
        %v4377 = vpack.c.bf16 %v4333, %v4329
        %v4378 = vpack.c.bf16 %v4334, %v4330
        %v4379 = vpack.c.bf16 %v4339, %v4335
        %v4380 = vpack.c.bf16 %v4340, %v4336
        %v4381 = vpack.c.bf16 %v4341, %v4337
        %v4382 = vpack.c.bf16 %v4342, %v4338
        %v4383 = vpack.c.bf16 %v4347, %v4343
        %v4384 = vpack.c.bf16 %v4348, %v4344
        %v4385 = vpack.c.bf16 %v4349, %v4345
        %v4386 = vpack.c.bf16 %v4350, %v4346
        %v4387 = vpack.c.bf16 %v4355, %v4351
        %v4388 = vpack.c.bf16 %v4356, %v4352
        %v4389 = vpack.c.bf16 %v4357, %v4353
        %v4390 = vpack.c.bf16 %v4358, %v4354
        %v4391 = vld [vmem:[#allocation11] sm:$0xf]
        %v4392 = vld [vmem:[#allocation11 + $0x4] sm:$0xf]
        %v4393 = vld [vmem:[#allocation11 + $0x8] sm:$0xf]
        %v4394 = vld [vmem:[#allocation11 + $0xc] sm:$0xf]
        %v4395 = vld [vmem:[#allocation11 + $0x10] sm:$0xf]
        %v4396 = vld [vmem:[#allocation11 + $0x14] sm:$0xf]
        %v4397 = vld [vmem:[#allocation11 + $0x18] sm:$0xf]
        %v4398 = vld [vmem:[#allocation11 + $0x1c] sm:$0xf]
        %v4399 = vld [vmem:[#allocation11 + $0x20] sm:$0xf]
        %v4400 = vld [vmem:[#allocation11 + $0x24] sm:$0xf]
        %v4401 = vld [vmem:[#allocation11 + $0x28] sm:$0xf]
        %v4402 = vld [vmem:[#allocation11 + $0x2c] sm:$0xf]
        %v4403 = vld [vmem:[#allocation11 + $0x30] sm:$0xf]
        %v4404 = vld [vmem:[#allocation11 + $0x34] sm:$0xf]
        %v4405 = vld [vmem:[#allocation11 + $0x38] sm:$0xf]
        %v4406 = vld [vmem:[#allocation11 + $0x3c] sm:$0xf]
        %v4407 = vld [vmem:[#allocation11 + $0x40] sm:$0xf]
        %v4408 = vld [vmem:[#allocation11 + $0x44] sm:$0xf]
        %v4409 = vld [vmem:[#allocation11 + $0x48] sm:$0xf]
        %v4410 = vld [vmem:[#allocation11 + $0x4c] sm:$0xf]
        %v4411 = vld [vmem:[#allocation11 + $0x50] sm:$0xf]
        %v4412 = vld [vmem:[#allocation11 + $0x54] sm:$0xf]
        %v4413 = vld [vmem:[#allocation11 + $0x58] sm:$0xf]
        %v4414 = vld [vmem:[#allocation11 + $0x5c] sm:$0xf]
        %v4415 = vld [vmem:[#allocation11 + $0x60] sm:$0xf]
        %v4416 = vld [vmem:[#allocation11 + $0x64] sm:$0xf]
        %v4417 = vld [vmem:[#allocation11 + $0x68] sm:$0xf]
        %v4418 = vld [vmem:[#allocation11 + $0x6c] sm:$0xf]
        %v4419 = vld [vmem:[#allocation11 + $0x70] sm:$0xf]
        %v4420 = vld [vmem:[#allocation11 + $0x74] sm:$0xf]
        %v4421 = vld [vmem:[#allocation11 + $0x78] sm:$0xf]
        %v4422 = vld [vmem:[#allocation11 + $0x7c] sm:$0xf]
        %v4423 = vld [vmem:[#allocation11 + $0x80] sm:$0xf]
        %v4424 = vld [vmem:[#allocation11 + $0x84] sm:$0xf]
        %v4425 = vld [vmem:[#allocation11 + $0x88] sm:$0xf]
        %v4426 = vld [vmem:[#allocation11 + $0x8c] sm:$0xf]
        %v4427 = vld [vmem:[#allocation11 + $0x90] sm:$0xf]
        %v4428 = vld [vmem:[#allocation11 + $0x94] sm:$0xf]
        %v4429 = vld [vmem:[#allocation11 + $0x98] sm:$0xf]
        %v4430 = vld [vmem:[#allocation11 + $0x9c] sm:$0xf]
        %v4431 = vld [vmem:[#allocation11 + $0xa0] sm:$0xf]
        %v4432 = vld [vmem:[#allocation11 + $0xa4] sm:$0xf]
        %v4433 = vld [vmem:[#allocation11 + $0xa8] sm:$0xf]
        %v4434 = vld [vmem:[#allocation11 + $0xac] sm:$0xf]
        %v4435 = vld [vmem:[#allocation11 + $0xb0] sm:$0xf]
        %v4436 = vld [vmem:[#allocation11 + $0xb4] sm:$0xf]
        %v4437 = vld [vmem:[#allocation11 + $0xb8] sm:$0xf]
        %v4438 = vld [vmem:[#allocation11 + $0xbc] sm:$0xf]
        %v4439 = vld [vmem:[#allocation11 + $0xc0] sm:$0xf]
        %v4440 = vld [vmem:[#allocation11 + $0xc4] sm:$0xf]
        %v4441 = vld [vmem:[#allocation11 + $0xc8] sm:$0xf]
        %v4442 = vld [vmem:[#allocation11 + $0xcc] sm:$0xf]
        %v4443 = vld [vmem:[#allocation11 + $0xd0] sm:$0xf]
        %v4444 = vld [vmem:[#allocation11 + $0xd4] sm:$0xf]
        %v4445 = vld [vmem:[#allocation11 + $0xd8] sm:$0xf]
        %v4446 = vld [vmem:[#allocation11 + $0xdc] sm:$0xf]
        %v4447 = vld [vmem:[#allocation11 + $0xe0] sm:$0xf]
        %v4448 = vld [vmem:[#allocation11 + $0xe4] sm:$0xf]
        %v4449 = vld [vmem:[#allocation11 + $0xe8] sm:$0xf]
        %v4450 = vld [vmem:[#allocation11 + $0xec] sm:$0xf]
        %v4451 = vld [vmem:[#allocation11 + $0xf0] sm:$0xf]
        %v4452 = vld [vmem:[#allocation11 + $0xf4] sm:$0xf]
        %v4453 = vld [vmem:[#allocation11 + $0xf8] sm:$0xf]
        %v4454 = vld [vmem:[#allocation11 + $0xfc] sm:$0xf]
        %v4455 = vld [vmem:[%s11] sm:$0x1]
        %v4457 = vlaneseq
        %v4458 = vshrl.u32 %v4457, 7
        %v4459 = vsub.s32 0, %v4458
        %v4460 = vrot.slane %v4455, %v4459
        %v4526 = vunpack.c.l.b16 %v4391
        %v4527 = vunpack.c.l.b16 %v4392
        %v4528 = vunpack.c.l.b16 %v4393
        %v4529 = vunpack.c.l.b16 %v4394
        %v4530 = vunpack.c.l.b16 %v4395
        %v4531 = vunpack.c.l.b16 %v4396
        %v4532 = vunpack.c.l.b16 %v4397
        %v4533 = vunpack.c.l.b16 %v4398
        %v4534 = vunpack.c.l.b16 %v4399
        %v4535 = vunpack.c.l.b16 %v4400
        %v4536 = vunpack.c.l.b16 %v4401
        %v4537 = vunpack.c.l.b16 %v4402
        %v4538 = vunpack.c.l.b16 %v4403
        %v4539 = vunpack.c.l.b16 %v4404
        %v4540 = vunpack.c.l.b16 %v4405
        %v4541 = vunpack.c.l.b16 %v4406
        %v4542 = vunpack.c.l.b16 %v4407
        %v4543 = vunpack.c.l.b16 %v4408
        %v4544 = vunpack.c.l.b16 %v4409
        %v4545 = vunpack.c.l.b16 %v4410
        %v4546 = vunpack.c.l.b16 %v4411
        %v4547 = vunpack.c.l.b16 %v4412
        %v4548 = vunpack.c.l.b16 %v4413
        %v4549 = vunpack.c.l.b16 %v4414
        %v4550 = vunpack.c.l.b16 %v4415
        %v4551 = vunpack.c.l.b16 %v4416
        %v4552 = vunpack.c.l.b16 %v4417
        %v4553 = vunpack.c.l.b16 %v4418
        %v4554 = vunpack.c.l.b16 %v4419
        %v4555 = vunpack.c.l.b16 %v4420
        %v4556 = vunpack.c.l.b16 %v4421
        %v4557 = vunpack.c.l.b16 %v4422
        %v4558 = vunpack.c.l.b16 %v4423
        %v4559 = vunpack.c.l.b16 %v4424
        %v4560 = vunpack.c.l.b16 %v4425
        %v4561 = vunpack.c.l.b16 %v4426
        %v4562 = vunpack.c.l.b16 %v4427
        %v4563 = vunpack.c.l.b16 %v4428
        %v4564 = vunpack.c.l.b16 %v4429
        %v4565 = vunpack.c.l.b16 %v4430
        %v4566 = vunpack.c.l.b16 %v4431
        %v4567 = vunpack.c.l.b16 %v4432
        %v4568 = vunpack.c.l.b16 %v4433
        %v4569 = vunpack.c.l.b16 %v4434
        %v4570 = vunpack.c.l.b16 %v4435
        %v4571 = vunpack.c.l.b16 %v4436
        %v4572 = vunpack.c.l.b16 %v4437
        %v4573 = vunpack.c.l.b16 %v4438
        %v4574 = vunpack.c.l.b16 %v4439
        %v4575 = vunpack.c.l.b16 %v4440
        %v4576 = vunpack.c.l.b16 %v4441
        %v4577 = vunpack.c.l.b16 %v4442
        %v4578 = vunpack.c.l.b16 %v4443
        %v4579 = vunpack.c.l.b16 %v4444
        %v4580 = vunpack.c.l.b16 %v4445
        %v4581 = vunpack.c.l.b16 %v4446
        %v4582 = vunpack.c.l.b16 %v4447
        %v4583 = vunpack.c.l.b16 %v4448
        %v4584 = vunpack.c.l.b16 %v4449
        %v4585 = vunpack.c.l.b16 %v4450
        %v4586 = vunpack.c.l.b16 %v4451
        %v4587 = vunpack.c.l.b16 %v4452
        %v4588 = vunpack.c.l.b16 %v4453
        %v4589 = vunpack.c.l.b16 %v4454
        %v4590 = vpack.c.b16 %v4527, %v4526
        %v4591 = vpack.c.b16 %v4529, %v4528
        %v4592 = vpack.c.b16 %v4531, %v4530
        %v4593 = vpack.c.b16 %v4533, %v4532
        %v4594 = vpack.c.b16 %v4535, %v4534
        %v4595 = vpack.c.b16 %v4537, %v4536
        %v4596 = vpack.c.b16 %v4539, %v4538
        %v4597 = vpack.c.b16 %v4541, %v4540
        %v4598 = vpack.c.b16 %v4543, %v4542
        %v4599 = vpack.c.b16 %v4545, %v4544
        %v4600 = vpack.c.b16 %v4547, %v4546
        %v4601 = vpack.c.b16 %v4549, %v4548
        %v4602 = vpack.c.b16 %v4551, %v4550
        %v4603 = vpack.c.b16 %v4553, %v4552
        %v4604 = vpack.c.b16 %v4555, %v4554
        %v4605 = vpack.c.b16 %v4557, %v4556
        %v4606 = vpack.c.b16 %v4559, %v4558
        %v4607 = vpack.c.b16 %v4561, %v4560
        %v4608 = vpack.c.b16 %v4563, %v4562
        %v4609 = vpack.c.b16 %v4565, %v4564
        %v4610 = vpack.c.b16 %v4567, %v4566
        %v4611 = vpack.c.b16 %v4569, %v4568
        %v4612 = vpack.c.b16 %v4571, %v4570
        %v4613 = vpack.c.b16 %v4573, %v4572
        %v4614 = vpack.c.b16 %v4575, %v4574
        %v4615 = vpack.c.b16 %v4577, %v4576
        %v4616 = vpack.c.b16 %v4579, %v4578
        %v4617 = vpack.c.b16 %v4581, %v4580
        %v4618 = vpack.c.b16 %v4583, %v4582
        %v4619 = vpack.c.b16 %v4585, %v4584
        %v4620 = vpack.c.b16 %v4587, %v4586
        %v4621 = vpack.c.b16 %v4589, %v4588
        %4654 = vmatprep.subr.bf16.mxu0 0
        %4655 = vmatpush1.bf16.msra.mxu0 %v4597
        %4656 = vmatprep.subr.bf16.mxu0 0
        %4657 = vmatpush1.bf16.msra.mxu0 %v4596
        %4658 = vmatprep.subr.bf16.mxu0 0
        %4659 = vmatpush1.bf16.msra.mxu0 %v4595
        %4660 = vmatprep.subr.bf16.mxu0 0
        %4661 = vmatpush1.bf16.msra.mxu0 %v4594
        %4662 = vmatprep.subr.bf16.mxu0 0
        %4663 = vmatpush1.bf16.msra.mxu0 %v4593
        %4664 = vmatprep.subr.bf16.mxu0 0
        %4665 = vmatpush1.bf16.msra.mxu0 %v4592
        %4666 = vmatprep.subr.bf16.mxu0 0
        %4667 = vmatpush1.bf16.msra.mxu0 %v4591
        %4668 = vmatprep.subr.bf16.mxu0 0
        %4669 = vmatpush1.bf16.msra.mxu0 %v4590
        %4670 = vmatprep.subr.bf16.mxu0 0
        %4671 = vmatpush2.bf16.msra.mxu0 %v4605
        %4672 = vmatprep.subr.bf16.mxu0 0
        %4673 = vmatpush2.bf16.msra.mxu0 %v4604
        %4674 = vmatprep.subr.bf16.mxu0 0
        %4675 = vmatpush2.bf16.msra.mxu0 %v4603
        %4676 = vmatprep.subr.bf16.mxu0 0
        %4677 = vmatpush2.bf16.msra.mxu0 %v4602
        %4678 = vmatprep.subr.bf16.mxu0 0
        %4679 = vmatpush2.bf16.msra.mxu0 %v4601
        %4680 = vmatprep.subr.bf16.mxu0 0
        %4681 = vmatpush2.bf16.msra.mxu0 %v4600
        %4682 = vmatprep.subr.bf16.mxu0 0
        %4683 = vmatpush2.bf16.msra.mxu0 %v4599
        %4684 = vmatprep.subr.bf16.mxu0 0
        %4685 = vmatpush2.bf16.msra.mxu0 %v4598
        %4686 = vmatprep.mubr.bf16.mxu0 %v4360
        %4687 = vmatmul.mubr.bf16.gmra.mxu0 %v4359
        %v4688 = vpop.f32.mrf.mxu0
        %v4689 = vadd.f32 %v4460, %v4688
        %v4690 = vpop.f32.mrf.mxu0
        %v4691 = vpop.f32.mrf.mxu0
        %v4692 = vadd.f32 %v4460, %v4691
        %v4693 = vpop.f32.mrf.mxu0
        %4694 = vmatprep.mubr.bf16.mxu0 %v4364
        %4695 = vmatmul.mubr.bf16.gmra.mxu0 %v4363
        %v4696 = vpop.f32.mrf.mxu0
        %v4697 = vadd.f32 %v4460, %v4696
        %v4698 = vpop.f32.mrf.mxu0
        %v4699 = vpop.f32.mrf.mxu0
        %v4700 = vadd.f32 %v4460, %v4699
        %v4701 = vpop.f32.mrf.mxu0
        %4702 = vmatprep.mubr.bf16.mxu0 %v4368
        %4703 = vmatmul.mubr.bf16.gmra.mxu0 %v4367
        %v4704 = vpop.f32.mrf.mxu0
        %v4705 = vadd.f32 %v4460, %v4704
        %v4706 = vpop.f32.mrf.mxu0
        %v4707 = vpop.f32.mrf.mxu0
        %v4708 = vadd.f32 %v4460, %v4707
        %v4709 = vpop.f32.mrf.mxu0
        %4710 = vmatprep.mubr.bf16.mxu0 %v4372
        %4711 = vmatmul.mubr.bf16.gmra.mxu0 %v4371
        %v4712 = vpop.f32.mrf.mxu0
        %v4713 = vadd.f32 %v4460, %v4712
        %v4714 = vpop.f32.mrf.mxu0
        %v4715 = vpop.f32.mrf.mxu0
        %v4716 = vadd.f32 %v4460, %v4715
        %v4717 = vpop.f32.mrf.mxu0
        %4718 = vmatprep.mubr.bf16.mxu0 %v4376
        %4719 = vmatmul.mubr.bf16.gmra.mxu0 %v4375
        %v4720 = vpop.f32.mrf.mxu0
        %v4721 = vadd.f32 %v4460, %v4720
        %v4722 = vpop.f32.mrf.mxu0
        %v4723 = vpop.f32.mrf.mxu0
        %v4724 = vadd.f32 %v4460, %v4723
        %v4725 = vpop.f32.mrf.mxu0
        %4726 = vmatprep.mubr.bf16.mxu0 %v4380
        %4727 = vmatmul.mubr.bf16.gmra.mxu0 %v4379
        %v4728 = vpop.f32.mrf.mxu0
        %v4729 = vadd.f32 %v4460, %v4728
        %v4730 = vpop.f32.mrf.mxu0
        %v4731 = vpop.f32.mrf.mxu0
        %v4732 = vadd.f32 %v4460, %v4731
        %v4733 = vpop.f32.mrf.mxu0
        %4734 = vmatprep.mubr.bf16.mxu0 %v4384
        %4735 = vmatmul.mubr.bf16.gmra.mxu0 %v4383
        %v4736 = vpop.f32.mrf.mxu0
        %v4737 = vadd.f32 %v4460, %v4736
        %v4738 = vpop.f32.mrf.mxu0
        %v4739 = vpop.f32.mrf.mxu0
        %v4740 = vadd.f32 %v4460, %v4739
        %v4741 = vpop.f32.mrf.mxu0
        %4742 = vmatprep.mubr.bf16.mxu0 %v4388
        %4743 = vmatmul.mubr.bf16.gmra.mxu0 %v4387
        %v4744 = vpop.f32.mrf.mxu0
        %v4745 = vadd.f32 %v4460, %v4744
        %v4746 = vpop.f32.mrf.mxu0
        %v4747 = vpop.f32.mrf.mxu0
        %v4748 = vadd.f32 %v4460, %v4747
        %v4749 = vpop.f32.mrf.mxu0
        %4750 = vdwg.mxu0
        %4751 = vmatprep.subr.bf16.mxu0 0
        %4752 = vmatpush1.bf16.msra.mxu0 %v4613
        %4753 = vmatprep.subr.bf16.mxu0 0
        %4754 = vmatpush1.bf16.msra.mxu0 %v4612
        %4755 = vmatprep.subr.bf16.mxu0 0
        %4756 = vmatpush1.bf16.msra.mxu0 %v4611
        %4757 = vmatprep.subr.bf16.mxu0 0
        %4758 = vmatpush1.bf16.msra.mxu0 %v4610
        %4759 = vmatprep.subr.bf16.mxu0 0
        %4760 = vmatpush1.bf16.msra.mxu0 %v4609
        %4761 = vmatprep.subr.bf16.mxu0 0
        %4762 = vmatpush1.bf16.msra.mxu0 %v4608
        %4763 = vmatprep.subr.bf16.mxu0 0
        %4764 = vmatpush1.bf16.msra.mxu0 %v4607
        %4765 = vmatprep.subr.bf16.mxu0 0
        %4766 = vmatpush1.bf16.msra.mxu0 %v4606
        %4767 = vmatprep.subr.bf16.mxu0 0
        %4768 = vmatpush2.bf16.msra.mxu0 %v4621
        %4769 = vmatprep.subr.bf16.mxu0 0
        %4770 = vmatpush2.bf16.msra.mxu0 %v4620
        %4771 = vmatprep.subr.bf16.mxu0 0
        %4772 = vmatpush2.bf16.msra.mxu0 %v4619
        %4773 = vmatprep.subr.bf16.mxu0 0
        %4774 = vmatpush2.bf16.msra.mxu0 %v4618
        %4775 = vmatprep.subr.bf16.mxu0 0
        %4776 = vmatpush2.bf16.msra.mxu0 %v4617
        %4777 = vmatprep.subr.bf16.mxu0 0
        %4778 = vmatpush2.bf16.msra.mxu0 %v4616
        %4779 = vmatprep.subr.bf16.mxu0 0
        %4780 = vmatpush2.bf16.msra.mxu0 %v4615
        %4781 = vmatprep.subr.bf16.mxu0 0
        %4782 = vmatpush2.bf16.msra.mxu0 %v4614
        %4783 = vmatprep.mubr.bf16.mxu0 %v4362
        %4784 = vmatmul.mubr.bf16.gmra.mxu0 %v4361
        %v4785 = vpop.f32.mrf.mxu0
        %v4786 = vadd.f32 %v4689, %v4785
        %v4787 = vpop.f32.mrf.mxu0
        %v4788 = vpop.f32.mrf.mxu0
        %v4789 = vadd.f32 %v4692, %v4788
        %v4790 = vpop.f32.mrf.mxu0
        %4791 = vmatprep.mubr.bf16.mxu0 %v4366
        %4792 = vmatmul.mubr.bf16.gmra.mxu0 %v4365
        %v4793 = vpop.f32.mrf.mxu0
        %v4794 = vadd.f32 %v4697, %v4793
        %v4795 = vpop.f32.mrf.mxu0
        %v4796 = vpop.f32.mrf.mxu0
        %v4797 = vadd.f32 %v4700, %v4796
        %v4798 = vpop.f32.mrf.mxu0
        %4799 = vmatprep.mubr.bf16.mxu0 %v4370
        %4800 = vmatmul.mubr.bf16.gmra.mxu0 %v4369
        %v4801 = vpop.f32.mrf.mxu0
        %v4802 = vadd.f32 %v4705, %v4801
        %v4803 = vpop.f32.mrf.mxu0
        %v4804 = vpop.f32.mrf.mxu0
        %v4805 = vadd.f32 %v4708, %v4804
        %v4806 = vpop.f32.mrf.mxu0
        %4807 = vmatprep.mubr.bf16.mxu0 %v4374
        %4808 = vmatmul.mubr.bf16.gmra.mxu0 %v4373
        %v4809 = vpop.f32.mrf.mxu0
        %v4810 = vadd.f32 %v4713, %v4809
        %v4811 = vpop.f32.mrf.mxu0
        %v4812 = vpop.f32.mrf.mxu0
        %v4813 = vadd.f32 %v4716, %v4812
        %v4814 = vpop.f32.mrf.mxu0
        %4815 = vmatprep.mubr.bf16.mxu0 %v4378
        %4816 = vmatmul.mubr.bf16.gmra.mxu0 %v4377
        %v4817 = vpop.f32.mrf.mxu0
        %v4818 = vadd.f32 %v4721, %v4817
        %v4819 = vpop.f32.mrf.mxu0
        %v4820 = vpop.f32.mrf.mxu0
        %v4821 = vadd.f32 %v4724, %v4820
        %v4822 = vpop.f32.mrf.mxu0
        %4823 = vmatprep.mubr.bf16.mxu0 %v4382
        %4824 = vmatmul.mubr.bf16.gmra.mxu0 %v4381
        %v4825 = vpop.f32.mrf.mxu0
        %v4826 = vadd.f32 %v4729, %v4825
        %v4827 = vpop.f32.mrf.mxu0
        %v4828 = vpop.f32.mrf.mxu0
        %v4829 = vadd.f32 %v4732, %v4828
        %v4830 = vpop.f32.mrf.mxu0
        %4831 = vmatprep.mubr.bf16.mxu0 %v4386
        %4832 = vmatmul.mubr.bf16.gmra.mxu0 %v4385
        %v4833 = vpop.f32.mrf.mxu0
        %v4834 = vadd.f32 %v4737, %v4833
        %v4835 = vpop.f32.mrf.mxu0
        %v4836 = vpop.f32.mrf.mxu0
        %v4837 = vadd.f32 %v4740, %v4836
        %v4838 = vpop.f32.mrf.mxu0
        %4839 = vmatprep.mubr.bf16.mxu0 %v4390
        %4840 = vmatmul.mubr.bf16.gmra.mxu0 %v4389
        %v4841 = vpop.f32.mrf.mxu0
        %v4842 = vadd.f32 %v4745, %v4841
        %v4843 = vpop.f32.mrf.mxu0
        %v4844 = vpop.f32.mrf.mxu0
        %v4845 = vadd.f32 %v4748, %v4844
        %v4846 = vpop.f32.mrf.mxu0
        %4847 = vdwg.mxu0
        %v4848 = vadd.f32 %v3609, %v4786
        %v4849 = vadd.f32 %v3610, %v4789
        %v4850 = vadd.f32 %v3611, %v4794
        %v4851 = vadd.f32 %v3612, %v4797
        %v4852 = vadd.f32 %v3613, %v4802
        %v4853 = vadd.f32 %v3614, %v4805
        %v4854 = vadd.f32 %v3615, %v4810
        %v4855 = vadd.f32 %v3616, %v4813
        %v4856 = vadd.f32 %v3617, %v4818
        %v4857 = vadd.f32 %v3618, %v4821
        %v4858 = vadd.f32 %v3619, %v4826
        %v4859 = vadd.f32 %v3620, %v4829
        %v4860 = vadd.f32 %v3621, %v4834
        %v4861 = vadd.f32 %v3622, %v4837
        %v4862 = vadd.f32 %v3623, %v4842
        %v4863 = vadd.f32 %v3624, %v4845
        %4864 = vst [vmem:[%s543] sm:$0xff] %v4848
        %4865 = vst [vmem:[%s543 + $0x8] sm:$0xff] %v4849
        %4866 = vst [vmem:[%s543 + $0x10] sm:$0xff] %v4850
        %4867 = vst [vmem:[%s543 + $0x18] sm:$0xff] %v4851
        %4868 = vst [vmem:[%s543 + $0x20] sm:$0xff] %v4852
        %4869 = vst [vmem:[%s543 + $0x28] sm:$0xff] %v4853
        %4870 = vst [vmem:[%s543 + $0x30] sm:$0xff] %v4854
        %4871 = vst [vmem:[%s543 + $0x38] sm:$0xff] %v4855
        %4872 = vst [vmem:[%s543 + $0x40] sm:$0xff] %v4856
        %4873 = vst [vmem:[%s543 + $0x48] sm:$0xff] %v4857
        %4874 = vst [vmem:[%s543 + $0x50] sm:$0xff] %v4858
        %4875 = vst [vmem:[%s543 + $0x58] sm:$0xff] %v4859
        %4876 = vst [vmem:[%s543 + $0x60] sm:$0xff] %v4860
        %4877 = vst [vmem:[%s543 + $0x68] sm:$0xff] %v4861
        %4878 = vst [vmem:[%s543 + $0x70] sm:$0xff] %v4862
        %4879 = vst [vmem:[%s543 + $0x78] sm:$0xff] %v4863
        %s4880 = sand.u32 %s319, 1
        %s4881 = scalar_lea.sflag [#allocation4], %s4880
        %s4882 = sand.u32 %s319, 1
        %s4883 = smul.addr %s4882, 128
        %s4884 = scalar_lea.vmem [#allocation14], %s4883
        // Predicated region
        $region101: #{block_forward.1} parent=71 // pred_check
          %p4885 = pneg %p329
        $region102: #{block_forward.1} parent=71 // pred_check_branch
          %4887 = sbr.rel (%p4885) target = $region104
        $region103: #{block_forward.1} parent=71 // pred_region
          %s4889 = ssub.s32 2048, 2048
          %4890 = vsyncadd %s4881, %s4889
          %s4891 = smul.addr %s33, 16
          %s4892 = smul.addr %s4891, 128
          %s4893 = scalar_lea.hbm %s13, %s4892
          %s4894 = sshll.u32 %s4884, 4
          %s4895 = int_to_ptr.vmem [resolvable:$true] %s4894
          %4900 = dma.vmem_to_hbm [thread:$0]  %s4895, 2048, %s4893, %s4881, 128, 128, 8
        $region104: #{block_forward.1} parent=71 // pred_fallthru
          _
      $region72: #{block_forward.1} parent=5 // pred_fallthru
        _
      %p4901 = scmp.le.s32.totalorder 2, %s28
      // Predicated region
      $region105: #{block_forward.1} parent=5 // pred_check
        %p4902 = pneg %p4901
      $region106: #{block_forward.1} parent=5 // pred_check_branch
        %4904 = sbr.rel (%p4902) target = $region108
      $region107: #{block_forward.1} parent=5 // pred_region
        %s4905 = ssub.s32 %s28, 2
        // Predicated region
        $region109: #{block_forward.1} parent=107 // pred_check
          %p4906 = pneg %p335
        $region110: #{block_forward.1} parent=107 // pred_check_branch
          %4908 = sbr.rel (%p4906) target = $region112
        $region111: #{block_forward.1} parent=107 // pred_region
          %s4909 = sand.u32 %s320, 1
          %s4910 = scalar_lea.sflag [#allocation4], %s4909
          %s4911 = sand.u32 %s320, 1
          %s4912 = smul.addr %s4911, 128
          %s4913 = scalar_lea.vmem [#allocation14], %s4912
          %4914 = dma.done %s4910, 2048
        $region112: #{block_forward.1} parent=107 // pred_fallthru
          _
      $region108: #{block_forward.1} parent=5 // pred_fallthru
        _
    $region6: #{block_forward.1} parent=1 // loop_footer
      %s32 = sadd.s32 1, %s28
    $region7: #{block_forward.1} parent=1 // loop_footer_branch
      %27 = sbr.rel target = $region3
    $region8: #{block_forward.1} parent=1 // loop_exit
      _
    %4915 = vsyncpa [#allocation3], 1
    %s4916 = scalar_lea.sflag [#allocation3], 1
    %4917 = vsyncpa %s4916, 1
    %4918 = vsyncpa [#allocation6], 1
    %4919 = vsyncpa [#allocation9], 1
    %4920 = vsyncpa [#allocation12], 1
    %4921 = vsyncpa [#allocation4], 1
    %s4922 = scalar_lea.sflag [#allocation4], 1
    %4923 = vsyncpa %s4922, 1

</llo_original>
